<compile_context>
chip_gen: v7x
topology: tpu7x:2x2x1
jax: 0.10.0
libtpu: 0.0.40
codegen_flags: <defaults>
</compile_context>

<pallas_src>
import math

import jax
import jax.numpy as jnp
import numpy as np
from jax.experimental import pallas as pl
from jax.experimental.pallas import tpu as pltpu

# ----------------------------- small config ---------------------------------
VOCAB = 40
PAD_IDX = 1
EMBED_DIM = 32          # encoder_embed_dim
HEADS = 4               # encoder_attention_heads
HEAD_DIM = EMBED_DIM // HEADS
FFN_DIM = 64            # encoder_ffn_embed_dim
LAYERS = 2              # encoder_layers
MAX_SRC_POS = 16        # max_source_positions
B, T = 2, 8
LN_EPS = 1e-5
NEG_INF = -1e30


def _layer_norm(y, g, b):
    mu = jnp.mean(y, axis=-1, keepdims=True)
    var = jnp.mean((y - mu) ** 2, axis=-1, keepdims=True)
    return (y - mu) * jax.lax.rsqrt(var + LN_EPS) * g + b


# ----------------------------- fused Pallas kernel ---------------------------
def encoder_kernel(x_ref, kbias_ref, wqkv_ref, wo_ref, w1_ref, w2_ref,
                   misc_ref, o_ref):
    """Entire encoder forward (all layers, all batch rows) in one invocation.

    x_ref:     (B*T, C)     f32 activations, rows ordered (b, t)
    kbias_ref: (B, 1, T)    f32 additive key-padding bias (0 / -1e30)
    wqkv_ref:  (L, C, 3C)   bf16  fused [Wq^T | Wk^T | Wv^T]
    wo_ref:    (L, C, C)    bf16  Wo^T (rows in head-concat order)
    w1_ref:    (L, C, F)    bf16  fc1 weight, pre-transposed
    w2_ref:    (L, F, C)    bf16  fc2 weight, pre-transposed
    misc_ref:  (L, 8, 128)  f32   one padded lane-row per bias / LN param
    o_ref:     (T, B*C)     f32   output already in (t, b, c) order
    """
    f32, bf16 = jnp.float32, jnp.bfloat16
    x = x_ref[...]                                   # (B*T, C) f32
    kbias = kbias_ref[...]                           # (B, 1, T) f32
    scale = HEAD_DIM ** -0.5

    for l in range(LAYERS):                          # static unroll over layers
        wqkv, wo, w1, w2 = wqkv_ref[l], wo_ref[l], w1_ref[l], w2_ref[l]
        misc = misc_ref[l]                           # (8, 128) f32 param tile
        bqkv = misc[0:1, :3 * EMBED_DIM]             # (1, 96)
        bo   = misc[1:2, :EMBED_DIM]                 # (1, 32)
        g1   = misc[2:3, :EMBED_DIM]
        be1  = misc[3:4, :EMBED_DIM]
        b1   = misc[4:5, :FFN_DIM]                   # (1, 64)
        b2   = misc[5:6, :EMBED_DIM]
        g2   = misc[6:7, :EMBED_DIM]
        be2  = misc[7:8, :EMBED_DIM]

        # ---- self-attention (post-LayerNorm; eval -> dropouts are identities) --
        # fused Q/K/V projection: ONE lane-dense (B*T, C) x (C, 3C) matmul
        qkv = jnp.dot(x.astype(bf16), wqkv, preferred_element_type=f32) + bqkv
        q = qkv[:, 0:EMBED_DIM] * scale              # fairseq: q scaled after bias
        k = qkv[:, EMBED_DIM:2 * EMBED_DIM]
        v = qkv[:, 2 * EMBED_DIM:3 * EMBED_DIM]

        ctx_heads = []
        for h in range(HEADS):                       # static unroll; B-batched matmuls
            sl = slice(h * HEAD_DIM, (h + 1) * HEAD_DIM)
            qh = q[:, sl].reshape(B, T, HEAD_DIM).astype(bf16)
            kh = k[:, sl].reshape(B, T, HEAD_DIM).astype(bf16)
            vh = v[:, sl].reshape(B, T, HEAD_DIM).astype(bf16)
            s = jnp.einsum('btd,bsd->bts', qh, kh, preferred_element_type=f32)
            s = s + kbias                            # padded keys -> -1e30
            # No max-subtraction: scores are O(1) and exp(-1e30) underflows to 0.
            # NOTE: a fully-padded sequence would give a ~0 denominator here (the
            # PyTorch reference NaNs in that case too); not reachable in this test.
            p = jnp.exp(s)
            p = p * pl.reciprocal(jnp.sum(p, axis=-1, keepdims=True), approx=True)
            ctx = jnp.einsum('bts,bsd->btd', p.astype(bf16), vh,
                             preferred_element_type=f32)
            ctx_heads.append(ctx.reshape(B * T, HEAD_DIM))
        ctx = jnp.concatenate(ctx_heads, axis=1)     # (B*T, C), head-concat order
        attn = jnp.dot(ctx.astype(bf16), wo, preferred_element_type=f32) + bo
        x = _layer_norm(x + attn, g1, be1)

        # ---- FFN on all B*T rows at once ----
        hdn = jnp.dot(x.astype(bf16), w1, preferred_element_type=f32) + b1
        hdn = jnp.maximum(hdn, 0.0)                  # F.threshold(x, 0, 0) == relu
        y = jnp.dot(hdn.astype(bf16), w2, preferred_element_type=f32) + b2
        x = _layer_norm(x + y, g2, be2)              # residual + post-LN

    # Write output already in (t, b, c) order -> wrapper reshape is free.
    for b in range(B):
        o_ref[:, b * EMBED_DIM:(b + 1) * EMBED_DIM] = x[b * T:(b + 1) * T, :]


def encoder_pallas(x_flat, kbias, kp):
    """One grid-less pallas_call: everything is VMEM-resident (~50 KB total)."""
    vmem = pltpu.MemorySpace.VMEM
    return pl.pallas_call(
        encoder_kernel,
        out_shape=jax.ShapeDtypeStruct((T, B * EMBED_DIM), jnp.float32),
        in_specs=[pl.BlockSpec(memory_space=vmem)] * 7,
        out_specs=pl.BlockSpec(memory_space=vmem),
        compiler_params=pltpu.CompilerParams(),
    )(x_flat, kbias, kp["wqkv"], kp["wo"], kp["w1"], kp["w2"], kp["misc"])


# ----------------------------- embedding front-end (glue, plain JAX) ----------
def sinusoidal_table(num_emb, dim, padding_idx):
    half = dim // 2
    scale = math.log(10000.0) / (half - 1)
    freq = jnp.exp(jnp.arange(half, dtype=jnp.float32) * -scale)
    pos = jnp.arange(num_emb, dtype=jnp.float32)[:, None] * freq[None, :]
    table = jnp.concatenate([jnp.sin(pos), jnp.cos(pos)], axis=1)
    return table.at[padding_idx].set(0.0)


def embed_input(src_tokens, params):
    # x = embed_scale * embed_tokens(src_tokens) + SinusoidalPositionalEmbedding
    Bq, Tq = src_tokens.shape
    emb = params["embed"][src_tokens] * math.sqrt(EMBED_DIM)           # (B,T,C)
    nonpad = src_tokens != PAD_IDX
    pos = jnp.arange(Tq, dtype=jnp.int32)[None, :] + PAD_IDX + 1
    # left_pad=True shift (fairseq utils.make_positions)
    pos = pos - Tq + jnp.sum(nonpad, axis=1, keepdims=True).astype(jnp.int32)
    positions = jnp.where(nonpad, pos, PAD_IDX)
    x = emb + params["pos_table"][positions]
    pad_mask = src_tokens == PAD_IDX                                    # (B,T) bool
    kbias = jnp.where(pad_mask, NEG_INF, 0.0).astype(jnp.float32)[:, None, :]
    return x.astype(jnp.float32), kbias, pad_mask


def transformer_encoder(src_tokens, src_lengths, params, kparams):
    del src_lengths  # unused in the reference forward
    x, kbias, pad_mask = embed_input(src_tokens, params)
    # dropout(p, training=False) == identity
    enc = encoder_pallas(x.reshape(B * T, EMBED_DIM), kbias, kparams)
    # kernel already wrote (t, b, c) order: reshape is free, no XLA transpose
    # encoder_normalize_before=False -> no final LayerNorm
    return enc.reshape(T, B, EMBED_DIM), pad_mask          # (T,B,C), (B,T)


# ----------------------------- kernel-layout parameter prep -------------------
def to_kernel_params(params):
    """Stack per-layer weights over LAYERS, pre-transpose and fuse QKV into one
    lane-dense bf16 matrix, and pack every bias / LN param into one (8,128) f32
    tile per layer (one padded lane-row each) -> 5 weight inputs total."""
    bf16 = jnp.bfloat16
    assert 3 * EMBED_DIM <= 128 and FFN_DIM <= 128  # each misc row fits in 128 lanes

    def stk(fn):
        return jnp.stack([fn(lp) for lp in params["layers"]], axis=0)

    def row(v):
        v = v.reshape(-1)
        return jnp.pad(v, (0, 128 - v.shape[0]))

    def misc(lp):
        rows = [
            jnp.concatenate([lp["bq"].reshape(-1), lp["bk"].reshape(-1),
                             lp["bv"].reshape(-1)]),        # 96
            lp["bo"], lp["ln1_g"], lp["ln1_b"],
            lp["b1"], lp["b2"], lp["ln2_g"], lp["ln2_b"],
        ]
        return jnp.stack([row(r) for r in rows], axis=0)     # (8, 128) f32

    return dict(
        wqkv=stk(lambda lp: jnp.concatenate(
            [lp["wq"].T, lp["wk"].T, lp["wv"].T], axis=1).astype(bf16)),  # (C, 3C)
        wo=stk(lambda lp: lp["wo"].T.astype(bf16)),          # (C, C)
        w1=stk(lambda lp: lp["w1"].T.astype(bf16)),          # (C, F)
        w2=stk(lambda lp: lp["w2"].T.astype(bf16)),          # (F, C)
        misc=stk(misc),                                      # (8, 128)
    )


# ----------------------------- pure-JAX reference (sanity check) --------------
def _bf(a):
    return a.astype(jnp.bfloat16)


def _ref_attn(x, kbias, p):
    Bq, Tq, C = x.shape
    f32 = jnp.float32
    q = jnp.einsum('btc,dc->btd', _bf(x), _bf(p["wq"]), preferred_element_type=f32) + p["bq"]
    k = jnp.einsum('btc,dc->btd', _bf(x), _bf(p["wk"]), preferred_element_type=f32) + p["bk"]
    v = jnp.einsum('btc,dc->btd', _bf(x), _bf(p["wv"]), preferred_element_type=f32) + p["bv"]
    q = q * (HEAD_DIM ** -0.5)
    split = lambda z: z.reshape(Bq, Tq, HEADS, HEAD_DIM).transpose(0, 2, 1, 3)
    qh, kh, vh = split(q), split(k), split(v)
    s = jnp.einsum("bhqd,bhkd->bhqk", _bf(qh), _bf(kh), preferred_element_type=f32)
    s = s + kbias[:, :, None, :]
    pr = jax.nn.softmax(s, axis=-1)
    ctx = jnp.einsum("bhqk,bhkd->bhqd", _bf(pr), _bf(vh), preferred_element_type=f32)
    ctx = ctx.transpose(0, 2, 1, 3).reshape(Bq, Tq, C)
    out = jnp.einsum('btd,cd->btc', _bf(ctx), _bf(p["wo"]), preferred_element_type=f32) + p["bo"]
    return _layer_norm(x + out, p["ln1_g"], p["ln1_b"])


def _ref_ffn(x, p):
    f32 = jnp.float32
    h = jnp.einsum('btc,fc->btf', _bf(x), _bf(p["w1"]), preferred_element_type=f32) + p["b1"]
    h = jnp.maximum(h, 0.0)
    y = jnp.einsum('btf,cf->btc', _bf(h), _bf(p["w2"]), preferred_element_type=f32) + p["b2"]
    return _layer_norm(x + y, p["ln2_g"], p["ln2_b"])


def reference_encoder(src_tokens, params):
    x, kbias, pad_mask = embed_input(src_tokens, params)
    for lp in params["layers"]:
        x = _ref_attn(x, kbias, lp)
        x = _ref_ffn(x, lp)
    return jnp.transpose(x, (1, 0, 2)), pad_mask


# ----------------------------- parameter init ---------------------------------
def xavier_uniform(key, shape):
    fan_out, fan_in = shape
    a = math.sqrt(6.0 / (fan_in + fan_out))
    return jax.random.uniform(key, shape, jnp.float32, -a, a)


def init_params(key):
    keys = jax.random.split(key, 2 + LAYERS)
    embed = jax.random.normal(keys[0], (VOCAB, EMBED_DIM), jnp.float32) * (EMBED_DIM ** -0.5)
    embed = embed.at[PAD_IDX].set(0.0)
    pos_table = sinusoidal_table(MAX_SRC_POS + PAD_IDX + 1, EMBED_DIM, PAD_IDX)
    layers = []
    for l in range(LAYERS):
        k = jax.random.split(keys[2 + l], 4)
        in_proj = xavier_uniform(k[0], (3 * EMBED_DIM, EMBED_DIM))     # in_proj_weight
        wq, wk, wv = (in_proj[:EMBED_DIM],
                      in_proj[EMBED_DIM:2 * EMBED_DIM],
                      in_proj[2 * EMBED_DIM:])
        zc = jnp.zeros((1, EMBED_DIM), jnp.float32)
        layers.append(dict(
            wq=wq, wk=wk, wv=wv, bq=zc, bk=zc, bv=zc,       # in_proj_bias = 0
            wo=xavier_uniform(k[1], (EMBED_DIM, EMBED_DIM)), bo=zc,
            ln1_g=jnp.ones((1, EMBED_DIM), jnp.float32), ln1_b=zc,
            w1=xavier_uniform(k[2], (FFN_DIM, EMBED_DIM)),
            b1=jnp.zeros((1, FFN_DIM), jnp.float32),
            w2=xavier_uniform(k[3], (EMBED_DIM, FFN_DIM)), b2=zc,
            ln2_g=jnp.ones((1, EMBED_DIM), jnp.float32), ln2_b=zc,
        ))
    return dict(embed=embed, pos_table=pos_table, layers=layers)


# ----------------------------- main -------------------------------------------
if __name__ == "__main__":
    key = jax.random.PRNGKey(0)
    params = init_params(key)
    kparams = to_kernel_params(params)

    tok_key = jax.random.fold_in(key, 999)
    src_tokens = jax.random.randint(tok_key, (B, T), 2, VOCAB, dtype=jnp.int32)
    # left-pad (left_pad=True convention)
    src_tokens = src_tokens.at[0, :3].set(PAD_IDX)
    src_tokens = src_tokens.at[1, :1].set(PAD_IDX)
    src_lengths = jnp.sum(src_tokens != PAD_IDX, axis=1)

    out, pad_mask = transformer_encoder(src_tokens, src_lengths, params, kparams)
    out = jax.block_until_ready(out)

    assert out.shape == (T, B, EMBED_DIM)
    assert pad_mask.shape == (B, T)

    ref_out, _ = reference_encoder(src_tokens, params)
    np.testing.assert_allclose(np.asarray(out), np.asarray(ref_out), rtol=2e-2, atol=2e-2)

    print("KERNEL_OK")
</pallas_src>

<mosaic_0001>
module attributes {stable_mosaic.version = 11 : i64} {
  func.func @encoder_kernel(%arg0: memref<16x32xf32, #tpu.memory_space<vmem>>, %arg1: memref<2x1x8xf32, #tpu.memory_space<vmem>>, %arg2: memref<2x32x96xbf16, #tpu.memory_space<vmem>>, %arg3: memref<2x32x32xbf16, #tpu.memory_space<vmem>>, %arg4: memref<2x32x64xbf16, #tpu.memory_space<vmem>>, %arg5: memref<2x64x32xbf16, #tpu.memory_space<vmem>>, %arg6: memref<2x8x128xf32, #tpu.memory_space<vmem>>, %arg7: memref<8x64xf32, #tpu.memory_space<vmem>>) attributes {dimension_semantics = [], scalar_prefetch = 0 : i64, scratch_operands = 0 : i64, tpu.core_type = #tpu.core_type<tc>} {
    %c0 = arith.constant 0 : index
    %c0_0 = arith.constant 0 : index
    %0 = vector.load %arg0[%c0, %c0_0] : memref<16x32xf32, #tpu.memory_space<vmem>>, vector<16x32xf32>
    %c0_1 = arith.constant 0 : index
    %c0_2 = arith.constant 0 : index
    %c0_3 = arith.constant 0 : index
    %1 = vector.load %arg1[%c0_1, %c0_2, %c0_3] : memref<2x1x8xf32, #tpu.memory_space<vmem>>, vector<2x1x8xf32>
    %c0_4 = arith.constant 0 : index
    %c0_5 = arith.constant 0 : index
    %c0_6 = arith.constant 0 : index
    %2 = vector.load %arg2[%c0_4, %c0_5, %c0_6] : memref<2x32x96xbf16, #tpu.memory_space<vmem>>, vector<1x32x96xbf16>
    %3 = vector.shape_cast %2 : vector<1x32x96xbf16> to vector<32x96xbf16>
    %c0_7 = arith.constant 0 : index
    %c0_8 = arith.constant 0 : index
    %c0_9 = arith.constant 0 : index
    %4 = vector.load %arg3[%c0_7, %c0_8, %c0_9] : memref<2x32x32xbf16, #tpu.memory_space<vmem>>, vector<1x32x32xbf16>
    %5 = vector.shape_cast %4 : vector<1x32x32xbf16> to vector<32x32xbf16>
    %c0_10 = arith.constant 0 : index
    %c0_11 = arith.constant 0 : index
    %c0_12 = arith.constant 0 : index
    %6 = vector.load %arg4[%c0_10, %c0_11, %c0_12] : memref<2x32x64xbf16, #tpu.memory_space<vmem>>, vector<1x32x64xbf16>
    %7 = vector.shape_cast %6 : vector<1x32x64xbf16> to vector<32x64xbf16>
    %c0_13 = arith.constant 0 : index
    %c0_14 = arith.constant 0 : index
    %c0_15 = arith.constant 0 : index
    %8 = vector.load %arg5[%c0_13, %c0_14, %c0_15] : memref<2x64x32xbf16, #tpu.memory_space<vmem>>, vector<1x64x32xbf16>
    %9 = vector.shape_cast %8 : vector<1x64x32xbf16> to vector<64x32xbf16>
    %c0_16 = arith.constant 0 : index
    %c0_17 = arith.constant 0 : index
    %c0_18 = arith.constant 0 : index
    %10 = vector.load %arg6[%c0_16, %c0_17, %c0_18] : memref<2x8x128xf32, #tpu.memory_space<vmem>>, vector<1x8x128xf32>
    %11 = vector.shape_cast %10 : vector<1x8x128xf32> to vector<8x128xf32>
    %12 = vector.extract_strided_slice %11 {offsets = [0, 0], sizes = [1, 96], strides = [1, 1]} : vector<8x128xf32> to vector<1x96xf32>
    %13 = vector.extract_strided_slice %11 {offsets = [1, 0], sizes = [1, 32], strides = [1, 1]} : vector<8x128xf32> to vector<1x32xf32>
    %14 = vector.extract_strided_slice %11 {offsets = [2, 0], sizes = [1, 32], strides = [1, 1]} : vector<8x128xf32> to vector<1x32xf32>
    %15 = vector.extract_strided_slice %11 {offsets = [3, 0], sizes = [1, 32], strides = [1, 1]} : vector<8x128xf32> to vector<1x32xf32>
    %16 = vector.extract_strided_slice %11 {offsets = [4, 0], sizes = [1, 64], strides = [1, 1]} : vector<8x128xf32> to vector<1x64xf32>
    %17 = vector.extract_strided_slice %11 {offsets = [5, 0], sizes = [1, 32], strides = [1, 1]} : vector<8x128xf32> to vector<1x32xf32>
    %18 = vector.extract_strided_slice %11 {offsets = [6, 0], sizes = [1, 32], strides = [1, 1]} : vector<8x128xf32> to vector<1x32xf32>
    %19 = vector.extract_strided_slice %11 {offsets = [7, 0], sizes = [1, 32], strides = [1, 1]} : vector<8x128xf32> to vector<1x32xf32>
    %20 = arith.truncf %0 : vector<16x32xf32> to vector<16x32xbf16>
    %cst = arith.constant dense<0.000000e+00> : vector<16x96xf32>
    %21 = tpu.matmul %20, %3, %cst {dimension_numbers = #tpu.dot_dimension_numbers<[1], [0], [0], [1], [0, 0, 1, 1], [], []>} : vector<16x32xbf16>, vector<32x96xbf16>, vector<16x96xf32> -> vector<16x96xf32>
    %22 = vector.broadcast %12 : vector<1x96xf32> to vector<16x96xf32>
    %23 = arith.addf %21, %22 : vector<16x96xf32>
    %24 = vector.extract_strided_slice %23 {offsets = [0, 0], sizes = [16, 32], strides = [1, 1]} : vector<16x96xf32> to vector<16x32xf32>
    %cst_19 = arith.constant 0.353553385 : f32
    %25 = vector.broadcast %cst_19 : f32 to vector<16x32xf32>
    %26 = arith.mulf %24, %25 : vector<16x32xf32>
    %27 = vector.extract_strided_slice %23 {offsets = [0, 32], sizes = [16, 32], strides = [1, 1]} : vector<16x96xf32> to vector<16x32xf32>
    %28 = vector.extract_strided_slice %23 {offsets = [0, 64], sizes = [16, 32], strides = [1, 1]} : vector<16x96xf32> to vector<16x32xf32>
    %29 = vector.extract_strided_slice %26 {offsets = [0, 0], sizes = [16, 8], strides = [1, 1]} : vector<16x32xf32> to vector<16x8xf32>
    %30 = vector.shape_cast %29 : vector<16x8xf32> to vector<2x8x8xf32>
    %31 = arith.truncf %30 : vector<2x8x8xf32> to vector<2x8x8xbf16>
    %32 = vector.extract_strided_slice %27 {offsets = [0, 0], sizes = [16, 8], strides = [1, 1]} : vector<16x32xf32> to vector<16x8xf32>
    %33 = vector.shape_cast %32 : vector<16x8xf32> to vector<2x8x8xf32>
    %34 = arith.truncf %33 : vector<2x8x8xf32> to vector<2x8x8xbf16>
    %35 = vector.extract_strided_slice %28 {offsets = [0, 0], sizes = [16, 8], strides = [1, 1]} : vector<16x32xf32> to vector<16x8xf32>
    %36 = vector.shape_cast %35 : vector<16x8xf32> to vector<2x8x8xf32>
    %37 = arith.truncf %36 : vector<2x8x8xf32> to vector<2x8x8xbf16>
    "tpu.trace_start"() <{level = 10 : i32, message = "btd,bsd->bts"}> : () -> ()
    %cst_20 = arith.constant dense<0.000000e+00> : vector<2x8x8xf32>
    %38 = tpu.matmul %31, %34, %cst_20 {dimension_numbers = #tpu.dot_dimension_numbers<[2], [2], [1], [1], [0, 0, 0, 1, 1, 1], [0], [0]>} : vector<2x8x8xbf16>, vector<2x8x8xbf16>, vector<2x8x8xf32> -> vector<2x8x8xf32>
    "tpu.trace_stop"() : () -> ()
    %39 = vector.broadcast %1 : vector<2x1x8xf32> to vector<2x8x8xf32>
    %40 = arith.addf %38, %39 : vector<2x8x8xf32>
    %41 = math.exp %40 : vector<2x8x8xf32>
    %cst_21 = arith.constant dense<0.000000e+00> : vector<2x8xf32>
    %42 = vector.multi_reduction <add>, %41, %cst_21 [2] : vector<2x8x8xf32> to vector<2x8xf32>
    %43 = vector.shape_cast %42 : vector<2x8xf32> to vector<2x8x1xf32>
    %44 = tpu.reciprocal %43 {approx = true} : vector<2x8x1xf32> -> vector<2x8x1xf32>
    %45 = vector.broadcast %44 : vector<2x8x1xf32> to vector<2x8x8xf32>
    %46 = arith.mulf %41, %45 : vector<2x8x8xf32>
    %47 = arith.truncf %46 : vector<2x8x8xf32> to vector<2x8x8xbf16>
    "tpu.trace_start"() <{level = 10 : i32, message = "bts,bsd->btd"}> : () -> ()
    %cst_22 = arith.constant dense<0.000000e+00> : vector<2x8x8xf32>
    %48 = tpu.matmul %47, %37, %cst_22 {dimension_numbers = #tpu.dot_dimension_numbers<[2], [1], [1], [2], [0, 0, 0, 1, 1, 2], [0], [0]>} : vector<2x8x8xbf16>, vector<2x8x8xbf16>, vector<2x8x8xf32> -> vector<2x8x8xf32>
    "tpu.trace_stop"() : () -> ()
    %49 = vector.shape_cast %48 : vector<2x8x8xf32> to vector<16x8xf32>
    %50 = vector.extract_strided_slice %26 {offsets = [0, 8], sizes = [16, 8], strides = [1, 1]} : vector<16x32xf32> to vector<16x8xf32>
    %51 = vector.shape_cast %50 : vector<16x8xf32> to vector<2x8x8xf32>
    %52 = arith.truncf %51 : vector<2x8x8xf32> to vector<2x8x8xbf16>
    %53 = vector.extract_strided_slice %27 {offsets = [0, 8], sizes = [16, 8], strides = [1, 1]} : vector<16x32xf32> to vector<16x8xf32>
    %54 = vector.shape_cast %53 : vector<16x8xf32> to vector<2x8x8xf32>
    %55 = arith.truncf %54 : vector<2x8x8xf32> to vector<2x8x8xbf16>
    %56 = vector.extract_strided_slice %28 {offsets = [0, 8], sizes = [16, 8], strides = [1, 1]} : vector<16x32xf32> to vector<16x8xf32>
    %57 = vector.shape_cast %56 : vector<16x8xf32> to vector<2x8x8xf32>
    %58 = arith.truncf %57 : vector<2x8x8xf32> to vector<2x8x8xbf16>
    "tpu.trace_start"() <{level = 10 : i32, message = "btd,bsd->bts"}> : () -> ()
    %cst_23 = arith.constant dense<0.000000e+00> : vector<2x8x8xf32>
    %59 = tpu.matmul %52, %55, %cst_23 {dimension_numbers = #tpu.dot_dimension_numbers<[2], [2], [1], [1], [0, 0, 0, 1, 1, 1], [0], [0]>} : vector<2x8x8xbf16>, vector<2x8x8xbf16>, vector<2x8x8xf32> -> vector<2x8x8xf32>
    "tpu.trace_stop"() : () -> ()
    %60 = vector.broadcast %1 : vector<2x1x8xf32> to vector<2x8x8xf32>
    %61 = arith.addf %59, %60 : vector<2x8x8xf32>
    %62 = math.exp %61 : vector<2x8x8xf32>
    %cst_24 = arith.constant dense<0.000000e+00> : vector<2x8xf32>
    %63 = vector.multi_reduction <add>, %62, %cst_24 [2] : vector<2x8x8xf32> to vector<2x8xf32>
    %64 = vector.shape_cast %63 : vector<2x8xf32> to vector<2x8x1xf32>
    %65 = tpu.reciprocal %64 {approx = true} : vector<2x8x1xf32> -> vector<2x8x1xf32>
    %66 = vector.broadcast %65 : vector<2x8x1xf32> to vector<2x8x8xf32>
    %67 = arith.mulf %62, %66 : vector<2x8x8xf32>
    %68 = arith.truncf %67 : vector<2x8x8xf32> to vector<2x8x8xbf16>
    "tpu.trace_start"() <{level = 10 : i32, message = "bts,bsd->btd"}> : () -> ()
    %cst_25 = arith.constant dense<0.000000e+00> : vector<2x8x8xf32>
    %69 = tpu.matmul %68, %58, %cst_25 {dimension_numbers = #tpu.dot_dimension_numbers<[2], [1], [1], [2], [0, 0, 0, 1, 1, 2], [0], [0]>} : vector<2x8x8xbf16>, vector<2x8x8xbf16>, vector<2x8x8xf32> -> vector<2x8x8xf32>
    "tpu.trace_stop"() : () -> ()
    %70 = vector.shape_cast %69 : vector<2x8x8xf32> to vector<16x8xf32>
    %71 = vector.extract_strided_slice %26 {offsets = [0, 16], sizes = [16, 8], strides = [1, 1]} : vector<16x32xf32> to vector<16x8xf32>
    %72 = vector.shape_cast %71 : vector<16x8xf32> to vector<2x8x8xf32>
    %73 = arith.truncf %72 : vector<2x8x8xf32> to vector<2x8x8xbf16>
    %74 = vector.extract_strided_slice %27 {offsets = [0, 16], sizes = [16, 8], strides = [1, 1]} : vector<16x32xf32> to vector<16x8xf32>
    %75 = vector.shape_cast %74 : vector<16x8xf32> to vector<2x8x8xf32>
    %76 = arith.truncf %75 : vector<2x8x8xf32> to vector<2x8x8xbf16>
    %77 = vector.extract_strided_slice %28 {offsets = [0, 16], sizes = [16, 8], strides = [1, 1]} : vector<16x32xf32> to vector<16x8xf32>
    %78 = vector.shape_cast %77 : vector<16x8xf32> to vector<2x8x8xf32>
    %79 = arith.truncf %78 : vector<2x8x8xf32> to vector<2x8x8xbf16>
    "tpu.trace_start"() <{level = 10 : i32, message = "btd,bsd->bts"}> : () -> ()
    %cst_26 = arith.constant dense<0.000000e+00> : vector<2x8x8xf32>
    %80 = tpu.matmul %73, %76, %cst_26 {dimension_numbers = #tpu.dot_dimension_numbers<[2], [2], [1], [1], [0, 0, 0, 1, 1, 1], [0], [0]>} : vector<2x8x8xbf16>, vector<2x8x8xbf16>, vector<2x8x8xf32> -> vector<2x8x8xf32>
    "tpu.trace_stop"() : () -> ()
    %81 = vector.broadcast %1 : vector<2x1x8xf32> to vector<2x8x8xf32>
    %82 = arith.addf %80, %81 : vector<2x8x8xf32>
    %83 = math.exp %82 : vector<2x8x8xf32>
    %cst_27 = arith.constant dense<0.000000e+00> : vector<2x8xf32>
    %84 = vector.multi_reduction <add>, %83, %cst_27 [2] : vector<2x8x8xf32> to vector<2x8xf32>
    %85 = vector.shape_cast %84 : vector<2x8xf32> to vector<2x8x1xf32>
    %86 = tpu.reciprocal %85 {approx = true} : vector<2x8x1xf32> -> vector<2x8x1xf32>
    %87 = vector.broadcast %86 : vector<2x8x1xf32> to vector<2x8x8xf32>
    %88 = arith.mulf %83, %87 : vector<2x8x8xf32>
    %89 = arith.truncf %88 : vector<2x8x8xf32> to vector<2x8x8xbf16>
    "tpu.trace_start"() <{level = 10 : i32, message = "bts,bsd->btd"}> : () -> ()
    %cst_28 = arith.constant dense<0.000000e+00> : vector<2x8x8xf32>
    %90 = tpu.matmul %89, %79, %cst_28 {dimension_numbers = #tpu.dot_dimension_numbers<[2], [1], [1], [2], [0, 0, 0, 1, 1, 2], [0], [0]>} : vector<2x8x8xbf16>, vector<2x8x8xbf16>, vector<2x8x8xf32> -> vector<2x8x8xf32>
    "tpu.trace_stop"() : () -> ()
    %91 = vector.shape_cast %90 : vector<2x8x8xf32> to vector<16x8xf32>
    %92 = vector.extract_strided_slice %26 {offsets = [0, 24], sizes = [16, 8], strides = [1, 1]} : vector<16x32xf32> to vector<16x8xf32>
    %93 = vector.shape_cast %92 : vector<16x8xf32> to vector<2x8x8xf32>
    %94 = arith.truncf %93 : vector<2x8x8xf32> to vector<2x8x8xbf16>
    %95 = vector.extract_strided_slice %27 {offsets = [0, 24], sizes = [16, 8], strides = [1, 1]} : vector<16x32xf32> to vector<16x8xf32>
    %96 = vector.shape_cast %95 : vector<16x8xf32> to vector<2x8x8xf32>
    %97 = arith.truncf %96 : vector<2x8x8xf32> to vector<2x8x8xbf16>
    %98 = vector.extract_strided_slice %28 {offsets = [0, 24], sizes = [16, 8], strides = [1, 1]} : vector<16x32xf32> to vector<16x8xf32>
    %99 = vector.shape_cast %98 : vector<16x8xf32> to vector<2x8x8xf32>
    %100 = arith.truncf %99 : vector<2x8x8xf32> to vector<2x8x8xbf16>
    "tpu.trace_start"() <{level = 10 : i32, message = "btd,bsd->bts"}> : () -> ()
    %cst_29 = arith.constant dense<0.000000e+00> : vector<2x8x8xf32>
    %101 = tpu.matmul %94, %97, %cst_29 {dimension_numbers = #tpu.dot_dimension_numbers<[2], [2], [1], [1], [0, 0, 0, 1, 1, 1], [0], [0]>} : vector<2x8x8xbf16>, vector<2x8x8xbf16>, vector<2x8x8xf32> -> vector<2x8x8xf32>
    "tpu.trace_stop"() : () -> ()
    %102 = vector.broadcast %1 : vector<2x1x8xf32> to vector<2x8x8xf32>
    %103 = arith.addf %101, %102 : vector<2x8x8xf32>
    %104 = math.exp %103 : vector<2x8x8xf32>
    %cst_30 = arith.constant dense<0.000000e+00> : vector<2x8xf32>
    %105 = vector.multi_reduction <add>, %104, %cst_30 [2] : vector<2x8x8xf32> to vector<2x8xf32>
    %106 = vector.shape_cast %105 : vector<2x8xf32> to vector<2x8x1xf32>
    %107 = tpu.reciprocal %106 {approx = true} : vector<2x8x1xf32> -> vector<2x8x1xf32>
    %108 = vector.broadcast %107 : vector<2x8x1xf32> to vector<2x8x8xf32>
    %109 = arith.mulf %104, %108 : vector<2x8x8xf32>
    %110 = arith.truncf %109 : vector<2x8x8xf32> to vector<2x8x8xbf16>
    "tpu.trace_start"() <{level = 10 : i32, message = "bts,bsd->btd"}> : () -> ()
    %cst_31 = arith.constant dense<0.000000e+00> : vector<2x8x8xf32>
    %111 = tpu.matmul %110, %100, %cst_31 {dimension_numbers = #tpu.dot_dimension_numbers<[2], [1], [1], [2], [0, 0, 0, 1, 1, 2], [0], [0]>} : vector<2x8x8xbf16>, vector<2x8x8xbf16>, vector<2x8x8xf32> -> vector<2x8x8xf32>
    "tpu.trace_stop"() : () -> ()
    %112 = vector.shape_cast %111 : vector<2x8x8xf32> to vector<16x8xf32>
    %113 = tpu.concatenate %49, %70, %91, %112 in 1 : vector<16x8xf32>, vector<16x8xf32>, vector<16x8xf32>, vector<16x8xf32> -> vector<16x32xf32>
    %114 = arith.truncf %113 : vector<16x32xf32> to vector<16x32xbf16>
    %cst_32 = arith.constant dense<0.000000e+00> : vector<16x32xf32>
    %115 = tpu.matmul %114, %5, %cst_32 {dimension_numbers = #tpu.dot_dimension_numbers<[1], [0], [0], [1], [0, 0, 1, 1], [], []>} : vector<16x32xbf16>, vector<32x32xbf16>, vector<16x32xf32> -> vector<16x32xf32>
    %116 = vector.broadcast %13 : vector<1x32xf32> to vector<16x32xf32>
    %117 = arith.addf %115, %116 : vector<16x32xf32>
    %118 = arith.addf %0, %117 : vector<16x32xf32>
    %cst_33 = arith.constant dense<0.000000e+00> : vector<16xf32>
    %119 = vector.multi_reduction <add>, %118, %cst_33 [1] : vector<16x32xf32> to vector<16xf32>
    %120 = vector.shape_cast %119 : vector<16xf32> to vector<16x1xf32>
    %cst_34 = arith.constant 3.200000e+01 : f32
    %121 = vector.broadcast %cst_34 : f32 to vector<16x1xf32>
    %122 = arith.divf %120, %121 : vector<16x1xf32>
    %123 = vector.broadcast %122 : vector<16x1xf32> to vector<16x32xf32>
    %124 = arith.subf %118, %123 : vector<16x32xf32>
    %125 = arith.mulf %124, %124 : vector<16x32xf32>
    %cst_35 = arith.constant dense<0.000000e+00> : vector<16xf32>
    %126 = vector.multi_reduction <add>, %125, %cst_35 [1] : vector<16x32xf32> to vector<16xf32>
    %127 = vector.shape_cast %126 : vector<16xf32> to vector<16x1xf32>
    %cst_36 = arith.constant 3.200000e+01 : f32
    %128 = vector.broadcast %cst_36 : f32 to vector<16x1xf32>
    %129 = arith.divf %127, %128 : vector<16x1xf32>
    %130 = vector.broadcast %122 : vector<16x1xf32> to vector<16x32xf32>
    %131 = arith.subf %118, %130 : vector<16x32xf32>
    %cst_37 = arith.constant 9.99999974E-6 : f32
    %132 = vector.broadcast %cst_37 : f32 to vector<16x1xf32>
    %133 = arith.addf %129, %132 : vector<16x1xf32>
    %134 = math.rsqrt %133 : vector<16x1xf32>
    %135 = vector.broadcast %134 : vector<16x1xf32> to vector<16x32xf32>
    %136 = arith.mulf %131, %135 : vector<16x32xf32>
    %137 = vector.broadcast %14 : vector<1x32xf32> to vector<16x32xf32>
    %138 = arith.mulf %136, %137 : vector<16x32xf32>
    %139 = vector.broadcast %15 : vector<1x32xf32> to vector<16x32xf32>
    %140 = arith.addf %138, %139 : vector<16x32xf32>
    %141 = arith.truncf %140 : vector<16x32xf32> to vector<16x32xbf16>
    %cst_38 = arith.constant dense<0.000000e+00> : vector<16x64xf32>
    %142 = tpu.matmul %141, %7, %cst_38 {dimension_numbers = #tpu.dot_dimension_numbers<[1], [0], [0], [1], [0, 0, 1, 1], [], []>} : vector<16x32xbf16>, vector<32x64xbf16>, vector<16x64xf32> -> vector<16x64xf32>
    %143 = vector.broadcast %16 : vector<1x64xf32> to vector<16x64xf32>
    %144 = arith.addf %142, %143 : vector<16x64xf32>
    %cst_39 = arith.constant 0.000000e+00 : f32
    %145 = vector.broadcast %cst_39 : f32 to vector<16x64xf32>
    %146 = arith.maximumf %144, %145 : vector<16x64xf32>
    %147 = arith.truncf %146 : vector<16x64xf32> to vector<16x64xbf16>
    %cst_40 = arith.constant dense<0.000000e+00> : vector<16x32xf32>
    %148 = tpu.matmul %147, %9, %cst_40 {dimension_numbers = #tpu.dot_dimension_numbers<[1], [0], [0], [1], [0, 0, 1, 1], [], []>} : vector<16x64xbf16>, vector<64x32xbf16>, vector<16x32xf32> -> vector<16x32xf32>
    %149 = vector.broadcast %17 : vector<1x32xf32> to vector<16x32xf32>
    %150 = arith.addf %148, %149 : vector<16x32xf32>
    %151 = arith.addf %140, %150 : vector<16x32xf32>
    %cst_41 = arith.constant dense<0.000000e+00> : vector<16xf32>
    %152 = vector.multi_reduction <add>, %151, %cst_41 [1] : vector<16x32xf32> to vector<16xf32>
    %153 = vector.shape_cast %152 : vector<16xf32> to vector<16x1xf32>
    %cst_42 = arith.constant 3.200000e+01 : f32
    %154 = vector.broadcast %cst_42 : f32 to vector<16x1xf32>
    %155 = arith.divf %153, %154 : vector<16x1xf32>
    %156 = vector.broadcast %155 : vector<16x1xf32> to vector<16x32xf32>
    %157 = arith.subf %151, %156 : vector<16x32xf32>
    %158 = arith.mulf %157, %157 : vector<16x32xf32>
    %cst_43 = arith.constant dense<0.000000e+00> : vector<16xf32>
    %159 = vector.multi_reduction <add>, %158, %cst_43 [1] : vector<16x32xf32> to vector<16xf32>
    %160 = vector.shape_cast %159 : vector<16xf32> to vector<16x1xf32>
    %cst_44 = arith.constant 3.200000e+01 : f32
    %161 = vector.broadcast %cst_44 : f32 to vector<16x1xf32>
    %162 = arith.divf %160, %161 : vector<16x1xf32>
    %163 = vector.broadcast %155 : vector<16x1xf32> to vector<16x32xf32>
    %164 = arith.subf %151, %163 : vector<16x32xf32>
    %cst_45 = arith.constant 9.99999974E-6 : f32
    %165 = vector.broadcast %cst_45 : f32 to vector<16x1xf32>
    %166 = arith.addf %162, %165 : vector<16x1xf32>
    %167 = math.rsqrt %166 : vector<16x1xf32>
    %168 = vector.broadcast %167 : vector<16x1xf32> to vector<16x32xf32>
    %169 = arith.mulf %164, %168 : vector<16x32xf32>
    %170 = vector.broadcast %18 : vector<1x32xf32> to vector<16x32xf32>
    %171 = arith.mulf %169, %170 : vector<16x32xf32>
    %172 = vector.broadcast %19 : vector<1x32xf32> to vector<16x32xf32>
    %173 = arith.addf %171, %172 : vector<16x32xf32>
    %c1 = arith.constant 1 : index
    %c0_46 = arith.constant 0 : index
    %c0_47 = arith.constant 0 : index
    %174 = vector.load %arg2[%c1, %c0_46, %c0_47] : memref<2x32x96xbf16, #tpu.memory_space<vmem>>, vector<1x32x96xbf16>
    %175 = vector.shape_cast %174 : vector<1x32x96xbf16> to vector<32x96xbf16>
    %c1_48 = arith.constant 1 : index
    %c0_49 = arith.constant 0 : index
    %c0_50 = arith.constant 0 : index
    %176 = vector.load %arg3[%c1_48, %c0_49, %c0_50] : memref<2x32x32xbf16, #tpu.memory_space<vmem>>, vector<1x32x32xbf16>
    %177 = vector.shape_cast %176 : vector<1x32x32xbf16> to vector<32x32xbf16>
    %c1_51 = arith.constant 1 : index
    %c0_52 = arith.constant 0 : index
    %c0_53 = arith.constant 0 : index
    %178 = vector.load %arg4[%c1_51, %c0_52, %c0_53] : memref<2x32x64xbf16, #tpu.memory_space<vmem>>, vector<1x32x64xbf16>
    %179 = vector.shape_cast %178 : vector<1x32x64xbf16> to vector<32x64xbf16>
    %c1_54 = arith.constant 1 : index
    %c0_55 = arith.constant 0 : index
    %c0_56 = arith.constant 0 : index
    %180 = vector.load %arg5[%c1_54, %c0_55, %c0_56] : memref<2x64x32xbf16, #tpu.memory_space<vmem>>, vector<1x64x32xbf16>
    %181 = vector.shape_cast %180 : vector<1x64x32xbf16> to vector<64x32xbf16>
    %c1_57 = arith.constant 1 : index
    %c0_58 = arith.constant 0 : index
    %c0_59 = arith.constant 0 : index
    %182 = vector.load %arg6[%c1_57, %c0_58, %c0_59] : memref<2x8x128xf32, #tpu.memory_space<vmem>>, vector<1x8x128xf32>
    %183 = vector.shape_cast %182 : vector<1x8x128xf32> to vector<8x128xf32>
    %184 = vector.extract_strided_slice %183 {offsets = [0, 0], sizes = [1, 96], strides = [1, 1]} : vector<8x128xf32> to vector<1x96xf32>
    %185 = vector.extract_strided_slice %183 {offsets = [1, 0], sizes = [1, 32], strides = [1, 1]} : vector<8x128xf32> to vector<1x32xf32>
    %186 = vector.extract_strided_slice %183 {offsets = [2, 0], sizes = [1, 32], strides = [1, 1]} : vector<8x128xf32> to vector<1x32xf32>
    %187 = vector.extract_strided_slice %183 {offsets = [3, 0], sizes = [1, 32], strides = [1, 1]} : vector<8x128xf32> to vector<1x32xf32>
    %188 = vector.extract_strided_slice %183 {offsets = [4, 0], sizes = [1, 64], strides = [1, 1]} : vector<8x128xf32> to vector<1x64xf32>
    %189 = vector.extract_strided_slice %183 {offsets = [5, 0], sizes = [1, 32], strides = [1, 1]} : vector<8x128xf32> to vector<1x32xf32>
    %190 = vector.extract_strided_slice %183 {offsets = [6, 0], sizes = [1, 32], strides = [1, 1]} : vector<8x128xf32> to vector<1x32xf32>
    %191 = vector.extract_strided_slice %183 {offsets = [7, 0], sizes = [1, 32], strides = [1, 1]} : vector<8x128xf32> to vector<1x32xf32>
    %192 = arith.truncf %173 : vector<16x32xf32> to vector<16x32xbf16>
    %cst_60 = arith.constant dense<0.000000e+00> : vector<16x96xf32>
    %193 = tpu.matmul %192, %175, %cst_60 {dimension_numbers = #tpu.dot_dimension_numbers<[1], [0], [0], [1], [0, 0, 1, 1], [], []>} : vector<16x32xbf16>, vector<32x96xbf16>, vector<16x96xf32> -> vector<16x96xf32>
    %194 = vector.broadcast %184 : vector<1x96xf32> to vector<16x96xf32>
    %195 = arith.addf %193, %194 : vector<16x96xf32>
    %196 = vector.extract_strided_slice %195 {offsets = [0, 0], sizes = [16, 32], strides = [1, 1]} : vector<16x96xf32> to vector<16x32xf32>
    %cst_61 = arith.constant 0.353553385 : f32
    %197 = vector.broadcast %cst_61 : f32 to vector<16x32xf32>
    %198 = arith.mulf %196, %197 : vector<16x32xf32>
    %199 = vector.extract_strided_slice %195 {offsets = [0, 32], sizes = [16, 32], strides = [1, 1]} : vector<16x96xf32> to vector<16x32xf32>
    %200 = vector.extract_strided_slice %195 {offsets = [0, 64], sizes = [16, 32], strides = [1, 1]} : vector<16x96xf32> to vector<16x32xf32>
    %201 = vector.extract_strided_slice %198 {offsets = [0, 0], sizes = [16, 8], strides = [1, 1]} : vector<16x32xf32> to vector<16x8xf32>
    %202 = vector.shape_cast %201 : vector<16x8xf32> to vector<2x8x8xf32>
    %203 = arith.truncf %202 : vector<2x8x8xf32> to vector<2x8x8xbf16>
    %204 = vector.extract_strided_slice %199 {offsets = [0, 0], sizes = [16, 8], strides = [1, 1]} : vector<16x32xf32> to vector<16x8xf32>
    %205 = vector.shape_cast %204 : vector<16x8xf32> to vector<2x8x8xf32>
    %206 = arith.truncf %205 : vector<2x8x8xf32> to vector<2x8x8xbf16>
    %207 = vector.extract_strided_slice %200 {offsets = [0, 0], sizes = [16, 8], strides = [1, 1]} : vector<16x32xf32> to vector<16x8xf32>
    %208 = vector.shape_cast %207 : vector<16x8xf32> to vector<2x8x8xf32>
    %209 = arith.truncf %208 : vector<2x8x8xf32> to vector<2x8x8xbf16>
    "tpu.trace_start"() <{level = 10 : i32, message = "btd,bsd->bts"}> : () -> ()
    %cst_62 = arith.constant dense<0.000000e+00> : vector<2x8x8xf32>
    %210 = tpu.matmul %203, %206, %cst_62 {dimension_numbers = #tpu.dot_dimension_numbers<[2], [2], [1], [1], [0, 0, 0, 1, 1, 1], [0], [0]>} : vector<2x8x8xbf16>, vector<2x8x8xbf16>, vector<2x8x8xf32> -> vector<2x8x8xf32>
    "tpu.trace_stop"() : () -> ()
    %211 = vector.broadcast %1 : vector<2x1x8xf32> to vector<2x8x8xf32>
    %212 = arith.addf %210, %211 : vector<2x8x8xf32>
    %213 = math.exp %212 : vector<2x8x8xf32>
    %cst_63 = arith.constant dense<0.000000e+00> : vector<2x8xf32>
    %214 = vector.multi_reduction <add>, %213, %cst_63 [2] : vector<2x8x8xf32> to vector<2x8xf32>
    %215 = vector.shape_cast %214 : vector<2x8xf32> to vector<2x8x1xf32>
    %216 = tpu.reciprocal %215 {approx = true} : vector<2x8x1xf32> -> vector<2x8x1xf32>
    %217 = vector.broadcast %216 : vector<2x8x1xf32> to vector<2x8x8xf32>
    %218 = arith.mulf %213, %217 : vector<2x8x8xf32>
    %219 = arith.truncf %218 : vector<2x8x8xf32> to vector<2x8x8xbf16>
    "tpu.trace_start"() <{level = 10 : i32, message = "bts,bsd->btd"}> : () -> ()
    %cst_64 = arith.constant dense<0.000000e+00> : vector<2x8x8xf32>
    %220 = tpu.matmul %219, %209, %cst_64 {dimension_numbers = #tpu.dot_dimension_numbers<[2], [1], [1], [2], [0, 0, 0, 1, 1, 2], [0], [0]>} : vector<2x8x8xbf16>, vector<2x8x8xbf16>, vector<2x8x8xf32> -> vector<2x8x8xf32>
    "tpu.trace_stop"() : () -> ()
    %221 = vector.shape_cast %220 : vector<2x8x8xf32> to vector<16x8xf32>
    %222 = vector.extract_strided_slice %198 {offsets = [0, 8], sizes = [16, 8], strides = [1, 1]} : vector<16x32xf32> to vector<16x8xf32>
    %223 = vector.shape_cast %222 : vector<16x8xf32> to vector<2x8x8xf32>
    %224 = arith.truncf %223 : vector<2x8x8xf32> to vector<2x8x8xbf16>
    %225 = vector.extract_strided_slice %199 {offsets = [0, 8], sizes = [16, 8], strides = [1, 1]} : vector<16x32xf32> to vector<16x8xf32>
    %226 = vector.shape_cast %225 : vector<16x8xf32> to vector<2x8x8xf32>
    %227 = arith.truncf %226 : vector<2x8x8xf32> to vector<2x8x8xbf16>
    %228 = vector.extract_strided_slice %200 {offsets = [0, 8], sizes = [16, 8], strides = [1, 1]} : vector<16x32xf32> to vector<16x8xf32>
    %229 = vector.shape_cast %228 : vector<16x8xf32> to vector<2x8x8xf32>
    %230 = arith.truncf %229 : vector<2x8x8xf32> to vector<2x8x8xbf16>
    "tpu.trace_start"() <{level = 10 : i32, message = "btd,bsd->bts"}> : () -> ()
    %cst_65 = arith.constant dense<0.000000e+00> : vector<2x8x8xf32>
    %231 = tpu.matmul %224, %227, %cst_65 {dimension_numbers = #tpu.dot_dimension_numbers<[2], [2], [1], [1], [0, 0, 0, 1, 1, 1], [0], [0]>} : vector<2x8x8xbf16>, vector<2x8x8xbf16>, vector<2x8x8xf32> -> vector<2x8x8xf32>
    "tpu.trace_stop"() : () -> ()
    %232 = vector.broadcast %1 : vector<2x1x8xf32> to vector<2x8x8xf32>
    %233 = arith.addf %231, %232 : vector<2x8x8xf32>
    %234 = math.exp %233 : vector<2x8x8xf32>
    %cst_66 = arith.constant dense<0.000000e+00> : vector<2x8xf32>
    %235 = vector.multi_reduction <add>, %234, %cst_66 [2] : vector<2x8x8xf32> to vector<2x8xf32>
    %236 = vector.shape_cast %235 : vector<2x8xf32> to vector<2x8x1xf32>
    %237 = tpu.reciprocal %236 {approx = true} : vector<2x8x1xf32> -> vector<2x8x1xf32>
    %238 = vector.broadcast %237 : vector<2x8x1xf32> to vector<2x8x8xf32>
    %239 = arith.mulf %234, %238 : vector<2x8x8xf32>
    %240 = arith.truncf %239 : vector<2x8x8xf32> to vector<2x8x8xbf16>
    "tpu.trace_start"() <{level = 10 : i32, message = "bts,bsd->btd"}> : () -> ()
    %cst_67 = arith.constant dense<0.000000e+00> : vector<2x8x8xf32>
    %241 = tpu.matmul %240, %230, %cst_67 {dimension_numbers = #tpu.dot_dimension_numbers<[2], [1], [1], [2], [0, 0, 0, 1, 1, 2], [0], [0]>} : vector<2x8x8xbf16>, vector<2x8x8xbf16>, vector<2x8x8xf32> -> vector<2x8x8xf32>
    "tpu.trace_stop"() : () -> ()
    %242 = vector.shape_cast %241 : vector<2x8x8xf32> to vector<16x8xf32>
    %243 = vector.extract_strided_slice %198 {offsets = [0, 16], sizes = [16, 8], strides = [1, 1]} : vector<16x32xf32> to vector<16x8xf32>
    %244 = vector.shape_cast %243 : vector<16x8xf32> to vector<2x8x8xf32>
    %245 = arith.truncf %244 : vector<2x8x8xf32> to vector<2x8x8xbf16>
    %246 = vector.extract_strided_slice %199 {offsets = [0, 16], sizes = [16, 8], strides = [1, 1]} : vector<16x32xf32> to vector<16x8xf32>
    %247 = vector.shape_cast %246 : vector<16x8xf32> to vector<2x8x8xf32>
    %248 = arith.truncf %247 : vector<2x8x8xf32> to vector<2x8x8xbf16>
    %249 = vector.extract_strided_slice %200 {offsets = [0, 16], sizes = [16, 8], strides = [1, 1]} : vector<16x32xf32> to vector<16x8xf32>
    %250 = vector.shape_cast %249 : vector<16x8xf32> to vector<2x8x8xf32>
    %251 = arith.truncf %250 : vector<2x8x8xf32> to vector<2x8x8xbf16>
    "tpu.trace_start"() <{level = 10 : i32, message = "btd,bsd->bts"}> : () -> ()
    %cst_68 = arith.constant dense<0.000000e+00> : vector<2x8x8xf32>
    %252 = tpu.matmul %245, %248, %cst_68 {dimension_numbers = #tpu.dot_dimension_numbers<[2], [2], [1], [1], [0, 0, 0, 1, 1, 1], [0], [0]>} : vector<2x8x8xbf16>, vector<2x8x8xbf16>, vector<2x8x8xf32> -> vector<2x8x8xf32>
    "tpu.trace_stop"() : () -> ()
    %253 = vector.broadcast %1 : vector<2x1x8xf32> to vector<2x8x8xf32>
    %254 = arith.addf %252, %253 : vector<2x8x8xf32>
    %255 = math.exp %254 : vector<2x8x8xf32>
    %cst_69 = arith.constant dense<0.000000e+00> : vector<2x8xf32>
    %256 = vector.multi_reduction <add>, %255, %cst_69 [2] : vector<2x8x8xf32> to vector<2x8xf32>
    %257 = vector.shape_cast %256 : vector<2x8xf32> to vector<2x8x1xf32>
    %258 = tpu.reciprocal %257 {approx = true} : vector<2x8x1xf32> -> vector<2x8x1xf32>
    %259 = vector.broadcast %258 : vector<2x8x1xf32> to vector<2x8x8xf32>
    %260 = arith.mulf %255, %259 : vector<2x8x8xf32>
    %261 = arith.truncf %260 : vector<2x8x8xf32> to vector<2x8x8xbf16>
    "tpu.trace_start"() <{level = 10 : i32, message = "bts,bsd->btd"}> : () -> ()
    %cst_70 = arith.constant dense<0.000000e+00> : vector<2x8x8xf32>
    %262 = tpu.matmul %261, %251, %cst_70 {dimension_numbers = #tpu.dot_dimension_numbers<[2], [1], [1], [2], [0, 0, 0, 1, 1, 2], [0], [0]>} : vector<2x8x8xbf16>, vector<2x8x8xbf16>, vector<2x8x8xf32> -> vector<2x8x8xf32>
    "tpu.trace_stop"() : () -> ()
    %263 = vector.shape_cast %262 : vector<2x8x8xf32> to vector<16x8xf32>
    %264 = vector.extract_strided_slice %198 {offsets = [0, 24], sizes = [16, 8], strides = [1, 1]} : vector<16x32xf32> to vector<16x8xf32>
    %265 = vector.shape_cast %264 : vector<16x8xf32> to vector<2x8x8xf32>
    %266 = arith.truncf %265 : vector<2x8x8xf32> to vector<2x8x8xbf16>
    %267 = vector.extract_strided_slice %199 {offsets = [0, 24], sizes = [16, 8], strides = [1, 1]} : vector<16x32xf32> to vector<16x8xf32>
    %268 = vector.shape_cast %267 : vector<16x8xf32> to vector<2x8x8xf32>
    %269 = arith.truncf %268 : vector<2x8x8xf32> to vector<2x8x8xbf16>
    %270 = vector.extract_strided_slice %200 {offsets = [0, 24], sizes = [16, 8], strides = [1, 1]} : vector<16x32xf32> to vector<16x8xf32>
    %271 = vector.shape_cast %270 : vector<16x8xf32> to vector<2x8x8xf32>
    %272 = arith.truncf %271 : vector<2x8x8xf32> to vector<2x8x8xbf16>
    "tpu.trace_start"() <{level = 10 : i32, message = "btd,bsd->bts"}> : () -> ()
    %cst_71 = arith.constant dense<0.000000e+00> : vector<2x8x8xf32>
    %273 = tpu.matmul %266, %269, %cst_71 {dimension_numbers = #tpu.dot_dimension_numbers<[2], [2], [1], [1], [0, 0, 0, 1, 1, 1], [0], [0]>} : vector<2x8x8xbf16>, vector<2x8x8xbf16>, vector<2x8x8xf32> -> vector<2x8x8xf32>
    "tpu.trace_stop"() : () -> ()
    %274 = vector.broadcast %1 : vector<2x1x8xf32> to vector<2x8x8xf32>
    %275 = arith.addf %273, %274 : vector<2x8x8xf32>
    %276 = math.exp %275 : vector<2x8x8xf32>
    %cst_72 = arith.constant dense<0.000000e+00> : vector<2x8xf32>
    %277 = vector.multi_reduction <add>, %276, %cst_72 [2] : vector<2x8x8xf32> to vector<2x8xf32>
    %278 = vector.shape_cast %277 : vector<2x8xf32> to vector<2x8x1xf32>
    %279 = tpu.reciprocal %278 {approx = true} : vector<2x8x1xf32> -> vector<2x8x1xf32>
    %280 = vector.broadcast %279 : vector<2x8x1xf32> to vector<2x8x8xf32>
    %281 = arith.mulf %276, %280 : vector<2x8x8xf32>
    %282 = arith.truncf %281 : vector<2x8x8xf32> to vector<2x8x8xbf16>
    "tpu.trace_start"() <{level = 10 : i32, message = "bts,bsd->btd"}> : () -> ()
    %cst_73 = arith.constant dense<0.000000e+00> : vector<2x8x8xf32>
    %283 = tpu.matmul %282, %272, %cst_73 {dimension_numbers = #tpu.dot_dimension_numbers<[2], [1], [1], [2], [0, 0, 0, 1, 1, 2], [0], [0]>} : vector<2x8x8xbf16>, vector<2x8x8xbf16>, vector<2x8x8xf32> -> vector<2x8x8xf32>
    "tpu.trace_stop"() : () -> ()
    %284 = vector.shape_cast %283 : vector<2x8x8xf32> to vector<16x8xf32>
    %285 = tpu.concatenate %221, %242, %263, %284 in 1 : vector<16x8xf32>, vector<16x8xf32>, vector<16x8xf32>, vector<16x8xf32> -> vector<16x32xf32>
    %286 = arith.truncf %285 : vector<16x32xf32> to vector<16x32xbf16>
    %cst_74 = arith.constant dense<0.000000e+00> : vector<16x32xf32>
    %287 = tpu.matmul %286, %177, %cst_74 {dimension_numbers = #tpu.dot_dimension_numbers<[1], [0], [0], [1], [0, 0, 1, 1], [], []>} : vector<16x32xbf16>, vector<32x32xbf16>, vector<16x32xf32> -> vector<16x32xf32>
    %288 = vector.broadcast %185 : vector<1x32xf32> to vector<16x32xf32>
    %289 = arith.addf %287, %288 : vector<16x32xf32>
    %290 = arith.addf %173, %289 : vector<16x32xf32>
    %cst_75 = arith.constant dense<0.000000e+00> : vector<16xf32>
    %291 = vector.multi_reduction <add>, %290, %cst_75 [1] : vector<16x32xf32> to vector<16xf32>
    %292 = vector.shape_cast %291 : vector<16xf32> to vector<16x1xf32>
    %cst_76 = arith.constant 3.200000e+01 : f32
    %293 = vector.broadcast %cst_76 : f32 to vector<16x1xf32>
    %294 = arith.divf %292, %293 : vector<16x1xf32>
    %295 = vector.broadcast %294 : vector<16x1xf32> to vector<16x32xf32>
    %296 = arith.subf %290, %295 : vector<16x32xf32>
    %297 = arith.mulf %296, %296 : vector<16x32xf32>
    %cst_77 = arith.constant dense<0.000000e+00> : vector<16xf32>
    %298 = vector.multi_reduction <add>, %297, %cst_77 [1] : vector<16x32xf32> to vector<16xf32>
    %299 = vector.shape_cast %298 : vector<16xf32> to vector<16x1xf32>
    %cst_78 = arith.constant 3.200000e+01 : f32
    %300 = vector.broadcast %cst_78 : f32 to vector<16x1xf32>
    %301 = arith.divf %299, %300 : vector<16x1xf32>
    %302 = vector.broadcast %294 : vector<16x1xf32> to vector<16x32xf32>
    %303 = arith.subf %290, %302 : vector<16x32xf32>
    %cst_79 = arith.constant 9.99999974E-6 : f32
    %304 = vector.broadcast %cst_79 : f32 to vector<16x1xf32>
    %305 = arith.addf %301, %304 : vector<16x1xf32>
    %306 = math.rsqrt %305 : vector<16x1xf32>
    %307 = vector.broadcast %306 : vector<16x1xf32> to vector<16x32xf32>
    %308 = arith.mulf %303, %307 : vector<16x32xf32>
    %309 = vector.broadcast %186 : vector<1x32xf32> to vector<16x32xf32>
    %310 = arith.mulf %308, %309 : vector<16x32xf32>
    %311 = vector.broadcast %187 : vector<1x32xf32> to vector<16x32xf32>
    %312 = arith.addf %310, %311 : vector<16x32xf32>
    %313 = arith.truncf %312 : vector<16x32xf32> to vector<16x32xbf16>
    %cst_80 = arith.constant dense<0.000000e+00> : vector<16x64xf32>
    %314 = tpu.matmul %313, %179, %cst_80 {dimension_numbers = #tpu.dot_dimension_numbers<[1], [0], [0], [1], [0, 0, 1, 1], [], []>} : vector<16x32xbf16>, vector<32x64xbf16>, vector<16x64xf32> -> vector<16x64xf32>
    %315 = vector.broadcast %188 : vector<1x64xf32> to vector<16x64xf32>
    %316 = arith.addf %314, %315 : vector<16x64xf32>
    %cst_81 = arith.constant 0.000000e+00 : f32
    %317 = vector.broadcast %cst_81 : f32 to vector<16x64xf32>
    %318 = arith.maximumf %316, %317 : vector<16x64xf32>
    %319 = arith.truncf %318 : vector<16x64xf32> to vector<16x64xbf16>
    %cst_82 = arith.constant dense<0.000000e+00> : vector<16x32xf32>
    %320 = tpu.matmul %319, %181, %cst_82 {dimension_numbers = #tpu.dot_dimension_numbers<[1], [0], [0], [1], [0, 0, 1, 1], [], []>} : vector<16x64xbf16>, vector<64x32xbf16>, vector<16x32xf32> -> vector<16x32xf32>
    %321 = vector.broadcast %189 : vector<1x32xf32> to vector<16x32xf32>
    %322 = arith.addf %320, %321 : vector<16x32xf32>
    %323 = arith.addf %312, %322 : vector<16x32xf32>
    %cst_83 = arith.constant dense<0.000000e+00> : vector<16xf32>
    %324 = vector.multi_reduction <add>, %323, %cst_83 [1] : vector<16x32xf32> to vector<16xf32>
    %325 = vector.shape_cast %324 : vector<16xf32> to vector<16x1xf32>
    %cst_84 = arith.constant 3.200000e+01 : f32
    %326 = vector.broadcast %cst_84 : f32 to vector<16x1xf32>
    %327 = arith.divf %325, %326 : vector<16x1xf32>
    %328 = vector.broadcast %327 : vector<16x1xf32> to vector<16x32xf32>
    %329 = arith.subf %323, %328 : vector<16x32xf32>
    %330 = arith.mulf %329, %329 : vector<16x32xf32>
    %cst_85 = arith.constant dense<0.000000e+00> : vector<16xf32>
    %331 = vector.multi_reduction <add>, %330, %cst_85 [1] : vector<16x32xf32> to vector<16xf32>
    %332 = vector.shape_cast %331 : vector<16xf32> to vector<16x1xf32>
    %cst_86 = arith.constant 3.200000e+01 : f32
    %333 = vector.broadcast %cst_86 : f32 to vector<16x1xf32>
    %334 = arith.divf %332, %333 : vector<16x1xf32>
    %335 = vector.broadcast %327 : vector<16x1xf32> to vector<16x32xf32>
    %336 = arith.subf %323, %335 : vector<16x32xf32>
    %cst_87 = arith.constant 9.99999974E-6 : f32
    %337 = vector.broadcast %cst_87 : f32 to vector<16x1xf32>
    %338 = arith.addf %334, %337 : vector<16x1xf32>
    %339 = math.rsqrt %338 : vector<16x1xf32>
    %340 = vector.broadcast %339 : vector<16x1xf32> to vector<16x32xf32>
    %341 = arith.mulf %336, %340 : vector<16x32xf32>
    %342 = vector.broadcast %190 : vector<1x32xf32> to vector<16x32xf32>
    %343 = arith.mulf %341, %342 : vector<16x32xf32>
    %344 = vector.broadcast %191 : vector<1x32xf32> to vector<16x32xf32>
    %345 = arith.addf %343, %344 : vector<16x32xf32>
    %346 = vector.extract_strided_slice %345 {offsets = [0, 0], sizes = [8, 32], strides = [1, 1]} : vector<16x32xf32> to vector<8x32xf32>
    %c0_88 = arith.constant 0 : index
    %c0_89 = arith.constant 0 : index
    %347 = vector.load %arg7[%c0_88, %c0_89] : memref<8x64xf32, #tpu.memory_space<vmem>>, vector<8x32xf32>
    tpu.vector_store %arg7[%c0_88, %c0_89], %346 {strides = array<i32>} : memref<8x64xf32, #tpu.memory_space<vmem>>, vector<8x32xf32>,
    %348 = vector.extract_strided_slice %345 {offsets = [8, 0], sizes = [8, 32], strides = [1, 1]} : vector<16x32xf32> to vector<8x32xf32>
    %c0_90 = arith.constant 0 : index
    %c32 = arith.constant 32 : index
    %349 = vector.load %arg7[%c0_90, %c32] : memref<8x64xf32, #tpu.memory_space<vmem>>, vector<8x32xf32>
    tpu.vector_store %arg7[%c0_90, %c32], %348 {strides = array<i32>} : memref<8x64xf32, #tpu.memory_space<vmem>>, vector<8x32xf32>,
    return
  }
}

</mosaic_0001>

<llo_original>
// kernel: tpu_custom_call.1
$region0: #{tpu_custom_call.1}
  #allocation0 [shape = 'u32[]', space=smem, size = 0x4, offset = 0x4, fixed_abs, tag = 'smem constant byte address 0x4 - core index']
  #allocation1 [shape = 'u32[144,128]{1,0:T(1,128)}', space=vmem, size = 0x12000, scoped, tag = 'internal scratch']
  %s0 = inlined_call_operand.hbm [shape: f32[16,32], index: 0, kind: input, shape index: {}]
  %s1 = inlined_call_operand.vmem [shape: f32[2,1,8], index: 1, kind: input, shape index: {}]
  %s2 = inlined_call_operand.vmem [shape: bf16[2,32,96], index: 2, kind: input, shape index: {}]
  %s3 = inlined_call_operand.vmem [shape: bf16[2,32,32], index: 3, kind: input, shape index: {}]
  %s4 = inlined_call_operand.vmem [shape: bf16[2,32,64], index: 4, kind: input, shape index: {}]
  %s5 = inlined_call_operand.vmem [shape: bf16[2,64,32], index: 5, kind: input, shape index: {}]
  %s6 = inlined_call_operand.vmem [shape: f32[2,8,128], index: 6, kind: input, shape index: {}]
  %s7 = inlined_call_operand.hbm [shape: f32[8,64], index: 7, kind: output, shape index: {}]
  %s8 = sld [smem:[#allocation0]]
  $region42: #{tpu_custom_call.1} parent=0
    _
  %s10 = ssub.s32 1, %s8
  %s11 = scalar_select 0, %s10, %s8
  $region1: #{tpu_custom_call.1} parent=0
    #allocation2 [shape = 'u8[8192]{0}', space=vmem, size = 0x2000, scoped, tag = 'input window, operand 0, single buffered']
    #allocation3 [shape = 's32[1]{0}', space=sflag, size = 0x4, scoped, tag = 'scoped memory for tpu_custom_call.1']
    #allocation4 [shape = 's32[1]{0}', space=sflag, size = 0x4, scoped, tag = 'scoped memory for tpu_custom_call.1']
    #allocation5 [shape = 'u8[4096]{0}', space=vmem, size = 0x1000, scoped, tag = 'output window, operand 0, single buffered']
    %12 = vsyncpa [#allocation3], 0
    %13 = vsyncpa [#allocation4], 0
    // Predicated region
    $region2: #{tpu_custom_call.1} parent=1 // pred_check
      _
    $region3: #{tpu_custom_call.1} parent=1 // pred_check_branch
      %15 = sbr.rel (0) target = $region5
    $region4: #{tpu_custom_call.1} parent=1 // pred_region
      %s17 = ssub.s32 256, 256
      %18 = vsyncadd [#allocation3], %s17
      %s19 = sshll.u32 [#allocation2], 4
      %s20 = int_to_ptr.vmem [resolvable:$true] %s19
      %25 = dma.hbm_to_vmem [thread:$0]  %s0, 256, %s20, [#allocation3], 128, 128, 8
    $region5: #{tpu_custom_call.1} parent=1 // pred_fallthru
      _
    // Predicated region
    $region6: #{tpu_custom_call.1} parent=1 // pred_check
      _
    $region7: #{tpu_custom_call.1} parent=1 // pred_check_branch
      %27 = sbr.rel (0) target = $region9
    $region8: #{tpu_custom_call.1} parent=1 // pred_region
      _
    $region9: #{tpu_custom_call.1} parent=1 // pred_fallthru
      _
    // Predicated region
    $region10: #{tpu_custom_call.1} parent=1 // pred_check
      _
    $region11: #{tpu_custom_call.1} parent=1 // pred_check_branch
      %29 = sbr.rel (0) target = $region13
    $region12: #{tpu_custom_call.1} parent=1 // pred_region
      _
    $region13: #{tpu_custom_call.1} parent=1 // pred_fallthru
      _
    // Predicated region
    $region14: #{tpu_custom_call.1} parent=1 // pred_check
      _
    $region15: #{tpu_custom_call.1} parent=1 // pred_check_branch
      %31 = sbr.rel (0) target = $region17
    $region16: #{tpu_custom_call.1} parent=1 // pred_region
      _
    $region17: #{tpu_custom_call.1} parent=1 // pred_fallthru
      _
    // Predicated region
    $region18: #{tpu_custom_call.1} parent=1 // pred_check
      _
    $region19: #{tpu_custom_call.1} parent=1 // pred_check_branch
      %33 = sbr.rel (0) target = $region21
    $region20: #{tpu_custom_call.1} parent=1 // pred_region
      _
    $region21: #{tpu_custom_call.1} parent=1 // pred_fallthru
      _
    // Predicated region
    $region22: #{tpu_custom_call.1} parent=1 // pred_check
      _
    $region23: #{tpu_custom_call.1} parent=1 // pred_check_branch
      %35 = sbr.rel (0) target = $region25
    $region24: #{tpu_custom_call.1} parent=1 // pred_region
      _
    $region25: #{tpu_custom_call.1} parent=1 // pred_fallthru
      _
    // Predicated region
    $region26: #{tpu_custom_call.1} parent=1 // pred_check
      _
    $region27: #{tpu_custom_call.1} parent=1 // pred_check_branch
      %37 = sbr.rel (0) target = $region29
    $region28: #{tpu_custom_call.1} parent=1 // pred_region
      _
    $region29: #{tpu_custom_call.1} parent=1 // pred_fallthru
      _
    // Predicated region
    $region30: #{tpu_custom_call.1} parent=1 // pred_check
      _
    $region31: #{tpu_custom_call.1} parent=1 // pred_check_branch
      %39 = sbr.rel (0) target = $region33
    $region32: #{tpu_custom_call.1} parent=1 // pred_region
      %40 = dma.done [#allocation3], 256
    $region33: #{tpu_custom_call.1} parent=1 // pred_fallthru
      _
    %v42 = vld [vmem:[#allocation2] sm:$0xff]
    %v43 = vld [vmem:[#allocation2 + $0x8] sm:$0xff]
    %v44 = vld [vmem:[%s1] sm:$0x1]
    %v45 = vld [vmem:[%s1 + $0x1] sm:$0x1]
    %v46 = vld [vmem:[%s2] sm:$0xf]
    %v47 = vld [vmem:[%s2 + $0x4] sm:$0xf]
    %v48 = vld [vmem:[%s2 + $0x8] sm:$0xf]
    %v49 = vld [vmem:[%s2 + $0xc] sm:$0xf]
    %v50 = vld [vmem:[%s3] sm:$0xf]
    %v51 = vld [vmem:[%s3 + $0x4] sm:$0xf]
    %v52 = vld [vmem:[%s3 + $0x8] sm:$0xf]
    %v53 = vld [vmem:[%s3 + $0xc] sm:$0xf]
    %v54 = vld [vmem:[%s4] sm:$0xf]
    %v55 = vld [vmem:[%s4 + $0x4] sm:$0xf]
    %v56 = vld [vmem:[%s4 + $0x8] sm:$0xf]
    %v57 = vld [vmem:[%s4 + $0xc] sm:$0xf]
    %v58 = vld [vmem:[%s5] sm:$0xf]
    %v59 = vld [vmem:[%s5 + $0x4] sm:$0xf]
    %v60 = vld [vmem:[%s5 + $0x8] sm:$0xf]
    %v61 = vld [vmem:[%s5 + $0xc] sm:$0xf]
    %v62 = vld [vmem:[%s5 + $0x10] sm:$0xf]
    %v63 = vld [vmem:[%s5 + $0x14] sm:$0xf]
    %v64 = vld [vmem:[%s5 + $0x18] sm:$0xf]
    %v65 = vld [vmem:[%s5 + $0x1c] sm:$0xf]
    %v66 = vld [vmem:[%s6] sm:$0xff]
    %v67 = vpack.c.bf16 %v43, %v42
    %v68 = vlaneseq
    %v69 = vshrl.u32 %v68, 7
    %v70 = vsub.s32 0, %v69
    %v71 = vrot.slane %v66, %v70
    %v76 = vunpack.c.l.b16 %v46
    %v77 = vunpack.c.l.b16 %v47
    %v78 = vunpack.c.l.b16 %v48
    %v79 = vunpack.c.l.b16 %v49
    %v80 = vpack.c.b16 %v77, %v76
    %v81 = vpack.c.b16 %v79, %v78
    %vm84 = vcmask 261120
    %v86 = vsel %vm84, %v67, 0
    %88 = vmatprep.subr.bf16.mxu0 0
    %89 = vmatpush1.bf16.msra.mxu0 %v80
    %90 = vmatprep.subr.bf16.mxu0 0
    %91 = vmatpush1.bf16.msra.mxu0 %v81
    %92 = vmatprep.subr.bf16.mxu0 0
    %93 = vmatpush1.bf16.msra.mxu0 0
    %94 = vmatprep.subr.bf16.mxu0 0
    %95 = vmatpush1.bf16.msra.mxu0 0
    %96 = vmatprep.subr.bf16.mxu0 0
    %97 = vmatpush1.bf16.msra.mxu0 0
    %98 = vmatprep.subr.bf16.mxu0 0
    %99 = vmatpush1.bf16.msra.mxu0 0
    %100 = vmatprep.subr.bf16.mxu0 0
    %101 = vmatpush1.bf16.msra.mxu0 0
    %102 = vmatprep.subr.bf16.mxu0 0
    %103 = vmatpush1.bf16.msra.mxu0 0
    %104 = vmatprep.subr.bf16.mxu0 0
    %105 = vmatpush1.bf16.msra.mxu0 0
    %106 = vmatprep.subr.bf16.mxu0 0
    %107 = vmatpush1.bf16.msra.mxu0 0
    %108 = vmatprep.subr.bf16.mxu0 0
    %109 = vmatpush1.bf16.msra.mxu0 0
    %110 = vmatprep.subr.bf16.mxu0 0
    %111 = vmatpush1.bf16.msra.mxu0 0
    %112 = vmatprep.subr.bf16.mxu0 0
    %113 = vmatpush1.bf16.msra.mxu0 0
    %114 = vmatprep.subr.bf16.mxu0 0
    %115 = vmatpush1.bf16.msra.mxu0 0
    %116 = vmatprep.subr.bf16.mxu0 0
    %117 = vmatpush1.bf16.msra.mxu0 0
    %118 = vmatprep.subr.bf16.mxu0 0
    %119 = vmatpush1.bf16.msra.mxu0 0
    %120 = vmatprep.mubr.bf16.mxu0 0
    %121 = vmatmul.mubr.bf16.gmra.mrb[0].mxu0 %v86
    %v122 = vpop.f32.mrb[0].mxu0
    %v123 = vadd.f32 %v71, %v122
    %v124 = vpop.f32.mrb[0].mxu0
    %v125 = vpop.f32.mrb[0].mxu0
    %v126 = vadd.f32 %v71, %v125
    %v127 = vpop.f32.mrb[0].mxu0
    %128 = vdwg.mxu0
    %v129 = vmul.f32 %v123, 0.35355338
    %v130 = vmul.f32 %v126, 0.35355338
    %v131 = vpack.c.bf16 %v129, %v129
    %v132 = vpack.c.bf16 %v130, %v130
    %v133 = vpack.c.bf16 %v123, %v123
    %v134 = vpack.c.bf16 %v126, %v126
    %v137 = vlaneseq
    %v138 = vshrl.u32 %v137, 7
    %v139 = vsub.s32 0, %v138
    %v140 = vrot.slane %v44, %v139
    %v141 = vlaneseq
    %v142 = vshrl.u32 %v141, 7
    %v143 = vsub.s32 0, %v142
    %v144 = vrot.slane %v45, %v143
    %148 = vrot.lane.b32.xlu0 %v133, 96
    %v149 = vpop.permute.xlu0 %148
    %vm150 = vcmask 64512
    %v152 = vsel %vm150, %v131, 0
    %v155 = vsel %vm150, %v149, 0
    %157 = vmatprep.subr.bf16.mxu0 0
    %158 = vmatpush1.bf16.xpose.msra.mxu0 %v155
    %159 = vmatprep.subr.bf16.mxu0 0
    %160 = vmatpush1.bf16.xpose.msra.mxu0 0
    %161 = vmatprep.subr.bf16.mxu0 0
    %162 = vmatpush1.bf16.xpose.msra.mxu0 0
    %163 = vmatprep.subr.bf16.mxu0 0
    %164 = vmatpush1.bf16.xpose.msra.mxu0 0
    %165 = vmatprep.subr.bf16.mxu0 0
    %166 = vmatpush1.bf16.xpose.msra.mxu0 0
    %167 = vmatprep.subr.bf16.mxu0 0
    %168 = vmatpush1.bf16.xpose.msra.mxu0 0
    %169 = vmatprep.subr.bf16.mxu0 0
    %170 = vmatpush1.bf16.xpose.msra.mxu0 0
    %171 = vmatprep.subr.bf16.mxu0 0
    %172 = vmatpush1.bf16.xpose.msra.mxu0 0
    %173 = vmatprep.subr.bf16.mxu0 0
    %174 = vmatpush1.bf16.xpose.msra.mxu0 0
    %175 = vmatprep.subr.bf16.mxu0 0
    %176 = vmatpush1.bf16.xpose.msra.mxu0 0
    %177 = vmatprep.subr.bf16.mxu0 0
    %178 = vmatpush1.bf16.xpose.msra.mxu0 0
    %179 = vmatprep.subr.bf16.mxu0 0
    %180 = vmatpush1.bf16.xpose.msra.mxu0 0
    %181 = vmatprep.subr.bf16.mxu0 0
    %182 = vmatpush1.bf16.xpose.msra.mxu0 0
    %183 = vmatprep.subr.bf16.mxu0 0
    %184 = vmatpush1.bf16.xpose.msra.mxu0 0
    %185 = vmatprep.subr.bf16.mxu0 0
    %186 = vmatpush1.bf16.xpose.msra.mxu0 0
    %187 = vmatprep.subr.bf16.mxu0 0
    %188 = vmatpush1.bf16.xpose.msra.mxu0 0
    %189 = vmatprep.mubr.bf16.mxu0 0
    %190 = vmatmul.mubr.bf16.gmra.mrb[0].mxu0 %v152
    %v191 = vpop.f32.mrb[0].mxu0
    %v192 = vadd.f32 %v140, %v191
    %v193 = vpop.f32.mrb[0].mxu0
    %v194 = vpop.f32.mrb[0].mxu0
    %v195 = vpop.f32.mrb[0].mxu0
    %196 = vdwg.mxu0
    %198 = vrot.lane.b32.xlu0 %v134, 96
    %v199 = vpop.permute.xlu0 %198
    %v201 = vsel %vm150, %v132, 0
    %v204 = vsel %vm150, %v199, 0
    %206 = vmatprep.subr.bf16.mxu0 0
    %207 = vmatpush1.bf16.xpose.msra.mxu0 %v204
    %208 = vmatprep.subr.bf16.mxu0 0
    %209 = vmatpush1.bf16.xpose.msra.mxu0 0
    %210 = vmatprep.subr.bf16.mxu0 0
    %211 = vmatpush1.bf16.xpose.msra.mxu0 0
    %212 = vmatprep.subr.bf16.mxu0 0
    %213 = vmatpush1.bf16.xpose.msra.mxu0 0
    %214 = vmatprep.subr.bf16.mxu0 0
    %215 = vmatpush1.bf16.xpose.msra.mxu0 0
    %216 = vmatprep.subr.bf16.mxu0 0
    %217 = vmatpush1.bf16.xpose.msra.mxu0 0
    %218 = vmatprep.subr.bf16.mxu0 0
    %219 = vmatpush1.bf16.xpose.msra.mxu0 0
    %220 = vmatprep.subr.bf16.mxu0 0
    %221 = vmatpush1.bf16.xpose.msra.mxu0 0
    %222 = vmatprep.subr.bf16.mxu0 0
    %223 = vmatpush1.bf16.xpose.msra.mxu0 0
    %224 = vmatprep.subr.bf16.mxu0 0
    %225 = vmatpush1.bf16.xpose.msra.mxu0 0
    %226 = vmatprep.subr.bf16.mxu0 0
    %227 = vmatpush1.bf16.xpose.msra.mxu0 0
    %228 = vmatprep.subr.bf16.mxu0 0
    %229 = vmatpush1.bf16.xpose.msra.mxu0 0
    %230 = vmatprep.subr.bf16.mxu0 0
    %231 = vmatpush1.bf16.xpose.msra.mxu0 0
    %232 = vmatprep.subr.bf16.mxu0 0
    %233 = vmatpush1.bf16.xpose.msra.mxu0 0
    %234 = vmatprep.subr.bf16.mxu0 0
    %235 = vmatpush1.bf16.xpose.msra.mxu0 0
    %236 = vmatprep.subr.bf16.mxu0 0
    %237 = vmatpush1.bf16.xpose.msra.mxu0 0
    %238 = vmatprep.mubr.bf16.mxu0 0
    %239 = vmatmul.mubr.bf16.gmra.mrb[0].mxu0 %v201
    %v240 = vpop.f32.mrb[0].mxu0
    %v241 = vadd.f32 %v144, %v240
    %v242 = vpop.f32.mrb[0].mxu0
    %v243 = vpop.f32.mrb[0].mxu0
    %v244 = vpop.f32.mrb[0].mxu0
    %245 = vdwg.mxu0
    %v246 = vmul.f32 %v192, 1.442695
    %v247 = vpow.pop %v246
    %v248 = vmul.f32 %v241, 1.442695
    %v249 = vpow.pop %v248
    %v250 = vsel %vm150, %v247, 0.0
    %251 = vadd.xlane.f32.xlu0 %v250
    %v252 = vpop.xlane.xlu0 %251
    %v253 = vsel %vm150, %v249, 0.0
    %254 = vadd.xlane.f32.xlu0 %v253
    %v255 = vpop.xlane.xlu0 %254
    %v256 = vrcp.pop %v252
    %v257 = vrcp.pop %v255
    %v258 = vmul.f32 %v247, %v256
    %v259 = vmul.f32 %v249, %v257
    %v260 = vpack.c.bf16 %v258, %v258
    %v261 = vpack.c.bf16 %v259, %v259
    %262 = vrot.lane.b32.xlu0 %v133, 64
    %v263 = vpop.permute.xlu0 %262
    %v265 = vsel %vm150, %v260, 0
    %vm267 = vcmask 1043456
    %v269 = vsel %vm267, %v263, 0
    %271 = vmatprep.subr.bf16.mxu0 0
    %272 = vmatpush1.bf16.msra.mxu0 %v269
    %273 = vmatprep.subr.bf16.mxu0 0
    %274 = vmatpush1.bf16.msra.mxu0 0
    %275 = vmatprep.subr.bf16.mxu0 0
    %276 = vmatpush1.bf16.msra.mxu0 0
    %277 = vmatprep.subr.bf16.mxu0 0
    %278 = vmatpush1.bf16.msra.mxu0 0
    %279 = vmatprep.subr.bf16.mxu0 0
    %280 = vmatpush1.bf16.msra.mxu0 0
    %281 = vmatprep.subr.bf16.mxu0 0
    %282 = vmatpush1.bf16.msra.mxu0 0
    %283 = vmatprep.subr.bf16.mxu0 0
    %284 = vmatpush1.bf16.msra.mxu0 0
    %285 = vmatprep.subr.bf16.mxu0 0
    %286 = vmatpush1.bf16.msra.mxu0 0
    %287 = vmatprep.subr.bf16.mxu0 0
    %288 = vmatpush1.bf16.msra.mxu0 0
    %289 = vmatprep.subr.bf16.mxu0 0
    %290 = vmatpush1.bf16.msra.mxu0 0
    %291 = vmatprep.subr.bf16.mxu0 0
    %292 = vmatpush1.bf16.msra.mxu0 0
    %293 = vmatprep.subr.bf16.mxu0 0
    %294 = vmatpush1.bf16.msra.mxu0 0
    %295 = vmatprep.subr.bf16.mxu0 0
    %296 = vmatpush1.bf16.msra.mxu0 0
    %297 = vmatprep.subr.bf16.mxu0 0
    %298 = vmatpush1.bf16.msra.mxu0 0
    %299 = vmatprep.subr.bf16.mxu0 0
    %300 = vmatpush1.bf16.msra.mxu0 0
    %301 = vmatprep.subr.bf16.mxu0 0
    %302 = vmatpush1.bf16.msra.mxu0 0
    %303 = vmatprep.mubr.bf16.mxu0 0
    %304 = vmatmul.mubr.bf16.gmra.mrb[0].mxu0 %v265
    %v305 = vpop.f32.mrb[0].mxu0
    %v306 = vadd.f32 0.0, %v305
    %v307 = vpop.f32.mrb[0].mxu0
    %v308 = vpop.f32.mrb[0].mxu0
    %v309 = vpop.f32.mrb[0].mxu0
    %310 = vdwg.mxu0
    %311 = vrot.lane.b32.xlu0 %v134, 64
    %v312 = vpop.permute.xlu0 %311
    %v314 = vsel %vm150, %v261, 0
    %v317 = vsel %vm267, %v312, 0
    %319 = vmatprep.subr.bf16.mxu0 0
    %320 = vmatpush1.bf16.msra.mxu0 %v317
    %321 = vmatprep.subr.bf16.mxu0 0
    %322 = vmatpush1.bf16.msra.mxu0 0
    %323 = vmatprep.subr.bf16.mxu0 0
    %324 = vmatpush1.bf16.msra.mxu0 0
    %325 = vmatprep.subr.bf16.mxu0 0
    %326 = vmatpush1.bf16.msra.mxu0 0
    %327 = vmatprep.subr.bf16.mxu0 0
    %328 = vmatpush1.bf16.msra.mxu0 0
    %329 = vmatprep.subr.bf16.mxu0 0
    %330 = vmatpush1.bf16.msra.mxu0 0
    %331 = vmatprep.subr.bf16.mxu0 0
    %332 = vmatpush1.bf16.msra.mxu0 0
    %333 = vmatprep.subr.bf16.mxu0 0
    %334 = vmatpush1.bf16.msra.mxu0 0
    %335 = vmatprep.subr.bf16.mxu0 0
    %336 = vmatpush1.bf16.msra.mxu0 0
    %337 = vmatprep.subr.bf16.mxu0 0
    %338 = vmatpush1.bf16.msra.mxu0 0
    %339 = vmatprep.subr.bf16.mxu0 0
    %340 = vmatpush1.bf16.msra.mxu0 0
    %341 = vmatprep.subr.bf16.mxu0 0
    %342 = vmatpush1.bf16.msra.mxu0 0
    %343 = vmatprep.subr.bf16.mxu0 0
    %344 = vmatpush1.bf16.msra.mxu0 0
    %345 = vmatprep.subr.bf16.mxu0 0
    %346 = vmatpush1.bf16.msra.mxu0 0
    %347 = vmatprep.subr.bf16.mxu0 0
    %348 = vmatpush1.bf16.msra.mxu0 0
    %349 = vmatprep.subr.bf16.mxu0 0
    %350 = vmatpush1.bf16.msra.mxu0 0
    %351 = vmatprep.mubr.bf16.mxu0 0
    %352 = vmatmul.mubr.bf16.gmra.mrb[0].mxu0 %v314
    %v353 = vpop.f32.mrb[0].mxu0
    %v354 = vadd.f32 0.0, %v353
    %v355 = vpop.f32.mrb[0].mxu0
    %v356 = vpop.f32.mrb[0].mxu0
    %v357 = vpop.f32.mrb[0].mxu0
    %358 = vdwg.mxu0
    %360 = vrot.lane.b32.xlu0 %v131, 120
    %v361 = vpop.permute.xlu0 %360
    %362 = vrot.lane.b32.xlu0 %v133, 88
    %v363 = vpop.permute.xlu0 %362
    %v365 = vsel %vm150, %v361, 0
    %v368 = vsel %vm150, %v363, 0
    %370 = vmatprep.subr.bf16.mxu0 0
    %371 = vmatpush1.bf16.xpose.msra.mxu0 %v368
    %372 = vmatprep.subr.bf16.mxu0 0
    %373 = vmatpush1.bf16.xpose.msra.mxu0 0
    %374 = vmatprep.subr.bf16.mxu0 0
    %375 = vmatpush1.bf16.xpose.msra.mxu0 0
    %376 = vmatprep.subr.bf16.mxu0 0
    %377 = vmatpush1.bf16.xpose.msra.mxu0 0
    %378 = vmatprep.subr.bf16.mxu0 0
    %379 = vmatpush1.bf16.xpose.msra.mxu0 0
    %380 = vmatprep.subr.bf16.mxu0 0
    %381 = vmatpush1.bf16.xpose.msra.mxu0 0
    %382 = vmatprep.subr.bf16.mxu0 0
    %383 = vmatpush1.bf16.xpose.msra.mxu0 0
    %384 = vmatprep.subr.bf16.mxu0 0
    %385 = vmatpush1.bf16.xpose.msra.mxu0 0
    %386 = vmatprep.subr.bf16.mxu0 0
    %387 = vmatpush1.bf16.xpose.msra.mxu0 0
    %388 = vmatprep.subr.bf16.mxu0 0
    %389 = vmatpush1.bf16.xpose.msra.mxu0 0
    %390 = vmatprep.subr.bf16.mxu0 0
    %391 = vmatpush1.bf16.xpose.msra.mxu0 0
    %392 = vmatprep.subr.bf16.mxu0 0
    %393 = vmatpush1.bf16.xpose.msra.mxu0 0
    %394 = vmatprep.subr.bf16.mxu0 0
    %395 = vmatpush1.bf16.xpose.msra.mxu0 0
    %396 = vmatprep.subr.bf16.mxu0 0
    %397 = vmatpush1.bf16.xpose.msra.mxu0 0
    %398 = vmatprep.subr.bf16.mxu0 0
    %399 = vmatpush1.bf16.xpose.msra.mxu0 0
    %400 = vmatprep.subr.bf16.mxu0 0
    %401 = vmatpush1.bf16.xpose.msra.mxu0 0
    %402 = vmatprep.mubr.bf16.mxu0 0
    %403 = vmatmul.mubr.bf16.gmra.mrb[0].mxu0 %v365
    %v404 = vpop.f32.mrb[0].mxu0
    %v405 = vadd.f32 %v140, %v404
    %v406 = vpop.f32.mrb[0].mxu0
    %v407 = vpop.f32.mrb[0].mxu0
    %v408 = vpop.f32.mrb[0].mxu0
    %409 = vdwg.mxu0
    %411 = vrot.lane.b32.xlu0 %v132, 120
    %v412 = vpop.permute.xlu0 %411
    %413 = vrot.lane.b32.xlu0 %v134, 88
    %v414 = vpop.permute.xlu0 %413
    %v416 = vsel %vm150, %v412, 0
    %v419 = vsel %vm150, %v414, 0
    %421 = vmatprep.subr.bf16.mxu0 0
    %422 = vmatpush1.bf16.xpose.msra.mxu0 %v419
    %423 = vmatprep.subr.bf16.mxu0 0
    %424 = vmatpush1.bf16.xpose.msra.mxu0 0
    %425 = vmatprep.subr.bf16.mxu0 0
    %426 = vmatpush1.bf16.xpose.msra.mxu0 0
    %427 = vmatprep.subr.bf16.mxu0 0
    %428 = vmatpush1.bf16.xpose.msra.mxu0 0
    %429 = vmatprep.subr.bf16.mxu0 0
    %430 = vmatpush1.bf16.xpose.msra.mxu0 0
    %431 = vmatprep.subr.bf16.mxu0 0
    %432 = vmatpush1.bf16.xpose.msra.mxu0 0
    %433 = vmatprep.subr.bf16.mxu0 0
    %434 = vmatpush1.bf16.xpose.msra.mxu0 0
    %435 = vmatprep.subr.bf16.mxu0 0
    %436 = vmatpush1.bf16.xpose.msra.mxu0 0
    %437 = vmatprep.subr.bf16.mxu0 0
    %438 = vmatpush1.bf16.xpose.msra.mxu0 0
    %439 = vmatprep.subr.bf16.mxu0 0
    %440 = vmatpush1.bf16.xpose.msra.mxu0 0
    %441 = vmatprep.subr.bf16.mxu0 0
    %442 = vmatpush1.bf16.xpose.msra.mxu0 0
    %443 = vmatprep.subr.bf16.mxu0 0
    %444 = vmatpush1.bf16.xpose.msra.mxu0 0
    %445 = vmatprep.subr.bf16.mxu0 0
    %446 = vmatpush1.bf16.xpose.msra.mxu0 0
    %447 = vmatprep.subr.bf16.mxu0 0
    %448 = vmatpush1.bf16.xpose.msra.mxu0 0
    %449 = vmatprep.subr.bf16.mxu0 0
    %450 = vmatpush1.bf16.xpose.msra.mxu0 0
    %451 = vmatprep.subr.bf16.mxu0 0
    %452 = vmatpush1.bf16.xpose.msra.mxu0 0
    %453 = vmatprep.mubr.bf16.mxu0 0
    %454 = vmatmul.mubr.bf16.gmra.mrb[0].mxu0 %v416
    %v455 = vpop.f32.mrb[0].mxu0
    %v456 = vadd.f32 %v144, %v455
    %v457 = vpop.f32.mrb[0].mxu0
    %v458 = vpop.f32.mrb[0].mxu0
    %v459 = vpop.f32.mrb[0].mxu0
    %460 = vdwg.mxu0
    %v461 = vmul.f32 %v405, 1.442695
    %v462 = vpow.pop %v461
    %v463 = vmul.f32 %v456, 1.442695
    %v464 = vpow.pop %v463
    %v465 = vsel %vm150, %v462, 0.0
    %466 = vadd.xlane.f32.xlu0 %v465
    %v467 = vpop.xlane.xlu0 %466
    %v468 = vsel %vm150, %v464, 0.0
    %469 = vadd.xlane.f32.xlu0 %v468
    %v470 = vpop.xlane.xlu0 %469
    %v471 = vrcp.pop %v467
    %v472 = vrcp.pop %v470
    %v473 = vmul.f32 %v462, %v471
    %v474 = vmul.f32 %v464, %v472
    %v475 = vpack.c.bf16 %v473, %v473
    %v476 = vpack.c.bf16 %v474, %v474
    %477 = vrot.lane.b32.xlu0 %v133, 56
    %v478 = vpop.permute.xlu0 %477
    %v480 = vsel %vm150, %v475, 0
    %v483 = vsel %vm267, %v478, 0
    %485 = vmatprep.subr.bf16.mxu0 0
    %486 = vmatpush1.bf16.msra.mxu0 %v483
    %487 = vmatprep.subr.bf16.mxu0 0
    %488 = vmatpush1.bf16.msra.mxu0 0
    %489 = vmatprep.subr.bf16.mxu0 0
    %490 = vmatpush1.bf16.msra.mxu0 0
    %491 = vmatprep.subr.bf16.mxu0 0
    %492 = vmatpush1.bf16.msra.mxu0 0
    %493 = vmatprep.subr.bf16.mxu0 0
    %494 = vmatpush1.bf16.msra.mxu0 0
    %495 = vmatprep.subr.bf16.mxu0 0
    %496 = vmatpush1.bf16.msra.mxu0 0
    %497 = vmatprep.subr.bf16.mxu0 0
    %498 = vmatpush1.bf16.msra.mxu0 0
    %499 = vmatprep.subr.bf16.mxu0 0
    %500 = vmatpush1.bf16.msra.mxu0 0
    %501 = vmatprep.subr.bf16.mxu0 0
    %502 = vmatpush1.bf16.msra.mxu0 0
    %503 = vmatprep.subr.bf16.mxu0 0
    %504 = vmatpush1.bf16.msra.mxu0 0
    %505 = vmatprep.subr.bf16.mxu0 0
    %506 = vmatpush1.bf16.msra.mxu0 0
    %507 = vmatprep.subr.bf16.mxu0 0
    %508 = vmatpush1.bf16.msra.mxu0 0
    %509 = vmatprep.subr.bf16.mxu0 0
    %510 = vmatpush1.bf16.msra.mxu0 0
    %511 = vmatprep.subr.bf16.mxu0 0
    %512 = vmatpush1.bf16.msra.mxu0 0
    %513 = vmatprep.subr.bf16.mxu0 0
    %514 = vmatpush1.bf16.msra.mxu0 0
    %515 = vmatprep.subr.bf16.mxu0 0
    %516 = vmatpush1.bf16.msra.mxu0 0
    %517 = vmatprep.mubr.bf16.mxu0 0
    %518 = vmatmul.mubr.bf16.gmra.mrb[0].mxu0 %v480
    %v519 = vpop.f32.mrb[0].mxu0
    %v520 = vadd.f32 0.0, %v519
    %v521 = vpop.f32.mrb[0].mxu0
    %v522 = vpop.f32.mrb[0].mxu0
    %v523 = vpop.f32.mrb[0].mxu0
    %524 = vdwg.mxu0
    %525 = vrot.lane.b32.xlu0 %v134, 56
    %v526 = vpop.permute.xlu0 %525
    %v528 = vsel %vm150, %v476, 0
    %v531 = vsel %vm267, %v526, 0
    %533 = vmatprep.subr.bf16.mxu0 0
    %534 = vmatpush1.bf16.msra.mxu0 %v531
    %535 = vmatprep.subr.bf16.mxu0 0
    %536 = vmatpush1.bf16.msra.mxu0 0
    %537 = vmatprep.subr.bf16.mxu0 0
    %538 = vmatpush1.bf16.msra.mxu0 0
    %539 = vmatprep.subr.bf16.mxu0 0
    %540 = vmatpush1.bf16.msra.mxu0 0
    %541 = vmatprep.subr.bf16.mxu0 0
    %542 = vmatpush1.bf16.msra.mxu0 0
    %543 = vmatprep.subr.bf16.mxu0 0
    %544 = vmatpush1.bf16.msra.mxu0 0
    %545 = vmatprep.subr.bf16.mxu0 0
    %546 = vmatpush1.bf16.msra.mxu0 0
    %547 = vmatprep.subr.bf16.mxu0 0
    %548 = vmatpush1.bf16.msra.mxu0 0
    %549 = vmatprep.subr.bf16.mxu0 0
    %550 = vmatpush1.bf16.msra.mxu0 0
    %551 = vmatprep.subr.bf16.mxu0 0
    %552 = vmatpush1.bf16.msra.mxu0 0
    %553 = vmatprep.subr.bf16.mxu0 0
    %554 = vmatpush1.bf16.msra.mxu0 0
    %555 = vmatprep.subr.bf16.mxu0 0
    %556 = vmatpush1.bf16.msra.mxu0 0
    %557 = vmatprep.subr.bf16.mxu0 0
    %558 = vmatpush1.bf16.msra.mxu0 0
    %559 = vmatprep.subr.bf16.mxu0 0
    %560 = vmatpush1.bf16.msra.mxu0 0
    %561 = vmatprep.subr.bf16.mxu0 0
    %562 = vmatpush1.bf16.msra.mxu0 0
    %563 = vmatprep.subr.bf16.mxu0 0
    %564 = vmatpush1.bf16.msra.mxu0 0
    %565 = vmatprep.mubr.bf16.mxu0 0
    %566 = vmatmul.mubr.bf16.gmra.mrb[0].mxu0 %v528
    %v567 = vpop.f32.mrb[0].mxu0
    %v568 = vadd.f32 0.0, %v567
    %v569 = vpop.f32.mrb[0].mxu0
    %v570 = vpop.f32.mrb[0].mxu0
    %v571 = vpop.f32.mrb[0].mxu0
    %572 = vdwg.mxu0
    %573 = vrot.lane.b32.xlu0 %v131, 112
    %v574 = vpop.permute.xlu0 %573
    %575 = vrot.lane.b32.xlu0 %v133, 80
    %v576 = vpop.permute.xlu0 %575
    %v578 = vsel %vm150, %v574, 0
    %v581 = vsel %vm150, %v576, 0
    %583 = vmatprep.subr.bf16.mxu0 0
    %584 = vmatpush1.bf16.xpose.msra.mxu0 %v581
    %585 = vmatprep.subr.bf16.mxu0 0
    %586 = vmatpush1.bf16.xpose.msra.mxu0 0
    %587 = vmatprep.subr.bf16.mxu0 0
    %588 = vmatpush1.bf16.xpose.msra.mxu0 0
    %589 = vmatprep.subr.bf16.mxu0 0
    %590 = vmatpush1.bf16.xpose.msra.mxu0 0
    %591 = vmatprep.subr.bf16.mxu0 0
    %592 = vmatpush1.bf16.xpose.msra.mxu0 0
    %593 = vmatprep.subr.bf16.mxu0 0
    %594 = vmatpush1.bf16.xpose.msra.mxu0 0
    %595 = vmatprep.subr.bf16.mxu0 0
    %596 = vmatpush1.bf16.xpose.msra.mxu0 0
    %597 = vmatprep.subr.bf16.mxu0 0
    %598 = vmatpush1.bf16.xpose.msra.mxu0 0
    %599 = vmatprep.subr.bf16.mxu0 0
    %600 = vmatpush1.bf16.xpose.msra.mxu0 0
    %601 = vmatprep.subr.bf16.mxu0 0
    %602 = vmatpush1.bf16.xpose.msra.mxu0 0
    %603 = vmatprep.subr.bf16.mxu0 0
    %604 = vmatpush1.bf16.xpose.msra.mxu0 0
    %605 = vmatprep.subr.bf16.mxu0 0
    %606 = vmatpush1.bf16.xpose.msra.mxu0 0
    %607 = vmatprep.subr.bf16.mxu0 0
    %608 = vmatpush1.bf16.xpose.msra.mxu0 0
    %609 = vmatprep.subr.bf16.mxu0 0
    %610 = vmatpush1.bf16.xpose.msra.mxu0 0
    %611 = vmatprep.subr.bf16.mxu0 0
    %612 = vmatpush1.bf16.xpose.msra.mxu0 0
    %613 = vmatprep.subr.bf16.mxu0 0
    %614 = vmatpush1.bf16.xpose.msra.mxu0 0
    %615 = vmatprep.mubr.bf16.mxu0 0
    %616 = vmatmul.mubr.bf16.gmra.mrb[0].mxu0 %v578
    %v617 = vpop.f32.mrb[0].mxu0
    %v618 = vadd.f32 %v140, %v617
    %v619 = vpop.f32.mrb[0].mxu0
    %v620 = vpop.f32.mrb[0].mxu0
    %v621 = vpop.f32.mrb[0].mxu0
    %622 = vdwg.mxu0
    %623 = vrot.lane.b32.xlu0 %v132, 112
    %v624 = vpop.permute.xlu0 %623
    %625 = vrot.lane.b32.xlu0 %v134, 80
    %v626 = vpop.permute.xlu0 %625
    %v628 = vsel %vm150, %v624, 0
    %v631 = vsel %vm150, %v626, 0
    %633 = vmatprep.subr.bf16.mxu0 0
    %634 = vmatpush1.bf16.xpose.msra.mxu0 %v631
    %635 = vmatprep.subr.bf16.mxu0 0
    %636 = vmatpush1.bf16.xpose.msra.mxu0 0
    %637 = vmatprep.subr.bf16.mxu0 0
    %638 = vmatpush1.bf16.xpose.msra.mxu0 0
    %639 = vmatprep.subr.bf16.mxu0 0
    %640 = vmatpush1.bf16.xpose.msra.mxu0 0
    %641 = vmatprep.subr.bf16.mxu0 0
    %642 = vmatpush1.bf16.xpose.msra.mxu0 0
    %643 = vmatprep.subr.bf16.mxu0 0
    %644 = vmatpush1.bf16.xpose.msra.mxu0 0
    %645 = vmatprep.subr.bf16.mxu0 0
    %646 = vmatpush1.bf16.xpose.msra.mxu0 0
    %647 = vmatprep.subr.bf16.mxu0 0
    %648 = vmatpush1.bf16.xpose.msra.mxu0 0
    %649 = vmatprep.subr.bf16.mxu0 0
    %650 = vmatpush1.bf16.xpose.msra.mxu0 0
    %651 = vmatprep.subr.bf16.mxu0 0
    %652 = vmatpush1.bf16.xpose.msra.mxu0 0
    %653 = vmatprep.subr.bf16.mxu0 0
    %654 = vmatpush1.bf16.xpose.msra.mxu0 0
    %655 = vmatprep.subr.bf16.mxu0 0
    %656 = vmatpush1.bf16.xpose.msra.mxu0 0
    %657 = vmatprep.subr.bf16.mxu0 0
    %658 = vmatpush1.bf16.xpose.msra.mxu0 0
    %659 = vmatprep.subr.bf16.mxu0 0
    %660 = vmatpush1.bf16.xpose.msra.mxu0 0
    %661 = vmatprep.subr.bf16.mxu0 0
    %662 = vmatpush1.bf16.xpose.msra.mxu0 0
    %663 = vmatprep.subr.bf16.mxu0 0
    %664 = vmatpush1.bf16.xpose.msra.mxu0 0
    %665 = vmatprep.mubr.bf16.mxu0 0
    %666 = vmatmul.mubr.bf16.gmra.mrb[0].mxu0 %v628
    %v667 = vpop.f32.mrb[0].mxu0
    %v668 = vadd.f32 %v144, %v667
    %v669 = vpop.f32.mrb[0].mxu0
    %v670 = vpop.f32.mrb[0].mxu0
    %v671 = vpop.f32.mrb[0].mxu0
    %672 = vdwg.mxu0
    %v673 = vmul.f32 %v618, 1.442695
    %v674 = vpow.pop %v673
    %v675 = vmul.f32 %v668, 1.442695
    %v676 = vpow.pop %v675
    %v677 = vsel %vm150, %v674, 0.0
    %678 = vadd.xlane.f32.xlu0 %v677
    %v679 = vpop.xlane.xlu0 %678
    %v680 = vsel %vm150, %v676, 0.0
    %681 = vadd.xlane.f32.xlu0 %v680
    %v682 = vpop.xlane.xlu0 %681
    %v683 = vrcp.pop %v679
    %v684 = vrcp.pop %v682
    %v685 = vmul.f32 %v674, %v683
    %v686 = vmul.f32 %v676, %v684
    %v687 = vpack.c.bf16 %v685, %v685
    %v688 = vpack.c.bf16 %v686, %v686
    %689 = vrot.lane.b32.xlu0 %v133, 48
    %v690 = vpop.permute.xlu0 %689
    %v692 = vsel %vm150, %v687, 0
    %v695 = vsel %vm267, %v690, 0
    %697 = vmatprep.subr.bf16.mxu0 0
    %698 = vmatpush1.bf16.msra.mxu0 %v695
    %699 = vmatprep.subr.bf16.mxu0 0
    %700 = vmatpush1.bf16.msra.mxu0 0
    %701 = vmatprep.subr.bf16.mxu0 0
    %702 = vmatpush1.bf16.msra.mxu0 0
    %703 = vmatprep.subr.bf16.mxu0 0
    %704 = vmatpush1.bf16.msra.mxu0 0
    %705 = vmatprep.subr.bf16.mxu0 0
    %706 = vmatpush1.bf16.msra.mxu0 0
    %707 = vmatprep.subr.bf16.mxu0 0
    %708 = vmatpush1.bf16.msra.mxu0 0
    %709 = vmatprep.subr.bf16.mxu0 0
    %710 = vmatpush1.bf16.msra.mxu0 0
    %711 = vmatprep.subr.bf16.mxu0 0
    %712 = vmatpush1.bf16.msra.mxu0 0
    %713 = vmatprep.subr.bf16.mxu0 0
    %714 = vmatpush1.bf16.msra.mxu0 0
    %715 = vmatprep.subr.bf16.mxu0 0
    %716 = vmatpush1.bf16.msra.mxu0 0
    %717 = vmatprep.subr.bf16.mxu0 0
    %718 = vmatpush1.bf16.msra.mxu0 0
    %719 = vmatprep.subr.bf16.mxu0 0
    %720 = vmatpush1.bf16.msra.mxu0 0
    %721 = vmatprep.subr.bf16.mxu0 0
    %722 = vmatpush1.bf16.msra.mxu0 0
    %723 = vmatprep.subr.bf16.mxu0 0
    %724 = vmatpush1.bf16.msra.mxu0 0
    %725 = vmatprep.subr.bf16.mxu0 0
    %726 = vmatpush1.bf16.msra.mxu0 0
    %727 = vmatprep.subr.bf16.mxu0 0
    %728 = vmatpush1.bf16.msra.mxu0 0
    %729 = vmatprep.mubr.bf16.mxu0 0
    %730 = vmatmul.mubr.bf16.gmra.mrb[0].mxu0 %v692
    %v731 = vpop.f32.mrb[0].mxu0
    %v732 = vadd.f32 0.0, %v731
    %v733 = vpop.f32.mrb[0].mxu0
    %v734 = vpop.f32.mrb[0].mxu0
    %v735 = vpop.f32.mrb[0].mxu0
    %736 = vdwg.mxu0
    %737 = vrot.lane.b32.xlu0 %v134, 48
    %v738 = vpop.permute.xlu0 %737
    %v740 = vsel %vm150, %v688, 0
    %v743 = vsel %vm267, %v738, 0
    %745 = vmatprep.subr.bf16.mxu0 0
    %746 = vmatpush1.bf16.msra.mxu0 %v743
    %747 = vmatprep.subr.bf16.mxu0 0
    %748 = vmatpush1.bf16.msra.mxu0 0
    %749 = vmatprep.subr.bf16.mxu0 0
    %750 = vmatpush1.bf16.msra.mxu0 0
    %751 = vmatprep.subr.bf16.mxu0 0
    %752 = vmatpush1.bf16.msra.mxu0 0
    %753 = vmatprep.subr.bf16.mxu0 0
    %754 = vmatpush1.bf16.msra.mxu0 0
    %755 = vmatprep.subr.bf16.mxu0 0
    %756 = vmatpush1.bf16.msra.mxu0 0
    %757 = vmatprep.subr.bf16.mxu0 0
    %758 = vmatpush1.bf16.msra.mxu0 0
    %759 = vmatprep.subr.bf16.mxu0 0
    %760 = vmatpush1.bf16.msra.mxu0 0
    %761 = vmatprep.subr.bf16.mxu0 0
    %762 = vmatpush1.bf16.msra.mxu0 0
    %763 = vmatprep.subr.bf16.mxu0 0
    %764 = vmatpush1.bf16.msra.mxu0 0
    %765 = vmatprep.subr.bf16.mxu0 0
    %766 = vmatpush1.bf16.msra.mxu0 0
    %767 = vmatprep.subr.bf16.mxu0 0
    %768 = vmatpush1.bf16.msra.mxu0 0
    %769 = vmatprep.subr.bf16.mxu0 0
    %770 = vmatpush1.bf16.msra.mxu0 0
    %771 = vmatprep.subr.bf16.mxu0 0
    %772 = vmatpush1.bf16.msra.mxu0 0
    %773 = vmatprep.subr.bf16.mxu0 0
    %774 = vmatpush1.bf16.msra.mxu0 0
    %775 = vmatprep.subr.bf16.mxu0 0
    %776 = vmatpush1.bf16.msra.mxu0 0
    %777 = vmatprep.mubr.bf16.mxu0 0
    %778 = vmatmul.mubr.bf16.gmra.mrb[0].mxu0 %v740
    %v779 = vpop.f32.mrb[0].mxu0
    %v780 = vadd.f32 0.0, %v779
    %v781 = vpop.f32.mrb[0].mxu0
    %v782 = vpop.f32.mrb[0].mxu0
    %v783 = vpop.f32.mrb[0].mxu0
    %784 = vdwg.mxu0
    %785 = vrot.lane.b32.xlu0 %v131, 104
    %v786 = vpop.permute.xlu0 %785
    %787 = vrot.lane.b32.xlu0 %v133, 72
    %v788 = vpop.permute.xlu0 %787
    %v790 = vsel %vm150, %v786, 0
    %v793 = vsel %vm150, %v788, 0
    %795 = vmatprep.subr.bf16.mxu0 0
    %796 = vmatpush1.bf16.xpose.msra.mxu0 %v793
    %797 = vmatprep.subr.bf16.mxu0 0
    %798 = vmatpush1.bf16.xpose.msra.mxu0 0
    %799 = vmatprep.subr.bf16.mxu0 0
    %800 = vmatpush1.bf16.xpose.msra.mxu0 0
    %801 = vmatprep.subr.bf16.mxu0 0
    %802 = vmatpush1.bf16.xpose.msra.mxu0 0
    %803 = vmatprep.subr.bf16.mxu0 0
    %804 = vmatpush1.bf16.xpose.msra.mxu0 0
    %805 = vmatprep.subr.bf16.mxu0 0
    %806 = vmatpush1.bf16.xpose.msra.mxu0 0
    %807 = vmatprep.subr.bf16.mxu0 0
    %808 = vmatpush1.bf16.xpose.msra.mxu0 0
    %809 = vmatprep.subr.bf16.mxu0 0
    %810 = vmatpush1.bf16.xpose.msra.mxu0 0
    %811 = vmatprep.subr.bf16.mxu0 0
    %812 = vmatpush1.bf16.xpose.msra.mxu0 0
    %813 = vmatprep.subr.bf16.mxu0 0
    %814 = vmatpush1.bf16.xpose.msra.mxu0 0
    %815 = vmatprep.subr.bf16.mxu0 0
    %816 = vmatpush1.bf16.xpose.msra.mxu0 0
    %817 = vmatprep.subr.bf16.mxu0 0
    %818 = vmatpush1.bf16.xpose.msra.mxu0 0
    %819 = vmatprep.subr.bf16.mxu0 0
    %820 = vmatpush1.bf16.xpose.msra.mxu0 0
    %821 = vmatprep.subr.bf16.mxu0 0
    %822 = vmatpush1.bf16.xpose.msra.mxu0 0
    %823 = vmatprep.subr.bf16.mxu0 0
    %824 = vmatpush1.bf16.xpose.msra.mxu0 0
    %825 = vmatprep.subr.bf16.mxu0 0
    %826 = vmatpush1.bf16.xpose.msra.mxu0 0
    %827 = vmatprep.mubr.bf16.mxu0 0
    %828 = vmatmul.mubr.bf16.gmra.mrb[0].mxu0 %v790
    %v829 = vpop.f32.mrb[0].mxu0
    %v830 = vadd.f32 %v140, %v829
    %v831 = vpop.f32.mrb[0].mxu0
    %v832 = vpop.f32.mrb[0].mxu0
    %v833 = vpop.f32.mrb[0].mxu0
    %834 = vdwg.mxu0
    %835 = vrot.lane.b32.xlu0 %v132, 104
    %v836 = vpop.permute.xlu0 %835
    %837 = vrot.lane.b32.xlu0 %v134, 72
    %v838 = vpop.permute.xlu0 %837
    %v840 = vsel %vm150, %v836, 0
    %v843 = vsel %vm150, %v838, 0
    %845 = vmatprep.subr.bf16.mxu0 0
    %846 = vmatpush1.bf16.xpose.msra.mxu0 %v843
    %847 = vmatprep.subr.bf16.mxu0 0
    %848 = vmatpush1.bf16.xpose.msra.mxu0 0
    %849 = vmatprep.subr.bf16.mxu0 0
    %850 = vmatpush1.bf16.xpose.msra.mxu0 0
    %851 = vmatprep.subr.bf16.mxu0 0
    %852 = vmatpush1.bf16.xpose.msra.mxu0 0
    %853 = vmatprep.subr.bf16.mxu0 0
    %854 = vmatpush1.bf16.xpose.msra.mxu0 0
    %855 = vmatprep.subr.bf16.mxu0 0
    %856 = vmatpush1.bf16.xpose.msra.mxu0 0
    %857 = vmatprep.subr.bf16.mxu0 0
    %858 = vmatpush1.bf16.xpose.msra.mxu0 0
    %859 = vmatprep.subr.bf16.mxu0 0
    %860 = vmatpush1.bf16.xpose.msra.mxu0 0
    %861 = vmatprep.subr.bf16.mxu0 0
    %862 = vmatpush1.bf16.xpose.msra.mxu0 0
    %863 = vmatprep.subr.bf16.mxu0 0
    %864 = vmatpush1.bf16.xpose.msra.mxu0 0
    %865 = vmatprep.subr.bf16.mxu0 0
    %866 = vmatpush1.bf16.xpose.msra.mxu0 0
    %867 = vmatprep.subr.bf16.mxu0 0
    %868 = vmatpush1.bf16.xpose.msra.mxu0 0
    %869 = vmatprep.subr.bf16.mxu0 0
    %870 = vmatpush1.bf16.xpose.msra.mxu0 0
    %871 = vmatprep.subr.bf16.mxu0 0
    %872 = vmatpush1.bf16.xpose.msra.mxu0 0
    %873 = vmatprep.subr.bf16.mxu0 0
    %874 = vmatpush1.bf16.xpose.msra.mxu0 0
    %875 = vmatprep.subr.bf16.mxu0 0
    %876 = vmatpush1.bf16.xpose.msra.mxu0 0
    %877 = vmatprep.mubr.bf16.mxu0 0
    %878 = vmatmul.mubr.bf16.gmra.mrb[0].mxu0 %v840
    %v879 = vpop.f32.mrb[0].mxu0
    %v880 = vadd.f32 %v144, %v879
    %v881 = vpop.f32.mrb[0].mxu0
    %v882 = vpop.f32.mrb[0].mxu0
    %v883 = vpop.f32.mrb[0].mxu0
    %884 = vdwg.mxu0
    %v885 = vmul.f32 %v830, 1.442695
    %v886 = vpow.pop %v885
    %v887 = vmul.f32 %v880, 1.442695
    %v888 = vpow.pop %v887
    %v889 = vsel %vm150, %v886, 0.0
    %890 = vadd.xlane.f32.xlu0 %v889
    %v891 = vpop.xlane.xlu0 %890
    %v892 = vsel %vm150, %v888, 0.0
    %893 = vadd.xlane.f32.xlu0 %v892
    %v894 = vpop.xlane.xlu0 %893
    %v895 = vrcp.pop %v891
    %v896 = vrcp.pop %v894
    %v897 = vmul.f32 %v886, %v895
    %v898 = vmul.f32 %v888, %v896
    %v899 = vpack.c.bf16 %v897, %v897
    %v900 = vpack.c.bf16 %v898, %v898
    %901 = vrot.lane.b32.xlu0 %v133, 40
    %v902 = vpop.permute.xlu0 %901
    %v904 = vsel %vm150, %v899, 0
    %v907 = vsel %vm267, %v902, 0
    %909 = vmatprep.subr.bf16.mxu0 0
    %910 = vmatpush1.bf16.msra.mxu0 %v907
    %911 = vmatprep.subr.bf16.mxu0 0
    %912 = vmatpush1.bf16.msra.mxu0 0
    %913 = vmatprep.subr.bf16.mxu0 0
    %914 = vmatpush1.bf16.msra.mxu0 0
    %915 = vmatprep.subr.bf16.mxu0 0
    %916 = vmatpush1.bf16.msra.mxu0 0
    %917 = vmatprep.subr.bf16.mxu0 0
    %918 = vmatpush1.bf16.msra.mxu0 0
    %919 = vmatprep.subr.bf16.mxu0 0
    %920 = vmatpush1.bf16.msra.mxu0 0
    %921 = vmatprep.subr.bf16.mxu0 0
    %922 = vmatpush1.bf16.msra.mxu0 0
    %923 = vmatprep.subr.bf16.mxu0 0
    %924 = vmatpush1.bf16.msra.mxu0 0
    %925 = vmatprep.subr.bf16.mxu0 0
    %926 = vmatpush1.bf16.msra.mxu0 0
    %927 = vmatprep.subr.bf16.mxu0 0
    %928 = vmatpush1.bf16.msra.mxu0 0
    %929 = vmatprep.subr.bf16.mxu0 0
    %930 = vmatpush1.bf16.msra.mxu0 0
    %931 = vmatprep.subr.bf16.mxu0 0
    %932 = vmatpush1.bf16.msra.mxu0 0
    %933 = vmatprep.subr.bf16.mxu0 0
    %934 = vmatpush1.bf16.msra.mxu0 0
    %935 = vmatprep.subr.bf16.mxu0 0
    %936 = vmatpush1.bf16.msra.mxu0 0
    %937 = vmatprep.subr.bf16.mxu0 0
    %938 = vmatpush1.bf16.msra.mxu0 0
    %939 = vmatprep.subr.bf16.mxu0 0
    %940 = vmatpush1.bf16.msra.mxu0 0
    %941 = vmatprep.mubr.bf16.mxu0 0
    %942 = vmatmul.mubr.bf16.gmra.mrb[0].mxu0 %v904
    %v943 = vpop.f32.mrb[0].mxu0
    %v944 = vadd.f32 0.0, %v943
    %v945 = vpop.f32.mrb[0].mxu0
    %v946 = vpop.f32.mrb[0].mxu0
    %v947 = vpop.f32.mrb[0].mxu0
    %948 = vdwg.mxu0
    %949 = vrot.lane.b32.xlu0 %v134, 40
    %v950 = vpop.permute.xlu0 %949
    %v952 = vsel %vm150, %v900, 0
    %v955 = vsel %vm267, %v950, 0
    %957 = vmatprep.subr.bf16.mxu0 0
    %958 = vmatpush1.bf16.msra.mxu0 %v955
    %959 = vmatprep.subr.bf16.mxu0 0
    %960 = vmatpush1.bf16.msra.mxu0 0
    %961 = vmatprep.subr.bf16.mxu0 0
    %962 = vmatpush1.bf16.msra.mxu0 0
    %963 = vmatprep.subr.bf16.mxu0 0
    %964 = vmatpush1.bf16.msra.mxu0 0
    %965 = vmatprep.subr.bf16.mxu0 0
    %966 = vmatpush1.bf16.msra.mxu0 0
    %967 = vmatprep.subr.bf16.mxu0 0
    %968 = vmatpush1.bf16.msra.mxu0 0
    %969 = vmatprep.subr.bf16.mxu0 0
    %970 = vmatpush1.bf16.msra.mxu0 0
    %971 = vmatprep.subr.bf16.mxu0 0
    %972 = vmatpush1.bf16.msra.mxu0 0
    %973 = vmatprep.subr.bf16.mxu0 0
    %974 = vmatpush1.bf16.msra.mxu0 0
    %975 = vmatprep.subr.bf16.mxu0 0
    %976 = vmatpush1.bf16.msra.mxu0 0
    %977 = vmatprep.subr.bf16.mxu0 0
    %978 = vmatpush1.bf16.msra.mxu0 0
    %979 = vmatprep.subr.bf16.mxu0 0
    %980 = vmatpush1.bf16.msra.mxu0 0
    %981 = vmatprep.subr.bf16.mxu0 0
    %982 = vmatpush1.bf16.msra.mxu0 0
    %983 = vmatprep.subr.bf16.mxu0 0
    %984 = vmatpush1.bf16.msra.mxu0 0
    %985 = vmatprep.subr.bf16.mxu0 0
    %986 = vmatpush1.bf16.msra.mxu0 0
    %987 = vmatprep.subr.bf16.mxu0 0
    %988 = vmatpush1.bf16.msra.mxu0 0
    %989 = vmatprep.mubr.bf16.mxu0 0
    %990 = vmatmul.mubr.bf16.gmra.mrb[0].mxu0 %v952
    %v991 = vpop.f32.mrb[0].mxu0
    %v992 = vadd.f32 0.0, %v991
    %v993 = vpop.f32.mrb[0].mxu0
    %v994 = vpop.f32.mrb[0].mxu0
    %v995 = vpop.f32.mrb[0].mxu0
    %996 = vdwg.mxu0
    %999 = vrot.lane.b32.xlu0 %v520, 8
    %v1000 = vpop.permute.xlu0 %999
    %1001 = vrot.lane.b32.xlu0 %v568, 8
    %v1002 = vpop.permute.xlu0 %1001
    %1007 = vrot.lane.b32.xlu0 %v732, 16
    %v1008 = vpop.permute.xlu0 %1007
    %1009 = vrot.lane.b32.xlu0 %v780, 16
    %v1010 = vpop.permute.xlu0 %1009
    %1015 = vrot.lane.b32.xlu0 %v944, 24
    %v1016 = vpop.permute.xlu0 %1015
    %1017 = vrot.lane.b32.xlu0 %v992, 24
    %v1018 = vpop.permute.xlu0 %1017
    %v1021 = vsel %vm150, %v306, %v1000
    %v1022 = vsel %vm150, %v354, %v1002
    %vm1023 = vcmask 130048
    %v1024 = vsel %vm1023, %v1021, %v1008
    %v1025 = vsel %vm1023, %v1022, %v1010
    %vm1026 = vcmask 195584
    %v1027 = vsel %vm1026, %v1024, %v1016
    %v1028 = vsel %vm1026, %v1025, %v1018
    %v1029 = vpack.c.bf16 %v1028, %v1027
    %v1030 = vlaneseq
    %v1031 = vshrl.u32 %v1030, 7
    %v1032 = vsub.s32 1, %v1031
    %v1033 = vrot.slane %v66, %v1032
    %v1038 = vunpack.c.l.b16 %v50
    %v1039 = vunpack.c.l.b16 %v51
    %v1040 = vunpack.c.l.b16 %v52
    %v1041 = vunpack.c.l.b16 %v53
    %v1042 = vpack.c.b16 %v1039, %v1038
    %v1043 = vpack.c.b16 %v1041, %v1040
    %v1047 = vsel %vm84, %v1029, 0
    %1049 = vmatprep.subr.bf16.mxu0 0
    %1050 = vmatpush1.bf16.msra.mxu0 %v1042
    %1051 = vmatprep.subr.bf16.mxu0 0
    %1052 = vmatpush1.bf16.msra.mxu0 %v1043
    %1053 = vmatprep.subr.bf16.mxu0 0
    %1054 = vmatpush1.bf16.msra.mxu0 0
    %1055 = vmatprep.subr.bf16.mxu0 0
    %1056 = vmatpush1.bf16.msra.mxu0 0
    %1057 = vmatprep.subr.bf16.mxu0 0
    %1058 = vmatpush1.bf16.msra.mxu0 0
    %1059 = vmatprep.subr.bf16.mxu0 0
    %1060 = vmatpush1.bf16.msra.mxu0 0
    %1061 = vmatprep.subr.bf16.mxu0 0
    %1062 = vmatpush1.bf16.msra.mxu0 0
    %1063 = vmatprep.subr.bf16.mxu0 0
    %1064 = vmatpush1.bf16.msra.mxu0 0
    %1065 = vmatprep.subr.bf16.mxu0 0
    %1066 = vmatpush1.bf16.msra.mxu0 0
    %1067 = vmatprep.subr.bf16.mxu0 0
    %1068 = vmatpush1.bf16.msra.mxu0 0
    %1069 = vmatprep.subr.bf16.mxu0 0
    %1070 = vmatpush1.bf16.msra.mxu0 0
    %1071 = vmatprep.subr.bf16.mxu0 0
    %1072 = vmatpush1.bf16.msra.mxu0 0
    %1073 = vmatprep.subr.bf16.mxu0 0
    %1074 = vmatpush1.bf16.msra.mxu0 0
    %1075 = vmatprep.subr.bf16.mxu0 0
    %1076 = vmatpush1.bf16.msra.mxu0 0
    %1077 = vmatprep.subr.bf16.mxu0 0
    %1078 = vmatpush1.bf16.msra.mxu0 0
    %1079 = vmatprep.subr.bf16.mxu0 0
    %1080 = vmatpush1.bf16.msra.mxu0 0
    %1081 = vmatprep.mubr.bf16.mxu0 0
    %1082 = vmatmul.mubr.bf16.gmra.mrb[0].mxu0 %v1047
    %v1083 = vpop.f32.mrb[0].mxu0
    %v1084 = vadd.f32 %v1033, %v1083
    %v1085 = vpop.f32.mrb[0].mxu0
    %v1086 = vpop.f32.mrb[0].mxu0
    %v1087 = vadd.f32 %v1033, %v1086
    %v1088 = vpop.f32.mrb[0].mxu0
    %1089 = vdwg.mxu0
    %v1090 = vadd.f32 %v42, %v1084
    %v1091 = vadd.f32 %v43, %v1087
    %v1092 = vsel %vm84, %v1090, 0.0
    %1093 = vadd.xlane.f32.xlu0 %v1092
    %v1094 = vpop.xlane.xlu0 %1093
    %v1095 = vsel %vm84, %v1091, 0.0
    %1096 = vadd.xlane.f32.xlu0 %v1095
    %v1097 = vpop.xlane.xlu0 %1096
    %v1098 = vrcp.pop 32.0
    %v1099 = vmul.f32 %v1094, %v1098
    %v1100 = vmul.f32 %v1097, %v1098
    %v1101 = vsub.f32 %v1090, %v1099
    %v1102 = vsub.f32 %v1091, %v1100
    %v1103 = vmul.f32 %v1101, %v1101
    %v1104 = vmul.f32 %v1102, %v1102
    %v1105 = vsel %vm84, %v1103, 0.0
    %1106 = vadd.xlane.f32.xlu0 %v1105
    %v1107 = vpop.xlane.xlu0 %1106
    %v1108 = vsel %vm84, %v1104, 0.0
    %1109 = vadd.xlane.f32.xlu0 %v1108
    %v1110 = vpop.xlane.xlu0 %1109
    %v1111 = vmul.f32 %v1107, %v1098
    %v1112 = vmul.f32 %v1110, %v1098
    %v1113 = vadd.f32 %v1111, 1e-05
    %v1114 = vadd.f32 %v1112, 1e-05
    %v1115 = vrsqrt.pop %v1113
    %v1116 = vrsqrt.pop %v1114
    %v1117 = vmul.f32 %v1101, %v1115
    %v1118 = vmul.f32 %v1102, %v1116
    %v1119 = vlaneseq
    %v1120 = vshrl.u32 %v1119, 7
    %v1121 = vsub.s32 2, %v1120
    %v1122 = vrot.slane %v66, %v1121
    %v1123 = vmul.f32 %v1117, %v1122
    %v1124 = vmul.f32 %v1118, %v1122
    %v1125 = vlaneseq
    %v1126 = vshrl.u32 %v1125, 7
    %v1127 = vsub.s32 3, %v1126
    %v1128 = vrot.slane %v66, %v1127
    %v1129 = vadd.f32 %v1123, %v1128
    %v1130 = vadd.f32 %v1124, %v1128
    %v1131 = vpack.c.bf16 %v1130, %v1129
    %v1132 = vlaneseq
    %v1133 = vshrl.u32 %v1132, 7
    %v1134 = vsub.s32 4, %v1133
    %v1135 = vrot.slane %v66, %v1134
    %v1140 = vunpack.c.l.b16 %v54
    %v1141 = vunpack.c.l.b16 %v55
    %v1142 = vunpack.c.l.b16 %v56
    %v1143 = vunpack.c.l.b16 %v57
    %v1144 = vpack.c.b16 %v1141, %v1140
    %v1145 = vpack.c.b16 %v1143, %v1142
    %v1149 = vsel %vm84, %v1131, 0
    %1151 = vmatprep.subr.bf16.mxu0 0
    %1152 = vmatpush1.bf16.msra.mxu0 %v1144
    %1153 = vmatprep.subr.bf16.mxu0 0
    %1154 = vmatpush1.bf16.msra.mxu0 %v1145
    %1155 = vmatprep.subr.bf16.mxu0 0
    %1156 = vmatpush1.bf16.msra.mxu0 0
    %1157 = vmatprep.subr.bf16.mxu0 0
    %1158 = vmatpush1.bf16.msra.mxu0 0
    %1159 = vmatprep.subr.bf16.mxu0 0
    %1160 = vmatpush1.bf16.msra.mxu0 0
    %1161 = vmatprep.subr.bf16.mxu0 0
    %1162 = vmatpush1.bf16.msra.mxu0 0
    %1163 = vmatprep.subr.bf16.mxu0 0
    %1164 = vmatpush1.bf16.msra.mxu0 0
    %1165 = vmatprep.subr.bf16.mxu0 0
    %1166 = vmatpush1.bf16.msra.mxu0 0
    %1167 = vmatprep.subr.bf16.mxu0 0
    %1168 = vmatpush1.bf16.msra.mxu0 0
    %1169 = vmatprep.subr.bf16.mxu0 0
    %1170 = vmatpush1.bf16.msra.mxu0 0
    %1171 = vmatprep.subr.bf16.mxu0 0
    %1172 = vmatpush1.bf16.msra.mxu0 0
    %1173 = vmatprep.subr.bf16.mxu0 0
    %1174 = vmatpush1.bf16.msra.mxu0 0
    %1175 = vmatprep.subr.bf16.mxu0 0
    %1176 = vmatpush1.bf16.msra.mxu0 0
    %1177 = vmatprep.subr.bf16.mxu0 0
    %1178 = vmatpush1.bf16.msra.mxu0 0
    %1179 = vmatprep.subr.bf16.mxu0 0
    %1180 = vmatpush1.bf16.msra.mxu0 0
    %1181 = vmatprep.subr.bf16.mxu0 0
    %1182 = vmatpush1.bf16.msra.mxu0 0
    %1183 = vmatprep.mubr.bf16.mxu0 0
    %1184 = vmatmul.mubr.bf16.gmra.mrb[0].mxu0 %v1149
    %v1185 = vpop.f32.mrb[0].mxu0
    %v1186 = vadd.f32 %v1135, %v1185
    %v1187 = vpop.f32.mrb[0].mxu0
    %v1188 = vpop.f32.mrb[0].mxu0
    %v1189 = vadd.f32 %v1135, %v1188
    %v1190 = vpop.f32.mrb[0].mxu0
    %1191 = vdwg.mxu0
    %v1192 = vmax.f32 %v1186, 0.0
    %v1193 = vmax.f32 %v1189, 0.0
    %v1194 = vpack.c.bf16 %v1193, %v1192
    %v1195 = vlaneseq
    %v1196 = vshrl.u32 %v1195, 7
    %v1197 = vsub.s32 5, %v1196
    %v1198 = vrot.slane %v66, %v1197
    %v1207 = vunpack.c.l.b16 %v58
    %v1208 = vunpack.c.l.b16 %v59
    %v1209 = vunpack.c.l.b16 %v60
    %v1210 = vunpack.c.l.b16 %v61
    %v1211 = vunpack.c.l.b16 %v62
    %v1212 = vunpack.c.l.b16 %v63
    %v1213 = vunpack.c.l.b16 %v64
    %v1214 = vunpack.c.l.b16 %v65
    %v1215 = vpack.c.b16 %v1208, %v1207
    %v1216 = vpack.c.b16 %v1210, %v1209
    %v1217 = vpack.c.b16 %v1212, %v1211
    %v1218 = vpack.c.b16 %v1214, %v1213
    %vm1223 = vcmask 523264
    %v1225 = vsel %vm1223, %v1194, 0
    %1227 = vmatprep.subr.bf16.mxu0 0
    %1228 = vmatpush1.bf16.msra.mxu0 %v1215
    %1229 = vmatprep.subr.bf16.mxu0 0
    %1230 = vmatpush1.bf16.msra.mxu0 %v1216
    %1231 = vmatprep.subr.bf16.mxu0 0
    %1232 = vmatpush1.bf16.msra.mxu0 %v1217
    %1233 = vmatprep.subr.bf16.mxu0 0
    %1234 = vmatpush1.bf16.msra.mxu0 %v1218
    %1235 = vmatprep.subr.bf16.mxu0 0
    %1236 = vmatpush1.bf16.msra.mxu0 0
    %1237 = vmatprep.subr.bf16.mxu0 0
    %1238 = vmatpush1.bf16.msra.mxu0 0
    %1239 = vmatprep.subr.bf16.mxu0 0
    %1240 = vmatpush1.bf16.msra.mxu0 0
    %1241 = vmatprep.subr.bf16.mxu0 0
    %1242 = vmatpush1.bf16.msra.mxu0 0
    %1243 = vmatprep.subr.bf16.mxu0 0
    %1244 = vmatpush1.bf16.msra.mxu0 0
    %1245 = vmatprep.subr.bf16.mxu0 0
    %1246 = vmatpush1.bf16.msra.mxu0 0
    %1247 = vmatprep.subr.bf16.mxu0 0
    %1248 = vmatpush1.bf16.msra.mxu0 0
    %1249 = vmatprep.subr.bf16.mxu0 0
    %1250 = vmatpush1.bf16.msra.mxu0 0
    %1251 = vmatprep.subr.bf16.mxu0 0
    %1252 = vmatpush1.bf16.msra.mxu0 0
    %1253 = vmatprep.subr.bf16.mxu0 0
    %1254 = vmatpush1.bf16.msra.mxu0 0
    %1255 = vmatprep.subr.bf16.mxu0 0
    %1256 = vmatpush1.bf16.msra.mxu0 0
    %1257 = vmatprep.subr.bf16.mxu0 0
    %1258 = vmatpush1.bf16.msra.mxu0 0
    %1259 = vmatprep.mubr.bf16.mxu0 0
    %1260 = vmatmul.mubr.bf16.gmra.mrb[0].mxu0 %v1225
    %v1261 = vpop.f32.mrb[0].mxu0
    %v1262 = vadd.f32 %v1198, %v1261
    %v1263 = vpop.f32.mrb[0].mxu0
    %v1264 = vpop.f32.mrb[0].mxu0
    %v1265 = vadd.f32 %v1198, %v1264
    %v1266 = vpop.f32.mrb[0].mxu0
    %1267 = vdwg.mxu0
    %v1268 = vadd.f32 %v1129, %v1262
    %v1269 = vadd.f32 %v1130, %v1265
    %v1270 = vsel %vm84, %v1268, 0.0
    %1271 = vadd.xlane.f32.xlu0 %v1270
    %v1272 = vpop.xlane.xlu0 %1271
    %v1273 = vsel %vm84, %v1269, 0.0
    %1274 = vadd.xlane.f32.xlu0 %v1273
    %v1275 = vpop.xlane.xlu0 %1274
    %v1276 = vmul.f32 %v1272, %v1098
    %v1277 = vmul.f32 %v1275, %v1098
    %v1278 = vsub.f32 %v1268, %v1276
    %v1279 = vsub.f32 %v1269, %v1277
    %v1280 = vmul.f32 %v1278, %v1278
    %v1281 = vmul.f32 %v1279, %v1279
    %v1282 = vsel %vm84, %v1280, 0.0
    %1283 = vadd.xlane.f32.xlu0 %v1282
    %v1284 = vpop.xlane.xlu0 %1283
    %v1285 = vsel %vm84, %v1281, 0.0
    %1286 = vadd.xlane.f32.xlu0 %v1285
    %v1287 = vpop.xlane.xlu0 %1286
    %v1288 = vmul.f32 %v1284, %v1098
    %v1289 = vmul.f32 %v1287, %v1098
    %v1290 = vadd.f32 %v1288, 1e-05
    %v1291 = vadd.f32 %v1289, 1e-05
    %v1292 = vrsqrt.pop %v1290
    %v1293 = vrsqrt.pop %v1291
    %v1294 = vmul.f32 %v1278, %v1292
    %v1295 = vmul.f32 %v1279, %v1293
    %v1296 = vlaneseq
    %v1297 = vshrl.u32 %v1296, 7
    %v1298 = vsub.s32 6, %v1297
    %v1299 = vrot.slane %v66, %v1298
    %v1300 = vmul.f32 %v1294, %v1299
    %v1301 = vmul.f32 %v1295, %v1299
    %v1302 = vlaneseq
    %v1303 = vshrl.u32 %v1302, 7
    %v1304 = vsub.s32 7, %v1303
    %v1305 = vrot.slane %v66, %v1304
    %v1306 = vadd.f32 %v1300, %v1305
    %v1307 = vadd.f32 %v1301, %v1305
    %s1308 = scalar_lea.vmem %s2, 16
    %v1309 = vld [vmem:[%s1308] sm:$0xf]
    %v1310 = vld [vmem:[%s1308 + $0x4] sm:$0xf]
    %v1311 = vld [vmem:[%s1308 + $0x8] sm:$0xf]
    %v1312 = vld [vmem:[%s1308 + $0xc] sm:$0xf]
    %s1313 = scalar_lea.vmem %s3, 16
    %v1314 = vld [vmem:[%s1313] sm:$0xf]
    %v1315 = vld [vmem:[%s1313 + $0x4] sm:$0xf]
    %v1316 = vld [vmem:[%s1313 + $0x8] sm:$0xf]
    %v1317 = vld [vmem:[%s1313 + $0xc] sm:$0xf]
    %s1318 = scalar_lea.vmem %s4, 16
    %v1319 = vld [vmem:[%s1318] sm:$0xf]
    %v1320 = vld [vmem:[%s1318 + $0x4] sm:$0xf]
    %v1321 = vld [vmem:[%s1318 + $0x8] sm:$0xf]
    %v1322 = vld [vmem:[%s1318 + $0xc] sm:$0xf]
    %s1323 = scalar_lea.vmem %s5, 32
    %v1324 = vld [vmem:[%s1323] sm:$0xf]
    %v1325 = vld [vmem:[%s1323 + $0x4] sm:$0xf]
    %v1326 = vld [vmem:[%s1323 + $0x8] sm:$0xf]
    %v1327 = vld [vmem:[%s1323 + $0xc] sm:$0xf]
    %v1328 = vld [vmem:[%s1323 + $0x10] sm:$0xf]
    %v1329 = vld [vmem:[%s1323 + $0x14] sm:$0xf]
    %v1330 = vld [vmem:[%s1323 + $0x18] sm:$0xf]
    %v1331 = vld [vmem:[%s1323 + $0x1c] sm:$0xf]
    %s1332 = scalar_lea.vmem %s6, 8
    %v1333 = vld [vmem:[%s1332] sm:$0xff]
    %v1334 = vpack.c.bf16 %v1307, %v1306
    %v1335 = vlaneseq
    %v1336 = vshrl.u32 %v1335, 7
    %v1337 = vsub.s32 0, %v1336
    %v1338 = vrot.slane %v1333, %v1337
    %v1343 = vunpack.c.l.b16 %v1309
    %v1344 = vunpack.c.l.b16 %v1310
    %v1345 = vunpack.c.l.b16 %v1311
    %v1346 = vunpack.c.l.b16 %v1312
    %v1347 = vpack.c.b16 %v1344, %v1343
    %v1348 = vpack.c.b16 %v1346, %v1345
    %v1352 = vsel %vm84, %v1334, 0
    %1354 = vmatprep.subr.bf16.mxu0 0
    %1355 = vmatpush1.bf16.msra.mxu0 %v1347
    %1356 = vmatprep.subr.bf16.mxu0 0
    %1357 = vmatpush1.bf16.msra.mxu0 %v1348
    %1358 = vmatprep.subr.bf16.mxu0 0
    %1359 = vmatpush1.bf16.msra.mxu0 0
    %1360 = vmatprep.subr.bf16.mxu0 0
    %1361 = vmatpush1.bf16.msra.mxu0 0
    %1362 = vmatprep.subr.bf16.mxu0 0
    %1363 = vmatpush1.bf16.msra.mxu0 0
    %1364 = vmatprep.subr.bf16.mxu0 0
    %1365 = vmatpush1.bf16.msra.mxu0 0
    %1366 = vmatprep.subr.bf16.mxu0 0
    %1367 = vmatpush1.bf16.msra.mxu0 0
    %1368 = vmatprep.subr.bf16.mxu0 0
    %1369 = vmatpush1.bf16.msra.mxu0 0
    %1370 = vmatprep.subr.bf16.mxu0 0
    %1371 = vmatpush1.bf16.msra.mxu0 0
    %1372 = vmatprep.subr.bf16.mxu0 0
    %1373 = vmatpush1.bf16.msra.mxu0 0
    %1374 = vmatprep.subr.bf16.mxu0 0
    %1375 = vmatpush1.bf16.msra.mxu0 0
    %1376 = vmatprep.subr.bf16.mxu0 0
    %1377 = vmatpush1.bf16.msra.mxu0 0
    %1378 = vmatprep.subr.bf16.mxu0 0
    %1379 = vmatpush1.bf16.msra.mxu0 0
    %1380 = vmatprep.subr.bf16.mxu0 0
    %1381 = vmatpush1.bf16.msra.mxu0 0
    %1382 = vmatprep.subr.bf16.mxu0 0
    %1383 = vmatpush1.bf16.msra.mxu0 0
    %1384 = vmatprep.subr.bf16.mxu0 0
    %1385 = vmatpush1.bf16.msra.mxu0 0
    %1386 = vmatprep.mubr.bf16.mxu0 0
    %1387 = vmatmul.mubr.bf16.gmra.mrb[0].mxu0 %v1352
    %v1388 = vpop.f32.mrb[0].mxu0
    %v1389 = vadd.f32 %v1338, %v1388
    %v1390 = vpop.f32.mrb[0].mxu0
    %v1391 = vpop.f32.mrb[0].mxu0
    %v1392 = vadd.f32 %v1338, %v1391
    %v1393 = vpop.f32.mrb[0].mxu0
    %1394 = vdwg.mxu0
    %v1395 = vmul.f32 %v1389, 0.35355338
    %v1396 = vmul.f32 %v1392, 0.35355338
    %v1397 = vpack.c.bf16 %v1395, %v1395
    %v1398 = vpack.c.bf16 %v1396, %v1396
    %v1399 = vpack.c.bf16 %v1389, %v1389
    %v1400 = vpack.c.bf16 %v1392, %v1392
    %1402 = vrot.lane.b32.xlu0 %v1399, 96
    %v1403 = vpop.permute.xlu0 %1402
    %v1405 = vsel %vm150, %v1397, 0
    %v1408 = vsel %vm150, %v1403, 0
    %1410 = vmatprep.subr.bf16.mxu0 0
    %1411 = vmatpush1.bf16.xpose.msra.mxu0 %v1408
    %1412 = vmatprep.subr.bf16.mxu0 0
    %1413 = vmatpush1.bf16.xpose.msra.mxu0 0
    %1414 = vmatprep.subr.bf16.mxu0 0
    %1415 = vmatpush1.bf16.xpose.msra.mxu0 0
    %1416 = vmatprep.subr.bf16.mxu0 0
    %1417 = vmatpush1.bf16.xpose.msra.mxu0 0
    %1418 = vmatprep.subr.bf16.mxu0 0
    %1419 = vmatpush1.bf16.xpose.msra.mxu0 0
    %1420 = vmatprep.subr.bf16.mxu0 0
    %1421 = vmatpush1.bf16.xpose.msra.mxu0 0
    %1422 = vmatprep.subr.bf16.mxu0 0
    %1423 = vmatpush1.bf16.xpose.msra.mxu0 0
    %1424 = vmatprep.subr.bf16.mxu0 0
    %1425 = vmatpush1.bf16.xpose.msra.mxu0 0
    %1426 = vmatprep.subr.bf16.mxu0 0
    %1427 = vmatpush1.bf16.xpose.msra.mxu0 0
    %1428 = vmatprep.subr.bf16.mxu0 0
    %1429 = vmatpush1.bf16.xpose.msra.mxu0 0
    %1430 = vmatprep.subr.bf16.mxu0 0
    %1431 = vmatpush1.bf16.xpose.msra.mxu0 0
    %1432 = vmatprep.subr.bf16.mxu0 0
    %1433 = vmatpush1.bf16.xpose.msra.mxu0 0
    %1434 = vmatprep.subr.bf16.mxu0 0
    %1435 = vmatpush1.bf16.xpose.msra.mxu0 0
    %1436 = vmatprep.subr.bf16.mxu0 0
    %1437 = vmatpush1.bf16.xpose.msra.mxu0 0
    %1438 = vmatprep.subr.bf16.mxu0 0
    %1439 = vmatpush1.bf16.xpose.msra.mxu0 0
    %1440 = vmatprep.subr.bf16.mxu0 0
    %1441 = vmatpush1.bf16.xpose.msra.mxu0 0
    %1442 = vmatprep.mubr.bf16.mxu0 0
    %1443 = vmatmul.mubr.bf16.gmra.mrb[0].mxu0 %v1405
    %v1444 = vpop.f32.mrb[0].mxu0
    %v1445 = vadd.f32 %v140, %v1444
    %v1446 = vpop.f32.mrb[0].mxu0
    %v1447 = vpop.f32.mrb[0].mxu0
    %v1448 = vpop.f32.mrb[0].mxu0
    %1449 = vdwg.mxu0
    %1451 = vrot.lane.b32.xlu0 %v1400, 96
    %v1452 = vpop.permute.xlu0 %1451
    %v1454 = vsel %vm150, %v1398, 0
    %v1457 = vsel %vm150, %v1452, 0
    %1459 = vmatprep.subr.bf16.mxu0 0
    %1460 = vmatpush1.bf16.xpose.msra.mxu0 %v1457
    %1461 = vmatprep.subr.bf16.mxu0 0
    %1462 = vmatpush1.bf16.xpose.msra.mxu0 0
    %1463 = vmatprep.subr.bf16.mxu0 0
    %1464 = vmatpush1.bf16.xpose.msra.mxu0 0
    %1465 = vmatprep.subr.bf16.mxu0 0
    %1466 = vmatpush1.bf16.xpose.msra.mxu0 0
    %1467 = vmatprep.subr.bf16.mxu0 0
    %1468 = vmatpush1.bf16.xpose.msra.mxu0 0
    %1469 = vmatprep.subr.bf16.mxu0 0
    %1470 = vmatpush1.bf16.xpose.msra.mxu0 0
    %1471 = vmatprep.subr.bf16.mxu0 0
    %1472 = vmatpush1.bf16.xpose.msra.mxu0 0
    %1473 = vmatprep.subr.bf16.mxu0 0
    %1474 = vmatpush1.bf16.xpose.msra.mxu0 0
    %1475 = vmatprep.subr.bf16.mxu0 0
    %1476 = vmatpush1.bf16.xpose.msra.mxu0 0
    %1477 = vmatprep.subr.bf16.mxu0 0
    %1478 = vmatpush1.bf16.xpose.msra.mxu0 0
    %1479 = vmatprep.subr.bf16.mxu0 0
    %1480 = vmatpush1.bf16.xpose.msra.mxu0 0
    %1481 = vmatprep.subr.bf16.mxu0 0
    %1482 = vmatpush1.bf16.xpose.msra.mxu0 0
    %1483 = vmatprep.subr.bf16.mxu0 0
    %1484 = vmatpush1.bf16.xpose.msra.mxu0 0
    %1485 = vmatprep.subr.bf16.mxu0 0
    %1486 = vmatpush1.bf16.xpose.msra.mxu0 0
    %1487 = vmatprep.subr.bf16.mxu0 0
    %1488 = vmatpush1.bf16.xpose.msra.mxu0 0
    %1489 = vmatprep.subr.bf16.mxu0 0
    %1490 = vmatpush1.bf16.xpose.msra.mxu0 0
    %1491 = vmatprep.mubr.bf16.mxu0 0
    %1492 = vmatmul.mubr.bf16.gmra.mrb[0].mxu0 %v1454
    %v1493 = vpop.f32.mrb[0].mxu0
    %v1494 = vadd.f32 %v144, %v1493
    %v1495 = vpop.f32.mrb[0].mxu0
    %v1496 = vpop.f32.mrb[0].mxu0
    %v1497 = vpop.f32.mrb[0].mxu0
    %1498 = vdwg.mxu0
    %v1499 = vmul.f32 %v1445, 1.442695
    %v1500 = vpow.pop %v1499
    %v1501 = vmul.f32 %v1494, 1.442695
    %v1502 = vpow.pop %v1501
    %v1503 = vsel %vm150, %v1500, 0.0
    %1504 = vadd.xlane.f32.xlu0 %v1503
    %v1505 = vpop.xlane.xlu0 %1504
    %v1506 = vsel %vm150, %v1502, 0.0
    %1507 = vadd.xlane.f32.xlu0 %v1506
    %v1508 = vpop.xlane.xlu0 %1507
    %v1509 = vrcp.pop %v1505
    %v1510 = vrcp.pop %v1508
    %v1511 = vmul.f32 %v1500, %v1509
    %v1512 = vmul.f32 %v1502, %v1510
    %v1513 = vpack.c.bf16 %v1511, %v1511
    %v1514 = vpack.c.bf16 %v1512, %v1512
    %1515 = vrot.lane.b32.xlu0 %v1399, 64
    %v1516 = vpop.permute.xlu0 %1515
    %v1518 = vsel %vm150, %v1513, 0
    %v1521 = vsel %vm267, %v1516, 0
    %1523 = vmatprep.subr.bf16.mxu0 0
    %1524 = vmatpush1.bf16.msra.mxu0 %v1521
    %1525 = vmatprep.subr.bf16.mxu0 0
    %1526 = vmatpush1.bf16.msra.mxu0 0
    %1527 = vmatprep.subr.bf16.mxu0 0
    %1528 = vmatpush1.bf16.msra.mxu0 0
    %1529 = vmatprep.subr.bf16.mxu0 0
    %1530 = vmatpush1.bf16.msra.mxu0 0
    %1531 = vmatprep.subr.bf16.mxu0 0
    %1532 = vmatpush1.bf16.msra.mxu0 0
    %1533 = vmatprep.subr.bf16.mxu0 0
    %1534 = vmatpush1.bf16.msra.mxu0 0
    %1535 = vmatprep.subr.bf16.mxu0 0
    %1536 = vmatpush1.bf16.msra.mxu0 0
    %1537 = vmatprep.subr.bf16.mxu0 0
    %1538 = vmatpush1.bf16.msra.mxu0 0
    %1539 = vmatprep.subr.bf16.mxu0 0
    %1540 = vmatpush1.bf16.msra.mxu0 0
    %1541 = vmatprep.subr.bf16.mxu0 0
    %1542 = vmatpush1.bf16.msra.mxu0 0
    %1543 = vmatprep.subr.bf16.mxu0 0
    %1544 = vmatpush1.bf16.msra.mxu0 0
    %1545 = vmatprep.subr.bf16.mxu0 0
    %1546 = vmatpush1.bf16.msra.mxu0 0
    %1547 = vmatprep.subr.bf16.mxu0 0
    %1548 = vmatpush1.bf16.msra.mxu0 0
    %1549 = vmatprep.subr.bf16.mxu0 0
    %1550 = vmatpush1.bf16.msra.mxu0 0
    %1551 = vmatprep.subr.bf16.mxu0 0
    %1552 = vmatpush1.bf16.msra.mxu0 0
    %1553 = vmatprep.subr.bf16.mxu0 0
    %1554 = vmatpush1.bf16.msra.mxu0 0
    %1555 = vmatprep.mubr.bf16.mxu0 0
    %1556 = vmatmul.mubr.bf16.gmra.mrb[0].mxu0 %v1518
    %v1557 = vpop.f32.mrb[0].mxu0
    %v1558 = vadd.f32 0.0, %v1557
    %v1559 = vpop.f32.mrb[0].mxu0
    %v1560 = vpop.f32.mrb[0].mxu0
    %v1561 = vpop.f32.mrb[0].mxu0
    %1562 = vdwg.mxu0
    %1563 = vrot.lane.b32.xlu0 %v1400, 64
    %v1564 = vpop.permute.xlu0 %1563
    %v1566 = vsel %vm150, %v1514, 0
    %v1569 = vsel %vm267, %v1564, 0
    %1571 = vmatprep.subr.bf16.mxu0 0
    %1572 = vmatpush1.bf16.msra.mxu0 %v1569
    %1573 = vmatprep.subr.bf16.mxu0 0
    %1574 = vmatpush1.bf16.msra.mxu0 0
    %1575 = vmatprep.subr.bf16.mxu0 0
    %1576 = vmatpush1.bf16.msra.mxu0 0
    %1577 = vmatprep.subr.bf16.mxu0 0
    %1578 = vmatpush1.bf16.msra.mxu0 0
    %1579 = vmatprep.subr.bf16.mxu0 0
    %1580 = vmatpush1.bf16.msra.mxu0 0
    %1581 = vmatprep.subr.bf16.mxu0 0
    %1582 = vmatpush1.bf16.msra.mxu0 0
    %1583 = vmatprep.subr.bf16.mxu0 0
    %1584 = vmatpush1.bf16.msra.mxu0 0
    %1585 = vmatprep.subr.bf16.mxu0 0
    %1586 = vmatpush1.bf16.msra.mxu0 0
    %1587 = vmatprep.subr.bf16.mxu0 0
    %1588 = vmatpush1.bf16.msra.mxu0 0
    %1589 = vmatprep.subr.bf16.mxu0 0
    %1590 = vmatpush1.bf16.msra.mxu0 0
    %1591 = vmatprep.subr.bf16.mxu0 0
    %1592 = vmatpush1.bf16.msra.mxu0 0
    %1593 = vmatprep.subr.bf16.mxu0 0
    %1594 = vmatpush1.bf16.msra.mxu0 0
    %1595 = vmatprep.subr.bf16.mxu0 0
    %1596 = vmatpush1.bf16.msra.mxu0 0
    %1597 = vmatprep.subr.bf16.mxu0 0
    %1598 = vmatpush1.bf16.msra.mxu0 0
    %1599 = vmatprep.subr.bf16.mxu0 0
    %1600 = vmatpush1.bf16.msra.mxu0 0
    %1601 = vmatprep.subr.bf16.mxu0 0
    %1602 = vmatpush1.bf16.msra.mxu0 0
    %1603 = vmatprep.mubr.bf16.mxu0 0
    %1604 = vmatmul.mubr.bf16.gmra.mrb[0].mxu0 %v1566
    %v1605 = vpop.f32.mrb[0].mxu0
    %v1606 = vadd.f32 0.0, %v1605
    %v1607 = vpop.f32.mrb[0].mxu0
    %v1608 = vpop.f32.mrb[0].mxu0
    %v1609 = vpop.f32.mrb[0].mxu0
    %1610 = vdwg.mxu0
    %1612 = vrot.lane.b32.xlu0 %v1397, 120
    %v1613 = vpop.permute.xlu0 %1612
    %1614 = vrot.lane.b32.xlu0 %v1399, 88
    %v1615 = vpop.permute.xlu0 %1614
    %v1617 = vsel %vm150, %v1613, 0
    %v1620 = vsel %vm150, %v1615, 0
    %1622 = vmatprep.subr.bf16.mxu0 0
    %1623 = vmatpush1.bf16.xpose.msra.mxu0 %v1620
    %1624 = vmatprep.subr.bf16.mxu0 0
    %1625 = vmatpush1.bf16.xpose.msra.mxu0 0
    %1626 = vmatprep.subr.bf16.mxu0 0
    %1627 = vmatpush1.bf16.xpose.msra.mxu0 0
    %1628 = vmatprep.subr.bf16.mxu0 0
    %1629 = vmatpush1.bf16.xpose.msra.mxu0 0
    %1630 = vmatprep.subr.bf16.mxu0 0
    %1631 = vmatpush1.bf16.xpose.msra.mxu0 0
    %1632 = vmatprep.subr.bf16.mxu0 0
    %1633 = vmatpush1.bf16.xpose.msra.mxu0 0
    %1634 = vmatprep.subr.bf16.mxu0 0
    %1635 = vmatpush1.bf16.xpose.msra.mxu0 0
    %1636 = vmatprep.subr.bf16.mxu0 0
    %1637 = vmatpush1.bf16.xpose.msra.mxu0 0
    %1638 = vmatprep.subr.bf16.mxu0 0
    %1639 = vmatpush1.bf16.xpose.msra.mxu0 0
    %1640 = vmatprep.subr.bf16.mxu0 0
    %1641 = vmatpush1.bf16.xpose.msra.mxu0 0
    %1642 = vmatprep.subr.bf16.mxu0 0
    %1643 = vmatpush1.bf16.xpose.msra.mxu0 0
    %1644 = vmatprep.subr.bf16.mxu0 0
    %1645 = vmatpush1.bf16.xpose.msra.mxu0 0
    %1646 = vmatprep.subr.bf16.mxu0 0
    %1647 = vmatpush1.bf16.xpose.msra.mxu0 0
    %1648 = vmatprep.subr.bf16.mxu0 0
    %1649 = vmatpush1.bf16.xpose.msra.mxu0 0
    %1650 = vmatprep.subr.bf16.mxu0 0
    %1651 = vmatpush1.bf16.xpose.msra.mxu0 0
    %1652 = vmatprep.subr.bf16.mxu0 0
    %1653 = vmatpush1.bf16.xpose.msra.mxu0 0
    %1654 = vmatprep.mubr.bf16.mxu0 0
    %1655 = vmatmul.mubr.bf16.gmra.mrb[0].mxu0 %v1617
    %v1656 = vpop.f32.mrb[0].mxu0
    %v1657 = vadd.f32 %v140, %v1656
    %v1658 = vpop.f32.mrb[0].mxu0
    %v1659 = vpop.f32.mrb[0].mxu0
    %v1660 = vpop.f32.mrb[0].mxu0
    %1661 = vdwg.mxu0
    %1663 = vrot.lane.b32.xlu0 %v1398, 120
    %v1664 = vpop.permute.xlu0 %1663
    %1665 = vrot.lane.b32.xlu0 %v1400, 88
    %v1666 = vpop.permute.xlu0 %1665
    %v1668 = vsel %vm150, %v1664, 0
    %v1671 = vsel %vm150, %v1666, 0
    %1673 = vmatprep.subr.bf16.mxu0 0
    %1674 = vmatpush1.bf16.xpose.msra.mxu0 %v1671
    %1675 = vmatprep.subr.bf16.mxu0 0
    %1676 = vmatpush1.bf16.xpose.msra.mxu0 0
    %1677 = vmatprep.subr.bf16.mxu0 0
    %1678 = vmatpush1.bf16.xpose.msra.mxu0 0
    %1679 = vmatprep.subr.bf16.mxu0 0
    %1680 = vmatpush1.bf16.xpose.msra.mxu0 0
    %1681 = vmatprep.subr.bf16.mxu0 0
    %1682 = vmatpush1.bf16.xpose.msra.mxu0 0
    %1683 = vmatprep.subr.bf16.mxu0 0
    %1684 = vmatpush1.bf16.xpose.msra.mxu0 0
    %1685 = vmatprep.subr.bf16.mxu0 0
    %1686 = vmatpush1.bf16.xpose.msra.mxu0 0
    %1687 = vmatprep.subr.bf16.mxu0 0
    %1688 = vmatpush1.bf16.xpose.msra.mxu0 0
    %1689 = vmatprep.subr.bf16.mxu0 0
    %1690 = vmatpush1.bf16.xpose.msra.mxu0 0
    %1691 = vmatprep.subr.bf16.mxu0 0
    %1692 = vmatpush1.bf16.xpose.msra.mxu0 0
    %1693 = vmatprep.subr.bf16.mxu0 0
    %1694 = vmatpush1.bf16.xpose.msra.mxu0 0
    %1695 = vmatprep.subr.bf16.mxu0 0
    %1696 = vmatpush1.bf16.xpose.msra.mxu0 0
    %1697 = vmatprep.subr.bf16.mxu0 0
    %1698 = vmatpush1.bf16.xpose.msra.mxu0 0
    %1699 = vmatprep.subr.bf16.mxu0 0
    %1700 = vmatpush1.bf16.xpose.msra.mxu0 0
    %1701 = vmatprep.subr.bf16.mxu0 0
    %1702 = vmatpush1.bf16.xpose.msra.mxu0 0
    %1703 = vmatprep.subr.bf16.mxu0 0
    %1704 = vmatpush1.bf16.xpose.msra.mxu0 0
    %1705 = vmatprep.mubr.bf16.mxu0 0
    %1706 = vmatmul.mubr.bf16.gmra.mrb[0].mxu0 %v1668
    %v1707 = vpop.f32.mrb[0].mxu0
    %v1708 = vadd.f32 %v144, %v1707
    %v1709 = vpop.f32.mrb[0].mxu0
    %v1710 = vpop.f32.mrb[0].mxu0
    %v1711 = vpop.f32.mrb[0].mxu0
    %1712 = vdwg.mxu0
    %v1713 = vmul.f32 %v1657, 1.442695
    %v1714 = vpow.pop %v1713
    %v1715 = vmul.f32 %v1708, 1.442695
    %v1716 = vpow.pop %v1715
    %v1717 = vsel %vm150, %v1714, 0.0
    %1718 = vadd.xlane.f32.xlu0 %v1717
    %v1719 = vpop.xlane.xlu0 %1718
    %v1720 = vsel %vm150, %v1716, 0.0
    %1721 = vadd.xlane.f32.xlu0 %v1720
    %v1722 = vpop.xlane.xlu0 %1721
    %v1723 = vrcp.pop %v1719
    %v1724 = vrcp.pop %v1722
    %v1725 = vmul.f32 %v1714, %v1723
    %v1726 = vmul.f32 %v1716, %v1724
    %v1727 = vpack.c.bf16 %v1725, %v1725
    %v1728 = vpack.c.bf16 %v1726, %v1726
    %1729 = vrot.lane.b32.xlu0 %v1399, 56
    %v1730 = vpop.permute.xlu0 %1729
    %v1732 = vsel %vm150, %v1727, 0
    %v1735 = vsel %vm267, %v1730, 0
    %1737 = vmatprep.subr.bf16.mxu0 0
    %1738 = vmatpush1.bf16.msra.mxu0 %v1735
    %1739 = vmatprep.subr.bf16.mxu0 0
    %1740 = vmatpush1.bf16.msra.mxu0 0
    %1741 = vmatprep.subr.bf16.mxu0 0
    %1742 = vmatpush1.bf16.msra.mxu0 0
    %1743 = vmatprep.subr.bf16.mxu0 0
    %1744 = vmatpush1.bf16.msra.mxu0 0
    %1745 = vmatprep.subr.bf16.mxu0 0
    %1746 = vmatpush1.bf16.msra.mxu0 0
    %1747 = vmatprep.subr.bf16.mxu0 0
    %1748 = vmatpush1.bf16.msra.mxu0 0
    %1749 = vmatprep.subr.bf16.mxu0 0
    %1750 = vmatpush1.bf16.msra.mxu0 0
    %1751 = vmatprep.subr.bf16.mxu0 0
    %1752 = vmatpush1.bf16.msra.mxu0 0
    %1753 = vmatprep.subr.bf16.mxu0 0
    %1754 = vmatpush1.bf16.msra.mxu0 0
    %1755 = vmatprep.subr.bf16.mxu0 0
    %1756 = vmatpush1.bf16.msra.mxu0 0
    %1757 = vmatprep.subr.bf16.mxu0 0
    %1758 = vmatpush1.bf16.msra.mxu0 0
    %1759 = vmatprep.subr.bf16.mxu0 0
    %1760 = vmatpush1.bf16.msra.mxu0 0
    %1761 = vmatprep.subr.bf16.mxu0 0
    %1762 = vmatpush1.bf16.msra.mxu0 0
    %1763 = vmatprep.subr.bf16.mxu0 0
    %1764 = vmatpush1.bf16.msra.mxu0 0
    %1765 = vmatprep.subr.bf16.mxu0 0
    %1766 = vmatpush1.bf16.msra.mxu0 0
    %1767 = vmatprep.subr.bf16.mxu0 0
    %1768 = vmatpush1.bf16.msra.mxu0 0
    %1769 = vmatprep.mubr.bf16.mxu0 0
    %1770 = vmatmul.mubr.bf16.gmra.mrb[0].mxu0 %v1732
    %v1771 = vpop.f32.mrb[0].mxu0
    %v1772 = vadd.f32 0.0, %v1771
    %v1773 = vpop.f32.mrb[0].mxu0
    %v1774 = vpop.f32.mrb[0].mxu0
    %v1775 = vpop.f32.mrb[0].mxu0
    %1776 = vdwg.mxu0
    %1777 = vrot.lane.b32.xlu0 %v1400, 56
    %v1778 = vpop.permute.xlu0 %1777
    %v1780 = vsel %vm150, %v1728, 0
    %v1783 = vsel %vm267, %v1778, 0
    %1785 = vmatprep.subr.bf16.mxu0 0
    %1786 = vmatpush1.bf16.msra.mxu0 %v1783
    %1787 = vmatprep.subr.bf16.mxu0 0
    %1788 = vmatpush1.bf16.msra.mxu0 0
    %1789 = vmatprep.subr.bf16.mxu0 0
    %1790 = vmatpush1.bf16.msra.mxu0 0
    %1791 = vmatprep.subr.bf16.mxu0 0
    %1792 = vmatpush1.bf16.msra.mxu0 0
    %1793 = vmatprep.subr.bf16.mxu0 0
    %1794 = vmatpush1.bf16.msra.mxu0 0
    %1795 = vmatprep.subr.bf16.mxu0 0
    %1796 = vmatpush1.bf16.msra.mxu0 0
    %1797 = vmatprep.subr.bf16.mxu0 0
    %1798 = vmatpush1.bf16.msra.mxu0 0
    %1799 = vmatprep.subr.bf16.mxu0 0
    %1800 = vmatpush1.bf16.msra.mxu0 0
    %1801 = vmatprep.subr.bf16.mxu0 0
    %1802 = vmatpush1.bf16.msra.mxu0 0
    %1803 = vmatprep.subr.bf16.mxu0 0
    %1804 = vmatpush1.bf16.msra.mxu0 0
    %1805 = vmatprep.subr.bf16.mxu0 0
    %1806 = vmatpush1.bf16.msra.mxu0 0
    %1807 = vmatprep.subr.bf16.mxu0 0
    %1808 = vmatpush1.bf16.msra.mxu0 0
    %1809 = vmatprep.subr.bf16.mxu0 0
    %1810 = vmatpush1.bf16.msra.mxu0 0
    %1811 = vmatprep.subr.bf16.mxu0 0
    %1812 = vmatpush1.bf16.msra.mxu0 0
    %1813 = vmatprep.subr.bf16.mxu0 0
    %1814 = vmatpush1.bf16.msra.mxu0 0
    %1815 = vmatprep.subr.bf16.mxu0 0
    %1816 = vmatpush1.bf16.msra.mxu0 0
    %1817 = vmatprep.mubr.bf16.mxu0 0
    %1818 = vmatmul.mubr.bf16.gmra.mrb[0].mxu0 %v1780
    %v1819 = vpop.f32.mrb[0].mxu0
    %v1820 = vadd.f32 0.0, %v1819
    %v1821 = vpop.f32.mrb[0].mxu0
    %v1822 = vpop.f32.mrb[0].mxu0
    %v1823 = vpop.f32.mrb[0].mxu0
    %1824 = vdwg.mxu0
    %1825 = vrot.lane.b32.xlu0 %v1397, 112
    %v1826 = vpop.permute.xlu0 %1825
    %1827 = vrot.lane.b32.xlu0 %v1399, 80
    %v1828 = vpop.permute.xlu0 %1827
    %v1830 = vsel %vm150, %v1826, 0
    %v1833 = vsel %vm150, %v1828, 0
    %1835 = vmatprep.subr.bf16.mxu0 0
    %1836 = vmatpush1.bf16.xpose.msra.mxu0 %v1833
    %1837 = vmatprep.subr.bf16.mxu0 0
    %1838 = vmatpush1.bf16.xpose.msra.mxu0 0
    %1839 = vmatprep.subr.bf16.mxu0 0
    %1840 = vmatpush1.bf16.xpose.msra.mxu0 0
    %1841 = vmatprep.subr.bf16.mxu0 0
    %1842 = vmatpush1.bf16.xpose.msra.mxu0 0
    %1843 = vmatprep.subr.bf16.mxu0 0
    %1844 = vmatpush1.bf16.xpose.msra.mxu0 0
    %1845 = vmatprep.subr.bf16.mxu0 0
    %1846 = vmatpush1.bf16.xpose.msra.mxu0 0
    %1847 = vmatprep.subr.bf16.mxu0 0
    %1848 = vmatpush1.bf16.xpose.msra.mxu0 0
    %1849 = vmatprep.subr.bf16.mxu0 0
    %1850 = vmatpush1.bf16.xpose.msra.mxu0 0
    %1851 = vmatprep.subr.bf16.mxu0 0
    %1852 = vmatpush1.bf16.xpose.msra.mxu0 0
    %1853 = vmatprep.subr.bf16.mxu0 0
    %1854 = vmatpush1.bf16.xpose.msra.mxu0 0
    %1855 = vmatprep.subr.bf16.mxu0 0
    %1856 = vmatpush1.bf16.xpose.msra.mxu0 0
    %1857 = vmatprep.subr.bf16.mxu0 0
    %1858 = vmatpush1.bf16.xpose.msra.mxu0 0
    %1859 = vmatprep.subr.bf16.mxu0 0
    %1860 = vmatpush1.bf16.xpose.msra.mxu0 0
    %1861 = vmatprep.subr.bf16.mxu0 0
    %1862 = vmatpush1.bf16.xpose.msra.mxu0 0
    %1863 = vmatprep.subr.bf16.mxu0 0
    %1864 = vmatpush1.bf16.xpose.msra.mxu0 0
    %1865 = vmatprep.subr.bf16.mxu0 0
    %1866 = vmatpush1.bf16.xpose.msra.mxu0 0
    %1867 = vmatprep.mubr.bf16.mxu0 0
    %1868 = vmatmul.mubr.bf16.gmra.mrb[0].mxu0 %v1830
    %v1869 = vpop.f32.mrb[0].mxu0
    %v1870 = vadd.f32 %v140, %v1869
    %v1871 = vpop.f32.mrb[0].mxu0
    %v1872 = vpop.f32.mrb[0].mxu0
    %v1873 = vpop.f32.mrb[0].mxu0
    %1874 = vdwg.mxu0
    %1875 = vrot.lane.b32.xlu0 %v1398, 112
    %v1876 = vpop.permute.xlu0 %1875
    %1877 = vrot.lane.b32.xlu0 %v1400, 80
    %v1878 = vpop.permute.xlu0 %1877
    %v1880 = vsel %vm150, %v1876, 0
    %v1883 = vsel %vm150, %v1878, 0
    %1885 = vmatprep.subr.bf16.mxu0 0
    %1886 = vmatpush1.bf16.xpose.msra.mxu0 %v1883
    %1887 = vmatprep.subr.bf16.mxu0 0
    %1888 = vmatpush1.bf16.xpose.msra.mxu0 0
    %1889 = vmatprep.subr.bf16.mxu0 0
    %1890 = vmatpush1.bf16.xpose.msra.mxu0 0
    %1891 = vmatprep.subr.bf16.mxu0 0
    %1892 = vmatpush1.bf16.xpose.msra.mxu0 0
    %1893 = vmatprep.subr.bf16.mxu0 0
    %1894 = vmatpush1.bf16.xpose.msra.mxu0 0
    %1895 = vmatprep.subr.bf16.mxu0 0
    %1896 = vmatpush1.bf16.xpose.msra.mxu0 0
    %1897 = vmatprep.subr.bf16.mxu0 0
    %1898 = vmatpush1.bf16.xpose.msra.mxu0 0
    %1899 = vmatprep.subr.bf16.mxu0 0
    %1900 = vmatpush1.bf16.xpose.msra.mxu0 0
    %1901 = vmatprep.subr.bf16.mxu0 0
    %1902 = vmatpush1.bf16.xpose.msra.mxu0 0
    %1903 = vmatprep.subr.bf16.mxu0 0
    %1904 = vmatpush1.bf16.xpose.msra.mxu0 0
    %1905 = vmatprep.subr.bf16.mxu0 0
    %1906 = vmatpush1.bf16.xpose.msra.mxu0 0
    %1907 = vmatprep.subr.bf16.mxu0 0
    %1908 = vmatpush1.bf16.xpose.msra.mxu0 0
    %1909 = vmatprep.subr.bf16.mxu0 0
    %1910 = vmatpush1.bf16.xpose.msra.mxu0 0
    %1911 = vmatprep.subr.bf16.mxu0 0
    %1912 = vmatpush1.bf16.xpose.msra.mxu0 0
    %1913 = vmatprep.subr.bf16.mxu0 0
    %1914 = vmatpush1.bf16.xpose.msra.mxu0 0
    %1915 = vmatprep.subr.bf16.mxu0 0
    %1916 = vmatpush1.bf16.xpose.msra.mxu0 0
    %1917 = vmatprep.mubr.bf16.mxu0 0
    %1918 = vmatmul.mubr.bf16.gmra.mrb[0].mxu0 %v1880
    %v1919 = vpop.f32.mrb[0].mxu0
    %v1920 = vadd.f32 %v144, %v1919
    %v1921 = vpop.f32.mrb[0].mxu0
    %v1922 = vpop.f32.mrb[0].mxu0
    %v1923 = vpop.f32.mrb[0].mxu0
    %1924 = vdwg.mxu0
    %v1925 = vmul.f32 %v1870, 1.442695
    %v1926 = vpow.pop %v1925
    %v1927 = vmul.f32 %v1920, 1.442695
    %v1928 = vpow.pop %v1927
    %v1929 = vsel %vm150, %v1926, 0.0
    %1930 = vadd.xlane.f32.xlu0 %v1929
    %v1931 = vpop.xlane.xlu0 %1930
    %v1932 = vsel %vm150, %v1928, 0.0
    %1933 = vadd.xlane.f32.xlu0 %v1932
    %v1934 = vpop.xlane.xlu0 %1933
    %v1935 = vrcp.pop %v1931
    %v1936 = vrcp.pop %v1934
    %v1937 = vmul.f32 %v1926, %v1935
    %v1938 = vmul.f32 %v1928, %v1936
    %v1939 = vpack.c.bf16 %v1937, %v1937
    %v1940 = vpack.c.bf16 %v1938, %v1938
    %1941 = vrot.lane.b32.xlu0 %v1399, 48
    %v1942 = vpop.permute.xlu0 %1941
    %v1944 = vsel %vm150, %v1939, 0
    %v1947 = vsel %vm267, %v1942, 0
    %1949 = vmatprep.subr.bf16.mxu0 0
    %1950 = vmatpush1.bf16.msra.mxu0 %v1947
    %1951 = vmatprep.subr.bf16.mxu0 0
    %1952 = vmatpush1.bf16.msra.mxu0 0
    %1953 = vmatprep.subr.bf16.mxu0 0
    %1954 = vmatpush1.bf16.msra.mxu0 0
    %1955 = vmatprep.subr.bf16.mxu0 0
    %1956 = vmatpush1.bf16.msra.mxu0 0
    %1957 = vmatprep.subr.bf16.mxu0 0
    %1958 = vmatpush1.bf16.msra.mxu0 0
    %1959 = vmatprep.subr.bf16.mxu0 0
    %1960 = vmatpush1.bf16.msra.mxu0 0
    %1961 = vmatprep.subr.bf16.mxu0 0
    %1962 = vmatpush1.bf16.msra.mxu0 0
    %1963 = vmatprep.subr.bf16.mxu0 0
    %1964 = vmatpush1.bf16.msra.mxu0 0
    %1965 = vmatprep.subr.bf16.mxu0 0
    %1966 = vmatpush1.bf16.msra.mxu0 0
    %1967 = vmatprep.subr.bf16.mxu0 0
    %1968 = vmatpush1.bf16.msra.mxu0 0
    %1969 = vmatprep.subr.bf16.mxu0 0
    %1970 = vmatpush1.bf16.msra.mxu0 0
    %1971 = vmatprep.subr.bf16.mxu0 0
    %1972 = vmatpush1.bf16.msra.mxu0 0
    %1973 = vmatprep.subr.bf16.mxu0 0
    %1974 = vmatpush1.bf16.msra.mxu0 0
    %1975 = vmatprep.subr.bf16.mxu0 0
    %1976 = vmatpush1.bf16.msra.mxu0 0
    %1977 = vmatprep.subr.bf16.mxu0 0
    %1978 = vmatpush1.bf16.msra.mxu0 0
    %1979 = vmatprep.subr.bf16.mxu0 0
    %1980 = vmatpush1.bf16.msra.mxu0 0
    %1981 = vmatprep.mubr.bf16.mxu0 0
    %1982 = vmatmul.mubr.bf16.gmra.mrb[0].mxu0 %v1944
    %v1983 = vpop.f32.mrb[0].mxu0
    %v1984 = vadd.f32 0.0, %v1983
    %v1985 = vpop.f32.mrb[0].mxu0
    %v1986 = vpop.f32.mrb[0].mxu0
    %v1987 = vpop.f32.mrb[0].mxu0
    %1988 = vdwg.mxu0
    %1989 = vrot.lane.b32.xlu0 %v1400, 48
    %v1990 = vpop.permute.xlu0 %1989
    %v1992 = vsel %vm150, %v1940, 0
    %v1995 = vsel %vm267, %v1990, 0
    %1997 = vmatprep.subr.bf16.mxu0 0
    %1998 = vmatpush1.bf16.msra.mxu0 %v1995
    %1999 = vmatprep.subr.bf16.mxu0 0
    %2000 = vmatpush1.bf16.msra.mxu0 0
    %2001 = vmatprep.subr.bf16.mxu0 0
    %2002 = vmatpush1.bf16.msra.mxu0 0
    %2003 = vmatprep.subr.bf16.mxu0 0
    %2004 = vmatpush1.bf16.msra.mxu0 0
    %2005 = vmatprep.subr.bf16.mxu0 0
    %2006 = vmatpush1.bf16.msra.mxu0 0
    %2007 = vmatprep.subr.bf16.mxu0 0
    %2008 = vmatpush1.bf16.msra.mxu0 0
    %2009 = vmatprep.subr.bf16.mxu0 0
    %2010 = vmatpush1.bf16.msra.mxu0 0
    %2011 = vmatprep.subr.bf16.mxu0 0
    %2012 = vmatpush1.bf16.msra.mxu0 0
    %2013 = vmatprep.subr.bf16.mxu0 0
    %2014 = vmatpush1.bf16.msra.mxu0 0
    %2015 = vmatprep.subr.bf16.mxu0 0
    %2016 = vmatpush1.bf16.msra.mxu0 0
    %2017 = vmatprep.subr.bf16.mxu0 0
    %2018 = vmatpush1.bf16.msra.mxu0 0
    %2019 = vmatprep.subr.bf16.mxu0 0
    %2020 = vmatpush1.bf16.msra.mxu0 0
    %2021 = vmatprep.subr.bf16.mxu0 0
    %2022 = vmatpush1.bf16.msra.mxu0 0
    %2023 = vmatprep.subr.bf16.mxu0 0
    %2024 = vmatpush1.bf16.msra.mxu0 0
    %2025 = vmatprep.subr.bf16.mxu0 0
    %2026 = vmatpush1.bf16.msra.mxu0 0
    %2027 = vmatprep.subr.bf16.mxu0 0
    %2028 = vmatpush1.bf16.msra.mxu0 0
    %2029 = vmatprep.mubr.bf16.mxu0 0
    %2030 = vmatmul.mubr.bf16.gmra.mrb[0].mxu0 %v1992
    %v2031 = vpop.f32.mrb[0].mxu0
    %v2032 = vadd.f32 0.0, %v2031
    %v2033 = vpop.f32.mrb[0].mxu0
    %v2034 = vpop.f32.mrb[0].mxu0
    %v2035 = vpop.f32.mrb[0].mxu0
    %2036 = vdwg.mxu0
    %2037 = vrot.lane.b32.xlu0 %v1397, 104
    %v2038 = vpop.permute.xlu0 %2037
    %2039 = vrot.lane.b32.xlu0 %v1399, 72
    %v2040 = vpop.permute.xlu0 %2039
    %v2042 = vsel %vm150, %v2038, 0
    %v2045 = vsel %vm150, %v2040, 0
    %2047 = vmatprep.subr.bf16.mxu0 0
    %2048 = vmatpush1.bf16.xpose.msra.mxu0 %v2045
    %2049 = vmatprep.subr.bf16.mxu0 0
    %2050 = vmatpush1.bf16.xpose.msra.mxu0 0
    %2051 = vmatprep.subr.bf16.mxu0 0
    %2052 = vmatpush1.bf16.xpose.msra.mxu0 0
    %2053 = vmatprep.subr.bf16.mxu0 0
    %2054 = vmatpush1.bf16.xpose.msra.mxu0 0
    %2055 = vmatprep.subr.bf16.mxu0 0
    %2056 = vmatpush1.bf16.xpose.msra.mxu0 0
    %2057 = vmatprep.subr.bf16.mxu0 0
    %2058 = vmatpush1.bf16.xpose.msra.mxu0 0
    %2059 = vmatprep.subr.bf16.mxu0 0
    %2060 = vmatpush1.bf16.xpose.msra.mxu0 0
    %2061 = vmatprep.subr.bf16.mxu0 0
    %2062 = vmatpush1.bf16.xpose.msra.mxu0 0
    %2063 = vmatprep.subr.bf16.mxu0 0
    %2064 = vmatpush1.bf16.xpose.msra.mxu0 0
    %2065 = vmatprep.subr.bf16.mxu0 0
    %2066 = vmatpush1.bf16.xpose.msra.mxu0 0
    %2067 = vmatprep.subr.bf16.mxu0 0
    %2068 = vmatpush1.bf16.xpose.msra.mxu0 0
    %2069 = vmatprep.subr.bf16.mxu0 0
    %2070 = vmatpush1.bf16.xpose.msra.mxu0 0
    %2071 = vmatprep.subr.bf16.mxu0 0
    %2072 = vmatpush1.bf16.xpose.msra.mxu0 0
    %2073 = vmatprep.subr.bf16.mxu0 0
    %2074 = vmatpush1.bf16.xpose.msra.mxu0 0
    %2075 = vmatprep.subr.bf16.mxu0 0
    %2076 = vmatpush1.bf16.xpose.msra.mxu0 0
    %2077 = vmatprep.subr.bf16.mxu0 0
    %2078 = vmatpush1.bf16.xpose.msra.mxu0 0
    %2079 = vmatprep.mubr.bf16.mxu0 0
    %2080 = vmatmul.mubr.bf16.gmra.mrb[0].mxu0 %v2042
    %v2081 = vpop.f32.mrb[0].mxu0
    %v2082 = vadd.f32 %v140, %v2081
    %v2083 = vpop.f32.mrb[0].mxu0
    %v2084 = vpop.f32.mrb[0].mxu0
    %v2085 = vpop.f32.mrb[0].mxu0
    %2086 = vdwg.mxu0
    %2087 = vrot.lane.b32.xlu0 %v1398, 104
    %v2088 = vpop.permute.xlu0 %2087
    %2089 = vrot.lane.b32.xlu0 %v1400, 72
    %v2090 = vpop.permute.xlu0 %2089
    %v2092 = vsel %vm150, %v2088, 0
    %v2095 = vsel %vm150, %v2090, 0
    %2097 = vmatprep.subr.bf16.mxu0 0
    %2098 = vmatpush1.bf16.xpose.msra.mxu0 %v2095
    %2099 = vmatprep.subr.bf16.mxu0 0
    %2100 = vmatpush1.bf16.xpose.msra.mxu0 0
    %2101 = vmatprep.subr.bf16.mxu0 0
    %2102 = vmatpush1.bf16.xpose.msra.mxu0 0
    %2103 = vmatprep.subr.bf16.mxu0 0
    %2104 = vmatpush1.bf16.xpose.msra.mxu0 0
    %2105 = vmatprep.subr.bf16.mxu0 0
    %2106 = vmatpush1.bf16.xpose.msra.mxu0 0
    %2107 = vmatprep.subr.bf16.mxu0 0
    %2108 = vmatpush1.bf16.xpose.msra.mxu0 0
    %2109 = vmatprep.subr.bf16.mxu0 0
    %2110 = vmatpush1.bf16.xpose.msra.mxu0 0
    %2111 = vmatprep.subr.bf16.mxu0 0
    %2112 = vmatpush1.bf16.xpose.msra.mxu0 0
    %2113 = vmatprep.subr.bf16.mxu0 0
    %2114 = vmatpush1.bf16.xpose.msra.mxu0 0
    %2115 = vmatprep.subr.bf16.mxu0 0
    %2116 = vmatpush1.bf16.xpose.msra.mxu0 0
    %2117 = vmatprep.subr.bf16.mxu0 0
    %2118 = vmatpush1.bf16.xpose.msra.mxu0 0
    %2119 = vmatprep.subr.bf16.mxu0 0
    %2120 = vmatpush1.bf16.xpose.msra.mxu0 0
    %2121 = vmatprep.subr.bf16.mxu0 0
    %2122 = vmatpush1.bf16.xpose.msra.mxu0 0
    %2123 = vmatprep.subr.bf16.mxu0 0
    %2124 = vmatpush1.bf16.xpose.msra.mxu0 0
    %2125 = vmatprep.subr.bf16.mxu0 0
    %2126 = vmatpush1.bf16.xpose.msra.mxu0 0
    %2127 = vmatprep.subr.bf16.mxu0 0
    %2128 = vmatpush1.bf16.xpose.msra.mxu0 0
    %2129 = vmatprep.mubr.bf16.mxu0 0
    %2130 = vmatmul.mubr.bf16.gmra.mrb[0].mxu0 %v2092
    %v2131 = vpop.f32.mrb[0].mxu0
    %v2132 = vadd.f32 %v144, %v2131
    %v2133 = vpop.f32.mrb[0].mxu0
    %v2134 = vpop.f32.mrb[0].mxu0
    %v2135 = vpop.f32.mrb[0].mxu0
    %2136 = vdwg.mxu0
    %v2137 = vmul.f32 %v2082, 1.442695
    %v2138 = vpow.pop %v2137
    %v2139 = vmul.f32 %v2132, 1.442695
    %v2140 = vpow.pop %v2139
    %v2141 = vsel %vm150, %v2138, 0.0
    %2142 = vadd.xlane.f32.xlu0 %v2141
    %v2143 = vpop.xlane.xlu0 %2142
    %v2144 = vsel %vm150, %v2140, 0.0
    %2145 = vadd.xlane.f32.xlu0 %v2144
    %v2146 = vpop.xlane.xlu0 %2145
    %v2147 = vrcp.pop %v2143
    %v2148 = vrcp.pop %v2146
    %v2149 = vmul.f32 %v2138, %v2147
    %v2150 = vmul.f32 %v2140, %v2148
    %v2151 = vpack.c.bf16 %v2149, %v2149
    %v2152 = vpack.c.bf16 %v2150, %v2150
    %2153 = vrot.lane.b32.xlu0 %v1399, 40
    %v2154 = vpop.permute.xlu0 %2153
    %v2156 = vsel %vm150, %v2151, 0
    %v2159 = vsel %vm267, %v2154, 0
    %2161 = vmatprep.subr.bf16.mxu0 0
    %2162 = vmatpush1.bf16.msra.mxu0 %v2159
    %2163 = vmatprep.subr.bf16.mxu0 0
    %2164 = vmatpush1.bf16.msra.mxu0 0
    %2165 = vmatprep.subr.bf16.mxu0 0
    %2166 = vmatpush1.bf16.msra.mxu0 0
    %2167 = vmatprep.subr.bf16.mxu0 0
    %2168 = vmatpush1.bf16.msra.mxu0 0
    %2169 = vmatprep.subr.bf16.mxu0 0
    %2170 = vmatpush1.bf16.msra.mxu0 0
    %2171 = vmatprep.subr.bf16.mxu0 0
    %2172 = vmatpush1.bf16.msra.mxu0 0
    %2173 = vmatprep.subr.bf16.mxu0 0
    %2174 = vmatpush1.bf16.msra.mxu0 0
    %2175 = vmatprep.subr.bf16.mxu0 0
    %2176 = vmatpush1.bf16.msra.mxu0 0
    %2177 = vmatprep.subr.bf16.mxu0 0
    %2178 = vmatpush1.bf16.msra.mxu0 0
    %2179 = vmatprep.subr.bf16.mxu0 0
    %2180 = vmatpush1.bf16.msra.mxu0 0
    %2181 = vmatprep.subr.bf16.mxu0 0
    %2182 = vmatpush1.bf16.msra.mxu0 0
    %2183 = vmatprep.subr.bf16.mxu0 0
    %2184 = vmatpush1.bf16.msra.mxu0 0
    %2185 = vmatprep.subr.bf16.mxu0 0
    %2186 = vmatpush1.bf16.msra.mxu0 0
    %2187 = vmatprep.subr.bf16.mxu0 0
    %2188 = vmatpush1.bf16.msra.mxu0 0
    %2189 = vmatprep.subr.bf16.mxu0 0
    %2190 = vmatpush1.bf16.msra.mxu0 0
    %2191 = vmatprep.subr.bf16.mxu0 0
    %2192 = vmatpush1.bf16.msra.mxu0 0
    %2193 = vmatprep.mubr.bf16.mxu0 0
    %2194 = vmatmul.mubr.bf16.gmra.mrb[0].mxu0 %v2156
    %v2195 = vpop.f32.mrb[0].mxu0
    %v2196 = vadd.f32 0.0, %v2195
    %v2197 = vpop.f32.mrb[0].mxu0
    %v2198 = vpop.f32.mrb[0].mxu0
    %v2199 = vpop.f32.mrb[0].mxu0
    %2200 = vdwg.mxu0
    %2201 = vrot.lane.b32.xlu0 %v1400, 40
    %v2202 = vpop.permute.xlu0 %2201
    %v2204 = vsel %vm150, %v2152, 0
    %v2207 = vsel %vm267, %v2202, 0
    %2209 = vmatprep.subr.bf16.mxu0 0
    %2210 = vmatpush1.bf16.msra.mxu0 %v2207
    %2211 = vmatprep.subr.bf16.mxu0 0
    %2212 = vmatpush1.bf16.msra.mxu0 0
    %2213 = vmatprep.subr.bf16.mxu0 0
    %2214 = vmatpush1.bf16.msra.mxu0 0
    %2215 = vmatprep.subr.bf16.mxu0 0
    %2216 = vmatpush1.bf16.msra.mxu0 0
    %2217 = vmatprep.subr.bf16.mxu0 0
    %2218 = vmatpush1.bf16.msra.mxu0 0
    %2219 = vmatprep.subr.bf16.mxu0 0
    %2220 = vmatpush1.bf16.msra.mxu0 0
    %2221 = vmatprep.subr.bf16.mxu0 0
    %2222 = vmatpush1.bf16.msra.mxu0 0
    %2223 = vmatprep.subr.bf16.mxu0 0
    %2224 = vmatpush1.bf16.msra.mxu0 0
    %2225 = vmatprep.subr.bf16.mxu0 0
    %2226 = vmatpush1.bf16.msra.mxu0 0
    %2227 = vmatprep.subr.bf16.mxu0 0
    %2228 = vmatpush1.bf16.msra.mxu0 0
    %2229 = vmatprep.subr.bf16.mxu0 0
    %2230 = vmatpush1.bf16.msra.mxu0 0
    %2231 = vmatprep.subr.bf16.mxu0 0
    %2232 = vmatpush1.bf16.msra.mxu0 0
    %2233 = vmatprep.subr.bf16.mxu0 0
    %2234 = vmatpush1.bf16.msra.mxu0 0
    %2235 = vmatprep.subr.bf16.mxu0 0
    %2236 = vmatpush1.bf16.msra.mxu0 0
    %2237 = vmatprep.subr.bf16.mxu0 0
    %2238 = vmatpush1.bf16.msra.mxu0 0
    %2239 = vmatprep.subr.bf16.mxu0 0
    %2240 = vmatpush1.bf16.msra.mxu0 0
    %2241 = vmatprep.mubr.bf16.mxu0 0
    %2242 = vmatmul.mubr.bf16.gmra.mrb[0].mxu0 %v2204
    %v2243 = vpop.f32.mrb[0].mxu0
    %v2244 = vadd.f32 0.0, %v2243
    %v2245 = vpop.f32.mrb[0].mxu0
    %v2246 = vpop.f32.mrb[0].mxu0
    %v2247 = vpop.f32.mrb[0].mxu0
    %2248 = vdwg.mxu0
    %2251 = vrot.lane.b32.xlu0 %v1772, 8
    %v2252 = vpop.permute.xlu0 %2251
    %2253 = vrot.lane.b32.xlu0 %v1820, 8
    %v2254 = vpop.permute.xlu0 %2253
    %2259 = vrot.lane.b32.xlu0 %v1984, 16
    %v2260 = vpop.permute.xlu0 %2259
    %2261 = vrot.lane.b32.xlu0 %v2032, 16
    %v2262 = vpop.permute.xlu0 %2261
    %2267 = vrot.lane.b32.xlu0 %v2196, 24
    %v2268 = vpop.permute.xlu0 %2267
    %2269 = vrot.lane.b32.xlu0 %v2244, 24
    %v2270 = vpop.permute.xlu0 %2269
    %v2273 = vsel %vm150, %v1558, %v2252
    %v2274 = vsel %vm150, %v1606, %v2254
    %v2275 = vsel %vm1023, %v2273, %v2260
    %v2276 = vsel %vm1023, %v2274, %v2262
    %v2277 = vsel %vm1026, %v2275, %v2268
    %v2278 = vsel %vm1026, %v2276, %v2270
    %v2279 = vpack.c.bf16 %v2278, %v2277
    %v2280 = vlaneseq
    %v2281 = vshrl.u32 %v2280, 7
    %v2282 = vsub.s32 1, %v2281
    %v2283 = vrot.slane %v1333, %v2282
    %v2288 = vunpack.c.l.b16 %v1314
    %v2289 = vunpack.c.l.b16 %v1315
    %v2290 = vunpack.c.l.b16 %v1316
    %v2291 = vunpack.c.l.b16 %v1317
    %v2292 = vpack.c.b16 %v2289, %v2288
    %v2293 = vpack.c.b16 %v2291, %v2290
    %v2297 = vsel %vm84, %v2279, 0
    %2299 = vmatprep.subr.bf16.mxu0 0
    %2300 = vmatpush1.bf16.msra.mxu0 %v2292
    %2301 = vmatprep.subr.bf16.mxu0 0
    %2302 = vmatpush1.bf16.msra.mxu0 %v2293
    %2303 = vmatprep.subr.bf16.mxu0 0
    %2304 = vmatpush1.bf16.msra.mxu0 0
    %2305 = vmatprep.subr.bf16.mxu0 0
    %2306 = vmatpush1.bf16.msra.mxu0 0
    %2307 = vmatprep.subr.bf16.mxu0 0
    %2308 = vmatpush1.bf16.msra.mxu0 0
    %2309 = vmatprep.subr.bf16.mxu0 0
    %2310 = vmatpush1.bf16.msra.mxu0 0
    %2311 = vmatprep.subr.bf16.mxu0 0
    %2312 = vmatpush1.bf16.msra.mxu0 0
    %2313 = vmatprep.subr.bf16.mxu0 0
    %2314 = vmatpush1.bf16.msra.mxu0 0
    %2315 = vmatprep.subr.bf16.mxu0 0
    %2316 = vmatpush1.bf16.msra.mxu0 0
    %2317 = vmatprep.subr.bf16.mxu0 0
    %2318 = vmatpush1.bf16.msra.mxu0 0
    %2319 = vmatprep.subr.bf16.mxu0 0
    %2320 = vmatpush1.bf16.msra.mxu0 0
    %2321 = vmatprep.subr.bf16.mxu0 0
    %2322 = vmatpush1.bf16.msra.mxu0 0
    %2323 = vmatprep.subr.bf16.mxu0 0
    %2324 = vmatpush1.bf16.msra.mxu0 0
    %2325 = vmatprep.subr.bf16.mxu0 0
    %2326 = vmatpush1.bf16.msra.mxu0 0
    %2327 = vmatprep.subr.bf16.mxu0 0
    %2328 = vmatpush1.bf16.msra.mxu0 0
    %2329 = vmatprep.subr.bf16.mxu0 0
    %2330 = vmatpush1.bf16.msra.mxu0 0
    %2331 = vmatprep.mubr.bf16.mxu0 0
    %2332 = vmatmul.mubr.bf16.gmra.mrb[0].mxu0 %v2297
    %v2333 = vpop.f32.mrb[0].mxu0
    %v2334 = vadd.f32 %v2283, %v2333
    %v2335 = vpop.f32.mrb[0].mxu0
    %v2336 = vpop.f32.mrb[0].mxu0
    %v2337 = vadd.f32 %v2283, %v2336
    %v2338 = vpop.f32.mrb[0].mxu0
    %2339 = vdwg.mxu0
    %v2340 = vadd.f32 %v1306, %v2334
    %v2341 = vadd.f32 %v1307, %v2337
    %v2342 = vsel %vm84, %v2340, 0.0
    %2343 = vadd.xlane.f32.xlu0 %v2342
    %v2344 = vpop.xlane.xlu0 %2343
    %v2345 = vsel %vm84, %v2341, 0.0
    %2346 = vadd.xlane.f32.xlu0 %v2345
    %v2347 = vpop.xlane.xlu0 %2346
    %v2348 = vmul.f32 %v2344, %v1098
    %v2349 = vmul.f32 %v2347, %v1098
    %v2350 = vsub.f32 %v2340, %v2348
    %v2351 = vsub.f32 %v2341, %v2349
    %v2352 = vmul.f32 %v2350, %v2350
    %v2353 = vmul.f32 %v2351, %v2351
    %v2354 = vsel %vm84, %v2352, 0.0
    %2355 = vadd.xlane.f32.xlu0 %v2354
    %v2356 = vpop.xlane.xlu0 %2355
    %v2357 = vsel %vm84, %v2353, 0.0
    %2358 = vadd.xlane.f32.xlu0 %v2357
    %v2359 = vpop.xlane.xlu0 %2358
    %v2360 = vmul.f32 %v2356, %v1098
    %v2361 = vmul.f32 %v2359, %v1098
    %v2362 = vadd.f32 %v2360, 1e-05
    %v2363 = vadd.f32 %v2361, 1e-05
    %v2364 = vrsqrt.pop %v2362
    %v2365 = vrsqrt.pop %v2363
    %v2366 = vmul.f32 %v2350, %v2364
    %v2367 = vmul.f32 %v2351, %v2365
    %v2368 = vlaneseq
    %v2369 = vshrl.u32 %v2368, 7
    %v2370 = vsub.s32 2, %v2369
    %v2371 = vrot.slane %v1333, %v2370
    %v2372 = vmul.f32 %v2366, %v2371
    %v2373 = vmul.f32 %v2367, %v2371
    %v2374 = vlaneseq
    %v2375 = vshrl.u32 %v2374, 7
    %v2376 = vsub.s32 3, %v2375
    %v2377 = vrot.slane %v1333, %v2376
    %v2378 = vadd.f32 %v2372, %v2377
    %v2379 = vadd.f32 %v2373, %v2377
    %v2380 = vpack.c.bf16 %v2379, %v2378
    %v2381 = vlaneseq
    %v2382 = vshrl.u32 %v2381, 7
    %v2383 = vsub.s32 4, %v2382
    %v2384 = vrot.slane %v1333, %v2383
    %v2389 = vunpack.c.l.b16 %v1319
    %v2390 = vunpack.c.l.b16 %v1320
    %v2391 = vunpack.c.l.b16 %v1321
    %v2392 = vunpack.c.l.b16 %v1322
    %v2393 = vpack.c.b16 %v2390, %v2389
    %v2394 = vpack.c.b16 %v2392, %v2391
    %v2398 = vsel %vm84, %v2380, 0
    %2400 = vmatprep.subr.bf16.mxu0 0
    %2401 = vmatpush1.bf16.msra.mxu0 %v2393
    %2402 = vmatprep.subr.bf16.mxu0 0
    %2403 = vmatpush1.bf16.msra.mxu0 %v2394
    %2404 = vmatprep.subr.bf16.mxu0 0
    %2405 = vmatpush1.bf16.msra.mxu0 0
    %2406 = vmatprep.subr.bf16.mxu0 0
    %2407 = vmatpush1.bf16.msra.mxu0 0
    %2408 = vmatprep.subr.bf16.mxu0 0
    %2409 = vmatpush1.bf16.msra.mxu0 0
    %2410 = vmatprep.subr.bf16.mxu0 0
    %2411 = vmatpush1.bf16.msra.mxu0 0
    %2412 = vmatprep.subr.bf16.mxu0 0
    %2413 = vmatpush1.bf16.msra.mxu0 0
    %2414 = vmatprep.subr.bf16.mxu0 0
    %2415 = vmatpush1.bf16.msra.mxu0 0
    %2416 = vmatprep.subr.bf16.mxu0 0
    %2417 = vmatpush1.bf16.msra.mxu0 0
    %2418 = vmatprep.subr.bf16.mxu0 0
    %2419 = vmatpush1.bf16.msra.mxu0 0
    %2420 = vmatprep.subr.bf16.mxu0 0
    %2421 = vmatpush1.bf16.msra.mxu0 0
    %2422 = vmatprep.subr.bf16.mxu0 0
    %2423 = vmatpush1.bf16.msra.mxu0 0
    %2424 = vmatprep.subr.bf16.mxu0 0
    %2425 = vmatpush1.bf16.msra.mxu0 0
    %2426 = vmatprep.subr.bf16.mxu0 0
    %2427 = vmatpush1.bf16.msra.mxu0 0
    %2428 = vmatprep.subr.bf16.mxu0 0
    %2429 = vmatpush1.bf16.msra.mxu0 0
    %2430 = vmatprep.subr.bf16.mxu0 0
    %2431 = vmatpush1.bf16.msra.mxu0 0
    %2432 = vmatprep.mubr.bf16.mxu0 0
    %2433 = vmatmul.mubr.bf16.gmra.mrb[0].mxu0 %v2398
    %v2434 = vpop.f32.mrb[0].mxu0
    %v2435 = vadd.f32 %v2384, %v2434
    %v2436 = vpop.f32.mrb[0].mxu0
    %v2437 = vpop.f32.mrb[0].mxu0
    %v2438 = vadd.f32 %v2384, %v2437
    %v2439 = vpop.f32.mrb[0].mxu0
    %2440 = vdwg.mxu0
    %v2441 = vmax.f32 %v2435, 0.0
    %v2442 = vmax.f32 %v2438, 0.0
    %v2443 = vpack.c.bf16 %v2442, %v2441
    %v2444 = vlaneseq
    %v2445 = vshrl.u32 %v2444, 7
    %v2446 = vsub.s32 5, %v2445
    %v2447 = vrot.slane %v1333, %v2446
    %v2456 = vunpack.c.l.b16 %v1324
    %v2457 = vunpack.c.l.b16 %v1325
    %v2458 = vunpack.c.l.b16 %v1326
    %v2459 = vunpack.c.l.b16 %v1327
    %v2460 = vunpack.c.l.b16 %v1328
    %v2461 = vunpack.c.l.b16 %v1329
    %v2462 = vunpack.c.l.b16 %v1330
    %v2463 = vunpack.c.l.b16 %v1331
    %v2464 = vpack.c.b16 %v2457, %v2456
    %v2465 = vpack.c.b16 %v2459, %v2458
    %v2466 = vpack.c.b16 %v2461, %v2460
    %v2467 = vpack.c.b16 %v2463, %v2462
    %v2473 = vsel %vm1223, %v2443, 0
    %2475 = vmatprep.subr.bf16.mxu0 0
    %2476 = vmatpush1.bf16.msra.mxu0 %v2464
    %2477 = vmatprep.subr.bf16.mxu0 0
    %2478 = vmatpush1.bf16.msra.mxu0 %v2465
    %2479 = vmatprep.subr.bf16.mxu0 0
    %2480 = vmatpush1.bf16.msra.mxu0 %v2466
    %2481 = vmatprep.subr.bf16.mxu0 0
    %2482 = vmatpush1.bf16.msra.mxu0 %v2467
    %2483 = vmatprep.subr.bf16.mxu0 0
    %2484 = vmatpush1.bf16.msra.mxu0 0
    %2485 = vmatprep.subr.bf16.mxu0 0
    %2486 = vmatpush1.bf16.msra.mxu0 0
    %2487 = vmatprep.subr.bf16.mxu0 0
    %2488 = vmatpush1.bf16.msra.mxu0 0
    %2489 = vmatprep.subr.bf16.mxu0 0
    %2490 = vmatpush1.bf16.msra.mxu0 0
    %2491 = vmatprep.subr.bf16.mxu0 0
    %2492 = vmatpush1.bf16.msra.mxu0 0
    %2493 = vmatprep.subr.bf16.mxu0 0
    %2494 = vmatpush1.bf16.msra.mxu0 0
    %2495 = vmatprep.subr.bf16.mxu0 0
    %2496 = vmatpush1.bf16.msra.mxu0 0
    %2497 = vmatprep.subr.bf16.mxu0 0
    %2498 = vmatpush1.bf16.msra.mxu0 0
    %2499 = vmatprep.subr.bf16.mxu0 0
    %2500 = vmatpush1.bf16.msra.mxu0 0
    %2501 = vmatprep.subr.bf16.mxu0 0
    %2502 = vmatpush1.bf16.msra.mxu0 0
    %2503 = vmatprep.subr.bf16.mxu0 0
    %2504 = vmatpush1.bf16.msra.mxu0 0
    %2505 = vmatprep.subr.bf16.mxu0 0
    %2506 = vmatpush1.bf16.msra.mxu0 0
    %2507 = vmatprep.mubr.bf16.mxu0 0
    %2508 = vmatmul.mubr.bf16.gmra.mrb[0].mxu0 %v2473
    %v2509 = vpop.f32.mrb[0].mxu0
    %v2510 = vadd.f32 %v2447, %v2509
    %v2511 = vpop.f32.mrb[0].mxu0
    %v2512 = vpop.f32.mrb[0].mxu0
    %v2513 = vadd.f32 %v2447, %v2512
    %v2514 = vpop.f32.mrb[0].mxu0
    %2515 = vdwg.mxu0
    %v2516 = vadd.f32 %v2378, %v2510
    %v2517 = vadd.f32 %v2379, %v2513
    %v2518 = vsel %vm84, %v2516, 0.0
    %2519 = vadd.xlane.f32.xlu0 %v2518
    %v2520 = vpop.xlane.xlu0 %2519
    %v2521 = vsel %vm84, %v2517, 0.0
    %2522 = vadd.xlane.f32.xlu0 %v2521
    %v2523 = vpop.xlane.xlu0 %2522
    %v2524 = vmul.f32 %v2520, %v1098
    %v2525 = vmul.f32 %v2523, %v1098
    %v2526 = vsub.f32 %v2516, %v2524
    %v2527 = vsub.f32 %v2517, %v2525
    %v2528 = vmul.f32 %v2526, %v2526
    %v2529 = vmul.f32 %v2527, %v2527
    %v2530 = vsel %vm84, %v2528, 0.0
    %2531 = vadd.xlane.f32.xlu0 %v2530
    %v2532 = vpop.xlane.xlu0 %2531
    %v2533 = vsel %vm84, %v2529, 0.0
    %2534 = vadd.xlane.f32.xlu0 %v2533
    %v2535 = vpop.xlane.xlu0 %2534
    %v2536 = vmul.f32 %v2532, %v1098
    %v2537 = vmul.f32 %v2535, %v1098
    %v2538 = vadd.f32 %v2536, 1e-05
    %v2539 = vadd.f32 %v2537, 1e-05
    %v2540 = vrsqrt.pop %v2538
    %v2541 = vrsqrt.pop %v2539
    %v2542 = vmul.f32 %v2526, %v2540
    %v2543 = vmul.f32 %v2527, %v2541
    %v2544 = vlaneseq
    %v2545 = vshrl.u32 %v2544, 7
    %v2546 = vsub.s32 6, %v2545
    %v2547 = vrot.slane %v1333, %v2546
    %v2548 = vmul.f32 %v2542, %v2547
    %v2549 = vmul.f32 %v2543, %v2547
    %v2550 = vlaneseq
    %v2551 = vshrl.u32 %v2550, 7
    %v2552 = vsub.s32 7, %v2551
    %v2553 = vrot.slane %v1333, %v2552
    %v2554 = vadd.f32 %v2548, %v2553
    %v2555 = vadd.f32 %v2549, %v2553
    %2556 = vst.msk [vmem:[#allocation5] sm:$0xff] %vm84, %v2554
    %2558 = vrot.lane.b32.xlu0 %v2555, 32
    %v2559 = vpop.permute.xlu0 %2558
    %vm2561 = vcmask 523520
    %2562 = vst.msk [vmem:[#allocation5] sm:$0xff] %vm2561, %v2559
    // Predicated region
    $region34: #{tpu_custom_call.1} parent=1 // pred_check
      _
    $region35: #{tpu_custom_call.1} parent=1 // pred_check_branch
      %2564 = sbr.rel (0) target = $region37
    $region36: #{tpu_custom_call.1} parent=1 // pred_region
      %s2566 = ssub.s32 128, 128
      %2567 = vsyncadd [#allocation4], %s2566
      %s2569 = sshll.u32 [#allocation5], 4
      %s2570 = int_to_ptr.vmem [resolvable:$true] %s2569
      %2572 = dma.vmem_to_hbm [thread:$0]  %s2570, 128, %s7, [#allocation4]
    $region37: #{tpu_custom_call.1} parent=1 // pred_fallthru
      _
    // Predicated region
    $region38: #{tpu_custom_call.1} parent=1 // pred_check
      _
    $region39: #{tpu_custom_call.1} parent=1 // pred_check_branch
      %2574 = sbr.rel (0) target = $region41
    $region40: #{tpu_custom_call.1} parent=1 // pred_region
      %2575 = dma.done [#allocation4], 128
    $region41: #{tpu_custom_call.1} parent=1 // pred_fallthru
      _
    %2576 = vsyncpa [#allocation3], 1
    %2577 = vsyncpa [#allocation4], 1

</llo_original>
